<compile_context>
chip_gen: v7x
topology: tpu7x:2x2x1
jax: 0.10.0
libtpu: 0.0.40
codegen_flags: <defaults>
</compile_context>

<pallas_src>
import functools

import jax
import jax.numpy as jnp
from jax.experimental import pallas as pl
from jax.experimental.pallas import tpu as pltpu

VMEM = pltpu.MemorySpace.VMEM
BF16 = jnp.bfloat16


# --------------------------------- kernel ----------------------------------- #

def infer_cell_kernel(*refs, num_lstm, seq_len):
    """Whole InferCell forward in one grid-less kernel (everything VMEM-resident).

    refs layout (inputs, then output):
      x_ref      (Bp, F_in)       f32   batch padded to 8 sublanes
      wih0_ref   (F_in, T*4*H0)   bf16  expand Linear folded into layer-0 W_ih,
                                        time-major along the lane axis
      b0_ref     (1,    T*4*H0)   f32   folded bias (expb @ W_ih0 + b0)
      whh0_ref   (H0, 4*H0)       bf16
      per layer l = 1..L-1:
        wih (Din, 4H) bf16, whh (H, 4H) bf16, b (1, 4H) f32    gates [i|f|g|o]
      fc1w (H, H*F) bf16, fc1b (1, H*F) f32, fc2w (H*F, O) bf16, fc2b (1, O) f32
      out_ref    (Bp, O)          f32
    """
    x_ref, wih0_ref, b0_ref, whh0_ref = refs[:4]
    lstm_refs = refs[4:4 + 3 * (num_lstm - 1)]
    fc1w_ref, fc1b_ref, fc2w_ref, fc2b_ref, out_ref = refs[4 + 3 * (num_lstm - 1):]

    T = seq_len
    Bp = x_ref.shape[0]

    def g_lane_mask(hdim):
        # True on the `g` (cell-candidate) lanes of an [i|f|g|o] gate slab.
        lane = jax.lax.broadcasted_iota(jnp.int32, (Bp, 4 * hdim), 1)
        return (lane >= 2 * hdim) & (lane < 3 * hdim)

    def run_layer(xp, whh, hdim, *, time_on_lanes, collect):
        """Serial T-step LSTM recurrence on one layer.

        xp is the hoisted (input projection + bias):
          time_on_lanes=True  -> (Bp, T*4*hdim)  (layer 0, time along lanes)
          time_on_lanes=False -> (T*Bp, 4*hdim)  (deeper layers, each step an
                                                   aligned 8-sublane tile)
        Only h @ W_hh stays on the serial critical path.
        """
        g4 = 4 * hdim
        gmask = g_lane_mask(hdim)              # hoisted out of the unrolled t loop
        h = jnp.zeros((Bp, hdim), jnp.float32)
        c = jnp.zeros((Bp, hdim), jnp.float32)
        outs = []
        for t in range(T):                     # fully unrolled (T static)
            if time_on_lanes:
                pre = xp[:, t * g4:(t + 1) * g4]
            else:
                pre = xp[t * Bp:(t + 1) * Bp, :]
            if t > 0:                          # h == 0 at t == 0: skip the matmul
                pre = pre + jnp.dot(h.astype(BF16), whh,
                                    preferred_element_type=jnp.float32)
            # One sigmoid EUP pass over the whole gate slab; tanh on the g lanes
            # via the exact identity tanh(x) = 2*sigmoid(2x) - 1.
            s = jax.nn.sigmoid(jnp.where(gmask, pre + pre, pre))
            act = jnp.where(gmask, s + s - 1.0, s)
            i_g = act[:, 0 * hdim:1 * hdim]
            f_g = act[:, 1 * hdim:2 * hdim]
            g_g = act[:, 2 * hdim:3 * hdim]
            o_g = act[:, 3 * hdim:4 * hdim]
            c = f_g * c + i_g * g_g
            h = o_g * jnp.tanh(c)
            if collect:
                outs.append(h)
        seq = jnp.concatenate(outs, axis=0) if collect else None   # (T*Bp, hdim)
        return h, seq

    # ---- layer 0 (expand Linear folded in): one hoisted input-projection matmul.
    h0 = whh0_ref.shape[0]
    xp0 = jnp.dot(x_ref[...].astype(BF16), wih0_ref[...],
                  preferred_element_type=jnp.float32) + b0_ref[...]   # (Bp, T*4*H0)
    h, seq = run_layer(xp0, whh0_ref[...], h0,
                       time_on_lanes=True, collect=(num_lstm > 1))

    # ---- deeper layers: hoist x @ W_ih once per layer (off the critical path);
    # only h @ W_hh remains inside the serial time loop.
    for l in range(1, num_lstm):
        wih_ref = lstm_refs[3 * (l - 1)]
        whh_ref = lstm_refs[3 * (l - 1) + 1]
        b_ref = lstm_refs[3 * (l - 1) + 2]
        hdim = whh_ref.shape[0]
        last = l == num_lstm - 1
        xp = jnp.dot(seq.astype(BF16), wih_ref[...],
                     preferred_element_type=jnp.float32) + b_ref[...]  # (T*Bp, 4H)
        h, seq = run_layer(xp, whh_ref[...], hdim,
                           time_on_lanes=False, collect=not last)

    # ---- FC head: Dropout -> Linear -> ReLU -> Dropout -> Linear.
    # TODO(synk): Dropout(0.1) train-mode masking not modeled (inference identity).
    z = jnp.dot(h.astype(BF16), fc1w_ref[...],
                preferred_element_type=jnp.float32) + fc1b_ref[...]
    z = jnp.maximum(z, 0.0)
    out = jnp.dot(z.astype(BF16), fc2w_ref[...],
                  preferred_element_type=jnp.float32) + fc2b_ref[...]
    out_ref[...] = out.astype(out_ref.dtype)


# ------------------------------ Pallas wrapper ------------------------------- #

def _prepare_kernel_inputs(x, params):
    """Host-side prep: fold the expand Linear into layer-0's input projection,
    sublane-pad the batch, and cast all matmul weights to bf16."""
    expw, expb = params["expand"]            # (T, F_in, F), (T, 1, F)
    lstm = params["lstm"]                    # [(wih (Din,4H), whh (H,4H), b (1,4H))]
    fc1_w, fc1_b = params["fc1"]
    fc2_w, fc2_b = params["fc2"]

    T = expw.shape[0]
    wih0, whh0, b0 = lstm[0]
    g0 = wih0.shape[1]

    # x @ expw[t] @ W_ih0 == x @ (expw[t] @ W_ih0): fold at prep time and concatenate
    # over t along the lane axis so the whole layer-0 hoist is a single matmul.
    w0 = jnp.einsum("tif,fg->tig", expw, wih0)                       # (T, F_in, 4*H0)
    w0 = jnp.transpose(w0, (1, 0, 2)).reshape(expw.shape[1], T * g0)
    b0_eff = (jnp.einsum("tf,fg->tg", expb[:, 0, :], wih0) + b0).reshape(1, T * g0)

    B = x.shape[0]
    Bp = ((B + 7) // 8) * 8                  # 8-sublane alignment for every (B, ·) tile
    x_pad = jnp.zeros((Bp, x.shape[1]), jnp.float32).at[:B].set(x)

    flat = [x_pad, w0.astype(BF16), b0_eff, whh0.astype(BF16)]
    for (wih, whh, b) in lstm[1:]:
        flat += [wih.astype(BF16), whh.astype(BF16), b]
    flat += [fc1_w.astype(BF16), fc1_b, fc2_w.astype(BF16), fc2_b]
    return flat, Bp


def infer_cell_forward(x, params):
    lstm = params["lstm"]
    T = params["expand"][0].shape[0]
    num_lstm = len(lstm)
    out_dim = params["fc2"][0].shape[1]
    B = x.shape[0]

    flat_inputs, Bp = _prepare_kernel_inputs(x, params)

    # Grid-less single-TensorCore kernel: total footprint is ~100 KiB, so everything
    # fits VMEM with huge margin on v5e/v6e/v7x.  If H is ever scaled up (>~600) or
    # the batch grows, switch to a batch grid axis with
    # dimension_semantics=("parallel",) (uses v7x's 2nd TensorCore) and/or
    # BlockSpec-streamed per-layer weights with a raised vmem_limit_bytes.
    out = pl.pallas_call(
        functools.partial(infer_cell_kernel, num_lstm=num_lstm, seq_len=T),
        out_shape=jax.ShapeDtypeStruct((Bp, out_dim), jnp.float32),
        in_specs=[pl.BlockSpec(memory_space=VMEM)] * len(flat_inputs),
        out_specs=pl.BlockSpec(memory_space=VMEM),
    )(*flat_inputs)
    return out[:B]


# -------------------------------- parameters --------------------------------- #

def init_params(key, input_size, seq_len, hidden_size, num_layers_list, output_size):
    keys = jax.random.split(key, 4)

    # expand Linear stored per time step: (T, in, F)
    kew, keb = jax.random.split(keys[0])
    expw = jax.random.normal(kew, (seq_len, input_size, input_size), jnp.float32) \
        / jnp.sqrt(float(input_size))
    expb = jax.random.normal(keb, (seq_len, 1, input_size), jnp.float32) * 0.01

    # flatten cells_structure (LSTM / LSTM / LSTM(x2) / Identity / Identity / LSTM)
    # into single (Din, H) layers in execution order.
    dims = []
    d = input_size
    for n, hsz in zip(num_layers_list,
                      [input_size, hidden_size, hidden_size, hidden_size]):
        for _ in range(n):
            dims.append((d, hsz))
            d = hsz

    # gate-concatenated layout: W_ih (Din, 4H), W_hh (H, 4H), b (1, 4H),
    # PyTorch gate order [i|f|g|o], b = b_ih + b_hh pre-combined.
    lstm = []
    lkeys = jax.random.split(keys[1], len(dims))
    for kk, (din, hsz) in zip(lkeys, dims):
        k1, k2, k3 = jax.random.split(kk, 3)
        wih = jax.random.normal(k1, (din, 4 * hsz), jnp.float32) / jnp.sqrt(float(din))
        whh = jax.random.normal(k2, (hsz, 4 * hsz), jnp.float32) / jnp.sqrt(float(hsz))
        b = jax.random.normal(k3, (1, 4 * hsz), jnp.float32) * 0.01
        lstm.append((wih, whh, b))

    def dense(kk, fan_in, fan_out):
        kw, kb = jax.random.split(kk)
        w = jax.random.normal(kw, (fan_in, fan_out), jnp.float32) / jnp.sqrt(float(fan_in))
        b = jax.random.normal(kb, (1, fan_out), jnp.float32) * 0.01
        return w, b

    fc1 = dense(keys[2], hidden_size, hidden_size * input_size)
    fc2 = dense(keys[3], hidden_size * input_size, output_size)

    return {"expand": (expw, expb), "lstm": lstm, "fc1": fc1, "fc2": fc2}


# ----------------------------- pure-JAX reference ----------------------------- #

def _lstm_layer_ref(x_tm, wih, whh, b):
    T, B, _ = x_tm.shape
    H = whh.shape[0]

    def step(carry, x_t):
        h, c = carry
        pre = x_t @ wih + h @ whh + b                     # (B, 4H), gates [i|f|g|o]
        i = jax.nn.sigmoid(pre[:, 0 * H:1 * H])
        f = jax.nn.sigmoid(pre[:, 1 * H:2 * H])
        g = jnp.tanh(pre[:, 2 * H:3 * H])
        o = jax.nn.sigmoid(pre[:, 3 * H:4 * H])
        c = f * c + i * g
        h = o * jnp.tanh(c)
        return (h, c), h

    init = (jnp.zeros((B, H), jnp.float32), jnp.zeros((B, H), jnp.float32))
    _, ys = jax.lax.scan(step, init, x_tm)
    return ys


def forward_ref(x, params):
    expw, expb = params["expand"]
    xs = jnp.einsum("bi,tif->tbf", x, expw) + expb        # (T, B, F) time-major
    for (wih, whh, b) in params["lstm"]:
        xs = _lstm_layer_ref(xs, wih, whh, b)
    last = xs[-1]
    w1, b1 = params["fc1"]
    w2, b2 = params["fc2"]
    z = jnp.maximum(last @ w1 + b1, 0.0)
    return z @ w2 + b2


# ----------------------------------- main ------------------------------------ #

if __name__ == "__main__":
    input_size, seq_len, hidden_size, output_size = 4, 8, 32, 3
    num_layers_list = [1, 1, 2, 1]
    batch = 2

    key = jax.random.PRNGKey(0)
    kp, kx = jax.random.split(key)
    params = init_params(kp, input_size, seq_len, hidden_size, num_layers_list,
                         output_size)
    x = jax.random.normal(kx, (batch, input_size), jnp.float32)

    out = infer_cell_forward(x, params)
    out = jax.block_until_ready(out)

    ref = forward_ref(x, params)
    assert out.shape == (batch, output_size), out.shape
    # Kernel uses single-pass bf16 MXU products (per perf review); reference is f32.
    assert jnp.allclose(out, ref, rtol=2e-2, atol=2e-2), (out, ref)

    print("KERNEL_OK")
</pallas_src>

<mosaic_0001>
module attributes {stable_mosaic.version = 11 : i64} {
  func.func @infer_cell_kernel(%arg0: memref<8x4xf32, #tpu.memory_space<vmem>>, %arg1: memref<4x128xbf16, #tpu.memory_space<vmem>>, %arg2: memref<1x128xf32, #tpu.memory_space<vmem>>, %arg3: memref<4x16xbf16, #tpu.memory_space<vmem>>, %arg4: memref<4x128xbf16, #tpu.memory_space<vmem>>, %arg5: memref<32x128xbf16, #tpu.memory_space<vmem>>, %arg6: memref<1x128xf32, #tpu.memory_space<vmem>>, %arg7: memref<32x128xbf16, #tpu.memory_space<vmem>>, %arg8: memref<32x128xbf16, #tpu.memory_space<vmem>>, %arg9: memref<1x128xf32, #tpu.memory_space<vmem>>, %arg10: memref<32x128xbf16, #tpu.memory_space<vmem>>, %arg11: memref<32x128xbf16, #tpu.memory_space<vmem>>, %arg12: memref<1x128xf32, #tpu.memory_space<vmem>>, %arg13: memref<32x128xbf16, #tpu.memory_space<vmem>>, %arg14: memref<32x128xbf16, #tpu.memory_space<vmem>>, %arg15: memref<1x128xf32, #tpu.memory_space<vmem>>, %arg16: memref<32x128xbf16, #tpu.memory_space<vmem>>, %arg17: memref<1x128xf32, #tpu.memory_space<vmem>>, %arg18: memref<128x3xbf16, #tpu.memory_space<vmem>>, %arg19: memref<1x3xf32, #tpu.memory_space<vmem>>, %arg20: memref<8x3xf32, #tpu.memory_space<vmem>>) attributes {dimension_semantics = [], scalar_prefetch = 0 : i64, scratch_operands = 0 : i64, tpu.core_type = #tpu.core_type<tc>} {
    %c0 = arith.constant 0 : index
    %c0_0 = arith.constant 0 : index
    %0 = vector.load %arg0[%c0, %c0_0] : memref<8x4xf32, #tpu.memory_space<vmem>>, vector<8x4xf32>
    %1 = arith.truncf %0 : vector<8x4xf32> to vector<8x4xbf16>
    %c0_1 = arith.constant 0 : index
    %c0_2 = arith.constant 0 : index
    %2 = vector.load %arg1[%c0_1, %c0_2] : memref<4x128xbf16, #tpu.memory_space<vmem>>, vector<4x128xbf16>
    %cst = arith.constant dense<0.000000e+00> : vector<8x128xf32>
    %3 = tpu.matmul %1, %2, %cst {dimension_numbers = #tpu.dot_dimension_numbers<[1], [0], [0], [1], [0, 0, 1, 1], [], []>} : vector<8x4xbf16>, vector<4x128xbf16>, vector<8x128xf32> -> vector<8x128xf32>
    %c0_3 = arith.constant 0 : index
    %c0_4 = arith.constant 0 : index
    %4 = vector.load %arg2[%c0_3, %c0_4] : memref<1x128xf32, #tpu.memory_space<vmem>>, vector<1x128xf32>
    %5 = vector.broadcast %4 : vector<1x128xf32> to vector<8x128xf32>
    %6 = arith.addf %3, %5 : vector<8x128xf32>
    %c0_5 = arith.constant 0 : index
    %c0_6 = arith.constant 0 : index
    %7 = vector.load %arg3[%c0_5, %c0_6] : memref<4x16xbf16, #tpu.memory_space<vmem>>, vector<4x16xbf16>
    %8 = tpu.iota {dimensions = array<i32: 1>} : vector<8x16xi32>
    %c8_i32 = arith.constant 8 : i32
    %9 = vector.broadcast %c8_i32 : i32 to vector<8x16xi32>
    %10 = arith.cmpi sge, %8, %9 : vector<8x16xi32>
    %c12_i32 = arith.constant 12 : i32
    %11 = vector.broadcast %c12_i32 : i32 to vector<8x16xi32>
    %12 = arith.cmpi slt, %8, %11 : vector<8x16xi32>
    %13 = arith.andi %10, %12 : vector<8x16xi1>
    %cst_7 = arith.constant 0.000000e+00 : f32
    %14 = vector.broadcast %cst_7 : f32 to vector<8x4xf32>
    %15 = vector.extract_strided_slice %6 {offsets = [0, 0], sizes = [8, 16], strides = [1, 1]} : vector<8x128xf32> to vector<8x16xf32>
    %16 = arith.addf %15, %15 : vector<8x16xf32>
    %17 = arith.select %13, %16, %15 : vector<8x16xi1>, vector<8x16xf32>
    %18 = arith.negf %17 : vector<8x16xf32>
    %19 = math.exp %18 : vector<8x16xf32>
    %cst_8 = arith.constant 1.000000e+00 : f32
    %20 = vector.broadcast %cst_8 : f32 to vector<8x16xf32>
    %21 = arith.addf %20, %19 : vector<8x16xf32>
    %22 = arith.divf %20, %21 : vector<8x16xf32>
    %23 = arith.addf %22, %22 : vector<8x16xf32>
    %cst_9 = arith.constant 1.000000e+00 : f32
    %24 = vector.broadcast %cst_9 : f32 to vector<8x16xf32>
    %25 = arith.subf %23, %24 : vector<8x16xf32>
    %26 = arith.select %13, %25, %22 : vector<8x16xi1>, vector<8x16xf32>
    %27 = vector.extract_strided_slice %26 {offsets = [0, 0], sizes = [8, 4], strides = [1, 1]} : vector<8x16xf32> to vector<8x4xf32>
    %28 = vector.extract_strided_slice %26 {offsets = [0, 4], sizes = [8, 4], strides = [1, 1]} : vector<8x16xf32> to vector<8x4xf32>
    %29 = vector.extract_strided_slice %26 {offsets = [0, 8], sizes = [8, 4], strides = [1, 1]} : vector<8x16xf32> to vector<8x4xf32>
    %30 = vector.extract_strided_slice %26 {offsets = [0, 12], sizes = [8, 4], strides = [1, 1]} : vector<8x16xf32> to vector<8x4xf32>
    %31 = arith.mulf %28, %14 : vector<8x4xf32>
    %32 = arith.mulf %27, %29 : vector<8x4xf32>
    %33 = arith.addf %31, %32 : vector<8x4xf32>
    %34 = math.tanh %33 : vector<8x4xf32>
    %35 = arith.mulf %30, %34 : vector<8x4xf32>
    %36 = vector.extract_strided_slice %6 {offsets = [0, 16], sizes = [8, 16], strides = [1, 1]} : vector<8x128xf32> to vector<8x16xf32>
    %37 = arith.truncf %35 : vector<8x4xf32> to vector<8x4xbf16>
    %cst_10 = arith.constant dense<0.000000e+00> : vector<8x16xf32>
    %38 = tpu.matmul %37, %7, %cst_10 {dimension_numbers = #tpu.dot_dimension_numbers<[1], [0], [0], [1], [0, 0, 1, 1], [], []>} : vector<8x4xbf16>, vector<4x16xbf16>, vector<8x16xf32> -> vector<8x16xf32>
    %39 = arith.addf %36, %38 : vector<8x16xf32>
    %40 = arith.addf %39, %39 : vector<8x16xf32>
    %41 = arith.select %13, %40, %39 : vector<8x16xi1>, vector<8x16xf32>
    %42 = arith.negf %41 : vector<8x16xf32>
    %43 = math.exp %42 : vector<8x16xf32>
    %cst_11 = arith.constant 1.000000e+00 : f32
    %44 = vector.broadcast %cst_11 : f32 to vector<8x16xf32>
    %45 = arith.addf %44, %43 : vector<8x16xf32>
    %46 = arith.divf %44, %45 : vector<8x16xf32>
    %47 = arith.addf %46, %46 : vector<8x16xf32>
    %cst_12 = arith.constant 1.000000e+00 : f32
    %48 = vector.broadcast %cst_12 : f32 to vector<8x16xf32>
    %49 = arith.subf %47, %48 : vector<8x16xf32>
    %50 = arith.select %13, %49, %46 : vector<8x16xi1>, vector<8x16xf32>
    %51 = vector.extract_strided_slice %50 {offsets = [0, 0], sizes = [8, 4], strides = [1, 1]} : vector<8x16xf32> to vector<8x4xf32>
    %52 = vector.extract_strided_slice %50 {offsets = [0, 4], sizes = [8, 4], strides = [1, 1]} : vector<8x16xf32> to vector<8x4xf32>
    %53 = vector.extract_strided_slice %50 {offsets = [0, 8], sizes = [8, 4], strides = [1, 1]} : vector<8x16xf32> to vector<8x4xf32>
    %54 = vector.extract_strided_slice %50 {offsets = [0, 12], sizes = [8, 4], strides = [1, 1]} : vector<8x16xf32> to vector<8x4xf32>
    %55 = arith.mulf %52, %33 : vector<8x4xf32>
    %56 = arith.mulf %51, %53 : vector<8x4xf32>
    %57 = arith.addf %55, %56 : vector<8x4xf32>
    %58 = math.tanh %57 : vector<8x4xf32>
    %59 = arith.mulf %54, %58 : vector<8x4xf32>
    %60 = vector.extract_strided_slice %6 {offsets = [0, 32], sizes = [8, 16], strides = [1, 1]} : vector<8x128xf32> to vector<8x16xf32>
    %61 = arith.truncf %59 : vector<8x4xf32> to vector<8x4xbf16>
    %cst_13 = arith.constant dense<0.000000e+00> : vector<8x16xf32>
    %62 = tpu.matmul %61, %7, %cst_13 {dimension_numbers = #tpu.dot_dimension_numbers<[1], [0], [0], [1], [0, 0, 1, 1], [], []>} : vector<8x4xbf16>, vector<4x16xbf16>, vector<8x16xf32> -> vector<8x16xf32>
    %63 = arith.addf %60, %62 : vector<8x16xf32>
    %64 = arith.addf %63, %63 : vector<8x16xf32>
    %65 = arith.select %13, %64, %63 : vector<8x16xi1>, vector<8x16xf32>
    %66 = arith.negf %65 : vector<8x16xf32>
    %67 = math.exp %66 : vector<8x16xf32>
    %cst_14 = arith.constant 1.000000e+00 : f32
    %68 = vector.broadcast %cst_14 : f32 to vector<8x16xf32>
    %69 = arith.addf %68, %67 : vector<8x16xf32>
    %70 = arith.divf %68, %69 : vector<8x16xf32>
    %71 = arith.addf %70, %70 : vector<8x16xf32>
    %cst_15 = arith.constant 1.000000e+00 : f32
    %72 = vector.broadcast %cst_15 : f32 to vector<8x16xf32>
    %73 = arith.subf %71, %72 : vector<8x16xf32>
    %74 = arith.select %13, %73, %70 : vector<8x16xi1>, vector<8x16xf32>
    %75 = vector.extract_strided_slice %74 {offsets = [0, 0], sizes = [8, 4], strides = [1, 1]} : vector<8x16xf32> to vector<8x4xf32>
    %76 = vector.extract_strided_slice %74 {offsets = [0, 4], sizes = [8, 4], strides = [1, 1]} : vector<8x16xf32> to vector<8x4xf32>
    %77 = vector.extract_strided_slice %74 {offsets = [0, 8], sizes = [8, 4], strides = [1, 1]} : vector<8x16xf32> to vector<8x4xf32>
    %78 = vector.extract_strided_slice %74 {offsets = [0, 12], sizes = [8, 4], strides = [1, 1]} : vector<8x16xf32> to vector<8x4xf32>
    %79 = arith.mulf %76, %57 : vector<8x4xf32>
    %80 = arith.mulf %75, %77 : vector<8x4xf32>
    %81 = arith.addf %79, %80 : vector<8x4xf32>
    %82 = math.tanh %81 : vector<8x4xf32>
    %83 = arith.mulf %78, %82 : vector<8x4xf32>
    %84 = vector.extract_strided_slice %6 {offsets = [0, 48], sizes = [8, 16], strides = [1, 1]} : vector<8x128xf32> to vector<8x16xf32>
    %85 = arith.truncf %83 : vector<8x4xf32> to vector<8x4xbf16>
    %cst_16 = arith.constant dense<0.000000e+00> : vector<8x16xf32>
    %86 = tpu.matmul %85, %7, %cst_16 {dimension_numbers = #tpu.dot_dimension_numbers<[1], [0], [0], [1], [0, 0, 1, 1], [], []>} : vector<8x4xbf16>, vector<4x16xbf16>, vector<8x16xf32> -> vector<8x16xf32>
    %87 = arith.addf %84, %86 : vector<8x16xf32>
    %88 = arith.addf %87, %87 : vector<8x16xf32>
    %89 = arith.select %13, %88, %87 : vector<8x16xi1>, vector<8x16xf32>
    %90 = arith.negf %89 : vector<8x16xf32>
    %91 = math.exp %90 : vector<8x16xf32>
    %cst_17 = arith.constant 1.000000e+00 : f32
    %92 = vector.broadcast %cst_17 : f32 to vector<8x16xf32>
    %93 = arith.addf %92, %91 : vector<8x16xf32>
    %94 = arith.divf %92, %93 : vector<8x16xf32>
    %95 = arith.addf %94, %94 : vector<8x16xf32>
    %cst_18 = arith.constant 1.000000e+00 : f32
    %96 = vector.broadcast %cst_18 : f32 to vector<8x16xf32>
    %97 = arith.subf %95, %96 : vector<8x16xf32>
    %98 = arith.select %13, %97, %94 : vector<8x16xi1>, vector<8x16xf32>
    %99 = vector.extract_strided_slice %98 {offsets = [0, 0], sizes = [8, 4], strides = [1, 1]} : vector<8x16xf32> to vector<8x4xf32>
    %100 = vector.extract_strided_slice %98 {offsets = [0, 4], sizes = [8, 4], strides = [1, 1]} : vector<8x16xf32> to vector<8x4xf32>
    %101 = vector.extract_strided_slice %98 {offsets = [0, 8], sizes = [8, 4], strides = [1, 1]} : vector<8x16xf32> to vector<8x4xf32>
    %102 = vector.extract_strided_slice %98 {offsets = [0, 12], sizes = [8, 4], strides = [1, 1]} : vector<8x16xf32> to vector<8x4xf32>
    %103 = arith.mulf %100, %81 : vector<8x4xf32>
    %104 = arith.mulf %99, %101 : vector<8x4xf32>
    %105 = arith.addf %103, %104 : vector<8x4xf32>
    %106 = math.tanh %105 : vector<8x4xf32>
    %107 = arith.mulf %102, %106 : vector<8x4xf32>
    %108 = vector.extract_strided_slice %6 {offsets = [0, 64], sizes = [8, 16], strides = [1, 1]} : vector<8x128xf32> to vector<8x16xf32>
    %109 = arith.truncf %107 : vector<8x4xf32> to vector<8x4xbf16>
    %cst_19 = arith.constant dense<0.000000e+00> : vector<8x16xf32>
    %110 = tpu.matmul %109, %7, %cst_19 {dimension_numbers = #tpu.dot_dimension_numbers<[1], [0], [0], [1], [0, 0, 1, 1], [], []>} : vector<8x4xbf16>, vector<4x16xbf16>, vector<8x16xf32> -> vector<8x16xf32>
    %111 = arith.addf %108, %110 : vector<8x16xf32>
    %112 = arith.addf %111, %111 : vector<8x16xf32>
    %113 = arith.select %13, %112, %111 : vector<8x16xi1>, vector<8x16xf32>
    %114 = arith.negf %113 : vector<8x16xf32>
    %115 = math.exp %114 : vector<8x16xf32>
    %cst_20 = arith.constant 1.000000e+00 : f32
    %116 = vector.broadcast %cst_20 : f32 to vector<8x16xf32>
    %117 = arith.addf %116, %115 : vector<8x16xf32>
    %118 = arith.divf %116, %117 : vector<8x16xf32>
    %119 = arith.addf %118, %118 : vector<8x16xf32>
    %cst_21 = arith.constant 1.000000e+00 : f32
    %120 = vector.broadcast %cst_21 : f32 to vector<8x16xf32>
    %121 = arith.subf %119, %120 : vector<8x16xf32>
    %122 = arith.select %13, %121, %118 : vector<8x16xi1>, vector<8x16xf32>
    %123 = vector.extract_strided_slice %122 {offsets = [0, 0], sizes = [8, 4], strides = [1, 1]} : vector<8x16xf32> to vector<8x4xf32>
    %124 = vector.extract_strided_slice %122 {offsets = [0, 4], sizes = [8, 4], strides = [1, 1]} : vector<8x16xf32> to vector<8x4xf32>
    %125 = vector.extract_strided_slice %122 {offsets = [0, 8], sizes = [8, 4], strides = [1, 1]} : vector<8x16xf32> to vector<8x4xf32>
    %126 = vector.extract_strided_slice %122 {offsets = [0, 12], sizes = [8, 4], strides = [1, 1]} : vector<8x16xf32> to vector<8x4xf32>
    %127 = arith.mulf %124, %105 : vector<8x4xf32>
    %128 = arith.mulf %123, %125 : vector<8x4xf32>
    %129 = arith.addf %127, %128 : vector<8x4xf32>
    %130 = math.tanh %129 : vector<8x4xf32>
    %131 = arith.mulf %126, %130 : vector<8x4xf32>
    %132 = vector.extract_strided_slice %6 {offsets = [0, 80], sizes = [8, 16], strides = [1, 1]} : vector<8x128xf32> to vector<8x16xf32>
    %133 = arith.truncf %131 : vector<8x4xf32> to vector<8x4xbf16>
    %cst_22 = arith.constant dense<0.000000e+00> : vector<8x16xf32>
    %134 = tpu.matmul %133, %7, %cst_22 {dimension_numbers = #tpu.dot_dimension_numbers<[1], [0], [0], [1], [0, 0, 1, 1], [], []>} : vector<8x4xbf16>, vector<4x16xbf16>, vector<8x16xf32> -> vector<8x16xf32>
    %135 = arith.addf %132, %134 : vector<8x16xf32>
    %136 = arith.addf %135, %135 : vector<8x16xf32>
    %137 = arith.select %13, %136, %135 : vector<8x16xi1>, vector<8x16xf32>
    %138 = arith.negf %137 : vector<8x16xf32>
    %139 = math.exp %138 : vector<8x16xf32>
    %cst_23 = arith.constant 1.000000e+00 : f32
    %140 = vector.broadcast %cst_23 : f32 to vector<8x16xf32>
    %141 = arith.addf %140, %139 : vector<8x16xf32>
    %142 = arith.divf %140, %141 : vector<8x16xf32>
    %143 = arith.addf %142, %142 : vector<8x16xf32>
    %cst_24 = arith.constant 1.000000e+00 : f32
    %144 = vector.broadcast %cst_24 : f32 to vector<8x16xf32>
    %145 = arith.subf %143, %144 : vector<8x16xf32>
    %146 = arith.select %13, %145, %142 : vector<8x16xi1>, vector<8x16xf32>
    %147 = vector.extract_strided_slice %146 {offsets = [0, 0], sizes = [8, 4], strides = [1, 1]} : vector<8x16xf32> to vector<8x4xf32>
    %148 = vector.extract_strided_slice %146 {offsets = [0, 4], sizes = [8, 4], strides = [1, 1]} : vector<8x16xf32> to vector<8x4xf32>
    %149 = vector.extract_strided_slice %146 {offsets = [0, 8], sizes = [8, 4], strides = [1, 1]} : vector<8x16xf32> to vector<8x4xf32>
    %150 = vector.extract_strided_slice %146 {offsets = [0, 12], sizes = [8, 4], strides = [1, 1]} : vector<8x16xf32> to vector<8x4xf32>
    %151 = arith.mulf %148, %129 : vector<8x4xf32>
    %152 = arith.mulf %147, %149 : vector<8x4xf32>
    %153 = arith.addf %151, %152 : vector<8x4xf32>
    %154 = math.tanh %153 : vector<8x4xf32>
    %155 = arith.mulf %150, %154 : vector<8x4xf32>
    %156 = vector.extract_strided_slice %6 {offsets = [0, 96], sizes = [8, 16], strides = [1, 1]} : vector<8x128xf32> to vector<8x16xf32>
    %157 = arith.truncf %155 : vector<8x4xf32> to vector<8x4xbf16>
    %cst_25 = arith.constant dense<0.000000e+00> : vector<8x16xf32>
    %158 = tpu.matmul %157, %7, %cst_25 {dimension_numbers = #tpu.dot_dimension_numbers<[1], [0], [0], [1], [0, 0, 1, 1], [], []>} : vector<8x4xbf16>, vector<4x16xbf16>, vector<8x16xf32> -> vector<8x16xf32>
    %159 = arith.addf %156, %158 : vector<8x16xf32>
    %160 = arith.addf %159, %159 : vector<8x16xf32>
    %161 = arith.select %13, %160, %159 : vector<8x16xi1>, vector<8x16xf32>
    %162 = arith.negf %161 : vector<8x16xf32>
    %163 = math.exp %162 : vector<8x16xf32>
    %cst_26 = arith.constant 1.000000e+00 : f32
    %164 = vector.broadcast %cst_26 : f32 to vector<8x16xf32>
    %165 = arith.addf %164, %163 : vector<8x16xf32>
    %166 = arith.divf %164, %165 : vector<8x16xf32>
    %167 = arith.addf %166, %166 : vector<8x16xf32>
    %cst_27 = arith.constant 1.000000e+00 : f32
    %168 = vector.broadcast %cst_27 : f32 to vector<8x16xf32>
    %169 = arith.subf %167, %168 : vector<8x16xf32>
    %170 = arith.select %13, %169, %166 : vector<8x16xi1>, vector<8x16xf32>
    %171 = vector.extract_strided_slice %170 {offsets = [0, 0], sizes = [8, 4], strides = [1, 1]} : vector<8x16xf32> to vector<8x4xf32>
    %172 = vector.extract_strided_slice %170 {offsets = [0, 4], sizes = [8, 4], strides = [1, 1]} : vector<8x16xf32> to vector<8x4xf32>
    %173 = vector.extract_strided_slice %170 {offsets = [0, 8], sizes = [8, 4], strides = [1, 1]} : vector<8x16xf32> to vector<8x4xf32>
    %174 = vector.extract_strided_slice %170 {offsets = [0, 12], sizes = [8, 4], strides = [1, 1]} : vector<8x16xf32> to vector<8x4xf32>
    %175 = arith.mulf %172, %153 : vector<8x4xf32>
    %176 = arith.mulf %171, %173 : vector<8x4xf32>
    %177 = arith.addf %175, %176 : vector<8x4xf32>
    %178 = math.tanh %177 : vector<8x4xf32>
    %179 = arith.mulf %174, %178 : vector<8x4xf32>
    %180 = vector.extract_strided_slice %6 {offsets = [0, 112], sizes = [8, 16], strides = [1, 1]} : vector<8x128xf32> to vector<8x16xf32>
    %181 = arith.truncf %179 : vector<8x4xf32> to vector<8x4xbf16>
    %cst_28 = arith.constant dense<0.000000e+00> : vector<8x16xf32>
    %182 = tpu.matmul %181, %7, %cst_28 {dimension_numbers = #tpu.dot_dimension_numbers<[1], [0], [0], [1], [0, 0, 1, 1], [], []>} : vector<8x4xbf16>, vector<4x16xbf16>, vector<8x16xf32> -> vector<8x16xf32>
    %183 = arith.addf %180, %182 : vector<8x16xf32>
    %184 = arith.addf %183, %183 : vector<8x16xf32>
    %185 = arith.select %13, %184, %183 : vector<8x16xi1>, vector<8x16xf32>
    %186 = arith.negf %185 : vector<8x16xf32>
    %187 = math.exp %186 : vector<8x16xf32>
    %cst_29 = arith.constant 1.000000e+00 : f32
    %188 = vector.broadcast %cst_29 : f32 to vector<8x16xf32>
    %189 = arith.addf %188, %187 : vector<8x16xf32>
    %190 = arith.divf %188, %189 : vector<8x16xf32>
    %191 = arith.addf %190, %190 : vector<8x16xf32>
    %cst_30 = arith.constant 1.000000e+00 : f32
    %192 = vector.broadcast %cst_30 : f32 to vector<8x16xf32>
    %193 = arith.subf %191, %192 : vector<8x16xf32>
    %194 = arith.select %13, %193, %190 : vector<8x16xi1>, vector<8x16xf32>
    %195 = vector.extract_strided_slice %194 {offsets = [0, 0], sizes = [8, 4], strides = [1, 1]} : vector<8x16xf32> to vector<8x4xf32>
    %196 = vector.extract_strided_slice %194 {offsets = [0, 4], sizes = [8, 4], strides = [1, 1]} : vector<8x16xf32> to vector<8x4xf32>
    %197 = vector.extract_strided_slice %194 {offsets = [0, 8], sizes = [8, 4], strides = [1, 1]} : vector<8x16xf32> to vector<8x4xf32>
    %198 = vector.extract_strided_slice %194 {offsets = [0, 12], sizes = [8, 4], strides = [1, 1]} : vector<8x16xf32> to vector<8x4xf32>
    %199 = arith.mulf %196, %177 : vector<8x4xf32>
    %200 = arith.mulf %195, %197 : vector<8x4xf32>
    %201 = arith.addf %199, %200 : vector<8x4xf32>
    %202 = math.tanh %201 : vector<8x4xf32>
    %203 = arith.mulf %198, %202 : vector<8x4xf32>
    %204 = tpu.concatenate %35, %59, %83, %107, %131, %155, %179, %203 in 0 : vector<8x4xf32>, vector<8x4xf32>, vector<8x4xf32>, vector<8x4xf32>, vector<8x4xf32>, vector<8x4xf32>, vector<8x4xf32>, vector<8x4xf32> -> vector<64x4xf32>
    %205 = arith.truncf %204 : vector<64x4xf32> to vector<64x4xbf16>
    %c0_31 = arith.constant 0 : index
    %c0_32 = arith.constant 0 : index
    %206 = vector.load %arg4[%c0_31, %c0_32] : memref<4x128xbf16, #tpu.memory_space<vmem>>, vector<4x128xbf16>
    %cst_33 = arith.constant dense<0.000000e+00> : vector<64x128xf32>
    %207 = tpu.matmul %205, %206, %cst_33 {dimension_numbers = #tpu.dot_dimension_numbers<[1], [0], [0], [1], [0, 0, 1, 1], [], []>} : vector<64x4xbf16>, vector<4x128xbf16>, vector<64x128xf32> -> vector<64x128xf32>
    %c0_34 = arith.constant 0 : index
    %c0_35 = arith.constant 0 : index
    %208 = vector.load %arg6[%c0_34, %c0_35] : memref<1x128xf32, #tpu.memory_space<vmem>>, vector<1x128xf32>
    %209 = vector.broadcast %208 : vector<1x128xf32> to vector<64x128xf32>
    %210 = arith.addf %207, %209 : vector<64x128xf32>
    %c0_36 = arith.constant 0 : index
    %c0_37 = arith.constant 0 : index
    %211 = vector.load %arg5[%c0_36, %c0_37] : memref<32x128xbf16, #tpu.memory_space<vmem>>, vector<32x128xbf16>
    %212 = tpu.iota {dimensions = array<i32: 1>} : vector<8x128xi32>
    %c64_i32 = arith.constant 64 : i32
    %213 = vector.broadcast %c64_i32 : i32 to vector<8x128xi32>
    %214 = arith.cmpi sge, %212, %213 : vector<8x128xi32>
    %c96_i32 = arith.constant 96 : i32
    %215 = vector.broadcast %c96_i32 : i32 to vector<8x128xi32>
    %216 = arith.cmpi slt, %212, %215 : vector<8x128xi32>
    %217 = arith.andi %214, %216 : vector<8x128xi1>
    %cst_38 = arith.constant 0.000000e+00 : f32
    %218 = vector.broadcast %cst_38 : f32 to vector<8x32xf32>
    %219 = vector.extract_strided_slice %210 {offsets = [0, 0], sizes = [8, 128], strides = [1, 1]} : vector<64x128xf32> to vector<8x128xf32>
    %220 = arith.addf %219, %219 : vector<8x128xf32>
    %221 = arith.select %217, %220, %219 : vector<8x128xi1>, vector<8x128xf32>
    %222 = arith.negf %221 : vector<8x128xf32>
    %223 = math.exp %222 : vector<8x128xf32>
    %cst_39 = arith.constant 1.000000e+00 : f32
    %224 = vector.broadcast %cst_39 : f32 to vector<8x128xf32>
    %225 = arith.addf %224, %223 : vector<8x128xf32>
    %226 = arith.divf %224, %225 : vector<8x128xf32>
    %227 = arith.addf %226, %226 : vector<8x128xf32>
    %cst_40 = arith.constant 1.000000e+00 : f32
    %228 = vector.broadcast %cst_40 : f32 to vector<8x128xf32>
    %229 = arith.subf %227, %228 : vector<8x128xf32>
    %230 = arith.select %217, %229, %226 : vector<8x128xi1>, vector<8x128xf32>
    %231 = vector.extract_strided_slice %230 {offsets = [0, 0], sizes = [8, 32], strides = [1, 1]} : vector<8x128xf32> to vector<8x32xf32>
    %232 = vector.extract_strided_slice %230 {offsets = [0, 32], sizes = [8, 32], strides = [1, 1]} : vector<8x128xf32> to vector<8x32xf32>
    %233 = vector.extract_strided_slice %230 {offsets = [0, 64], sizes = [8, 32], strides = [1, 1]} : vector<8x128xf32> to vector<8x32xf32>
    %234 = vector.extract_strided_slice %230 {offsets = [0, 96], sizes = [8, 32], strides = [1, 1]} : vector<8x128xf32> to vector<8x32xf32>
    %235 = arith.mulf %232, %218 : vector<8x32xf32>
    %236 = arith.mulf %231, %233 : vector<8x32xf32>
    %237 = arith.addf %235, %236 : vector<8x32xf32>
    %238 = math.tanh %237 : vector<8x32xf32>
    %239 = arith.mulf %234, %238 : vector<8x32xf32>
    %240 = vector.extract_strided_slice %210 {offsets = [8, 0], sizes = [8, 128], strides = [1, 1]} : vector<64x128xf32> to vector<8x128xf32>
    %241 = arith.truncf %239 : vector<8x32xf32> to vector<8x32xbf16>
    %cst_41 = arith.constant dense<0.000000e+00> : vector<8x128xf32>
    %242 = tpu.matmul %241, %211, %cst_41 {dimension_numbers = #tpu.dot_dimension_numbers<[1], [0], [0], [1], [0, 0, 1, 1], [], []>} : vector<8x32xbf16>, vector<32x128xbf16>, vector<8x128xf32> -> vector<8x128xf32>
    %243 = arith.addf %240, %242 : vector<8x128xf32>
    %244 = arith.addf %243, %243 : vector<8x128xf32>
    %245 = arith.select %217, %244, %243 : vector<8x128xi1>, vector<8x128xf32>
    %246 = arith.negf %245 : vector<8x128xf32>
    %247 = math.exp %246 : vector<8x128xf32>
    %cst_42 = arith.constant 1.000000e+00 : f32
    %248 = vector.broadcast %cst_42 : f32 to vector<8x128xf32>
    %249 = arith.addf %248, %247 : vector<8x128xf32>
    %250 = arith.divf %248, %249 : vector<8x128xf32>
    %251 = arith.addf %250, %250 : vector<8x128xf32>
    %cst_43 = arith.constant 1.000000e+00 : f32
    %252 = vector.broadcast %cst_43 : f32 to vector<8x128xf32>
    %253 = arith.subf %251, %252 : vector<8x128xf32>
    %254 = arith.select %217, %253, %250 : vector<8x128xi1>, vector<8x128xf32>
    %255 = vector.extract_strided_slice %254 {offsets = [0, 0], sizes = [8, 32], strides = [1, 1]} : vector<8x128xf32> to vector<8x32xf32>
    %256 = vector.extract_strided_slice %254 {offsets = [0, 32], sizes = [8, 32], strides = [1, 1]} : vector<8x128xf32> to vector<8x32xf32>
    %257 = vector.extract_strided_slice %254 {offsets = [0, 64], sizes = [8, 32], strides = [1, 1]} : vector<8x128xf32> to vector<8x32xf32>
    %258 = vector.extract_strided_slice %254 {offsets = [0, 96], sizes = [8, 32], strides = [1, 1]} : vector<8x128xf32> to vector<8x32xf32>
    %259 = arith.mulf %256, %237 : vector<8x32xf32>
    %260 = arith.mulf %255, %257 : vector<8x32xf32>
    %261 = arith.addf %259, %260 : vector<8x32xf32>
    %262 = math.tanh %261 : vector<8x32xf32>
    %263 = arith.mulf %258, %262 : vector<8x32xf32>
    %264 = vector.extract_strided_slice %210 {offsets = [16, 0], sizes = [8, 128], strides = [1, 1]} : vector<64x128xf32> to vector<8x128xf32>
    %265 = arith.truncf %263 : vector<8x32xf32> to vector<8x32xbf16>
    %cst_44 = arith.constant dense<0.000000e+00> : vector<8x128xf32>
    %266 = tpu.matmul %265, %211, %cst_44 {dimension_numbers = #tpu.dot_dimension_numbers<[1], [0], [0], [1], [0, 0, 1, 1], [], []>} : vector<8x32xbf16>, vector<32x128xbf16>, vector<8x128xf32> -> vector<8x128xf32>
    %267 = arith.addf %264, %266 : vector<8x128xf32>
    %268 = arith.addf %267, %267 : vector<8x128xf32>
    %269 = arith.select %217, %268, %267 : vector<8x128xi1>, vector<8x128xf32>
    %270 = arith.negf %269 : vector<8x128xf32>
    %271 = math.exp %270 : vector<8x128xf32>
    %cst_45 = arith.constant 1.000000e+00 : f32
    %272 = vector.broadcast %cst_45 : f32 to vector<8x128xf32>
    %273 = arith.addf %272, %271 : vector<8x128xf32>
    %274 = arith.divf %272, %273 : vector<8x128xf32>
    %275 = arith.addf %274, %274 : vector<8x128xf32>
    %cst_46 = arith.constant 1.000000e+00 : f32
    %276 = vector.broadcast %cst_46 : f32 to vector<8x128xf32>
    %277 = arith.subf %275, %276 : vector<8x128xf32>
    %278 = arith.select %217, %277, %274 : vector<8x128xi1>, vector<8x128xf32>
    %279 = vector.extract_strided_slice %278 {offsets = [0, 0], sizes = [8, 32], strides = [1, 1]} : vector<8x128xf32> to vector<8x32xf32>
    %280 = vector.extract_strided_slice %278 {offsets = [0, 32], sizes = [8, 32], strides = [1, 1]} : vector<8x128xf32> to vector<8x32xf32>
    %281 = vector.extract_strided_slice %278 {offsets = [0, 64], sizes = [8, 32], strides = [1, 1]} : vector<8x128xf32> to vector<8x32xf32>
    %282 = vector.extract_strided_slice %278 {offsets = [0, 96], sizes = [8, 32], strides = [1, 1]} : vector<8x128xf32> to vector<8x32xf32>
    %283 = arith.mulf %280, %261 : vector<8x32xf32>
    %284 = arith.mulf %279, %281 : vector<8x32xf32>
    %285 = arith.addf %283, %284 : vector<8x32xf32>
    %286 = math.tanh %285 : vector<8x32xf32>
    %287 = arith.mulf %282, %286 : vector<8x32xf32>
    %288 = vector.extract_strided_slice %210 {offsets = [24, 0], sizes = [8, 128], strides = [1, 1]} : vector<64x128xf32> to vector<8x128xf32>
    %289 = arith.truncf %287 : vector<8x32xf32> to vector<8x32xbf16>
    %cst_47 = arith.constant dense<0.000000e+00> : vector<8x128xf32>
    %290 = tpu.matmul %289, %211, %cst_47 {dimension_numbers = #tpu.dot_dimension_numbers<[1], [0], [0], [1], [0, 0, 1, 1], [], []>} : vector<8x32xbf16>, vector<32x128xbf16>, vector<8x128xf32> -> vector<8x128xf32>
    %291 = arith.addf %288, %290 : vector<8x128xf32>
    %292 = arith.addf %291, %291 : vector<8x128xf32>
    %293 = arith.select %217, %292, %291 : vector<8x128xi1>, vector<8x128xf32>
    %294 = arith.negf %293 : vector<8x128xf32>
    %295 = math.exp %294 : vector<8x128xf32>
    %cst_48 = arith.constant 1.000000e+00 : f32
    %296 = vector.broadcast %cst_48 : f32 to vector<8x128xf32>
    %297 = arith.addf %296, %295 : vector<8x128xf32>
    %298 = arith.divf %296, %297 : vector<8x128xf32>
    %299 = arith.addf %298, %298 : vector<8x128xf32>
    %cst_49 = arith.constant 1.000000e+00 : f32
    %300 = vector.broadcast %cst_49 : f32 to vector<8x128xf32>
    %301 = arith.subf %299, %300 : vector<8x128xf32>
    %302 = arith.select %217, %301, %298 : vector<8x128xi1>, vector<8x128xf32>
    %303 = vector.extract_strided_slice %302 {offsets = [0, 0], sizes = [8, 32], strides = [1, 1]} : vector<8x128xf32> to vector<8x32xf32>
    %304 = vector.extract_strided_slice %302 {offsets = [0, 32], sizes = [8, 32], strides = [1, 1]} : vector<8x128xf32> to vector<8x32xf32>
    %305 = vector.extract_strided_slice %302 {offsets = [0, 64], sizes = [8, 32], strides = [1, 1]} : vector<8x128xf32> to vector<8x32xf32>
    %306 = vector.extract_strided_slice %302 {offsets = [0, 96], sizes = [8, 32], strides = [1, 1]} : vector<8x128xf32> to vector<8x32xf32>
    %307 = arith.mulf %304, %285 : vector<8x32xf32>
    %308 = arith.mulf %303, %305 : vector<8x32xf32>
    %309 = arith.addf %307, %308 : vector<8x32xf32>
    %310 = math.tanh %309 : vector<8x32xf32>
    %311 = arith.mulf %306, %310 : vector<8x32xf32>
    %312 = vector.extract_strided_slice %210 {offsets = [32, 0], sizes = [8, 128], strides = [1, 1]} : vector<64x128xf32> to vector<8x128xf32>
    %313 = arith.truncf %311 : vector<8x32xf32> to vector<8x32xbf16>
    %cst_50 = arith.constant dense<0.000000e+00> : vector<8x128xf32>
    %314 = tpu.matmul %313, %211, %cst_50 {dimension_numbers = #tpu.dot_dimension_numbers<[1], [0], [0], [1], [0, 0, 1, 1], [], []>} : vector<8x32xbf16>, vector<32x128xbf16>, vector<8x128xf32> -> vector<8x128xf32>
    %315 = arith.addf %312, %314 : vector<8x128xf32>
    %316 = arith.addf %315, %315 : vector<8x128xf32>
    %317 = arith.select %217, %316, %315 : vector<8x128xi1>, vector<8x128xf32>
    %318 = arith.negf %317 : vector<8x128xf32>
    %319 = math.exp %318 : vector<8x128xf32>
    %cst_51 = arith.constant 1.000000e+00 : f32
    %320 = vector.broadcast %cst_51 : f32 to vector<8x128xf32>
    %321 = arith.addf %320, %319 : vector<8x128xf32>
    %322 = arith.divf %320, %321 : vector<8x128xf32>
    %323 = arith.addf %322, %322 : vector<8x128xf32>
    %cst_52 = arith.constant 1.000000e+00 : f32
    %324 = vector.broadcast %cst_52 : f32 to vector<8x128xf32>
    %325 = arith.subf %323, %324 : vector<8x128xf32>
    %326 = arith.select %217, %325, %322 : vector<8x128xi1>, vector<8x128xf32>
    %327 = vector.extract_strided_slice %326 {offsets = [0, 0], sizes = [8, 32], strides = [1, 1]} : vector<8x128xf32> to vector<8x32xf32>
    %328 = vector.extract_strided_slice %326 {offsets = [0, 32], sizes = [8, 32], strides = [1, 1]} : vector<8x128xf32> to vector<8x32xf32>
    %329 = vector.extract_strided_slice %326 {offsets = [0, 64], sizes = [8, 32], strides = [1, 1]} : vector<8x128xf32> to vector<8x32xf32>
    %330 = vector.extract_strided_slice %326 {offsets = [0, 96], sizes = [8, 32], strides = [1, 1]} : vector<8x128xf32> to vector<8x32xf32>
    %331 = arith.mulf %328, %309 : vector<8x32xf32>
    %332 = arith.mulf %327, %329 : vector<8x32xf32>
    %333 = arith.addf %331, %332 : vector<8x32xf32>
    %334 = math.tanh %333 : vector<8x32xf32>
    %335 = arith.mulf %330, %334 : vector<8x32xf32>
    %336 = vector.extract_strided_slice %210 {offsets = [40, 0], sizes = [8, 128], strides = [1, 1]} : vector<64x128xf32> to vector<8x128xf32>
    %337 = arith.truncf %335 : vector<8x32xf32> to vector<8x32xbf16>
    %cst_53 = arith.constant dense<0.000000e+00> : vector<8x128xf32>
    %338 = tpu.matmul %337, %211, %cst_53 {dimension_numbers = #tpu.dot_dimension_numbers<[1], [0], [0], [1], [0, 0, 1, 1], [], []>} : vector<8x32xbf16>, vector<32x128xbf16>, vector<8x128xf32> -> vector<8x128xf32>
    %339 = arith.addf %336, %338 : vector<8x128xf32>
    %340 = arith.addf %339, %339 : vector<8x128xf32>
    %341 = arith.select %217, %340, %339 : vector<8x128xi1>, vector<8x128xf32>
    %342 = arith.negf %341 : vector<8x128xf32>
    %343 = math.exp %342 : vector<8x128xf32>
    %cst_54 = arith.constant 1.000000e+00 : f32
    %344 = vector.broadcast %cst_54 : f32 to vector<8x128xf32>
    %345 = arith.addf %344, %343 : vector<8x128xf32>
    %346 = arith.divf %344, %345 : vector<8x128xf32>
    %347 = arith.addf %346, %346 : vector<8x128xf32>
    %cst_55 = arith.constant 1.000000e+00 : f32
    %348 = vector.broadcast %cst_55 : f32 to vector<8x128xf32>
    %349 = arith.subf %347, %348 : vector<8x128xf32>
    %350 = arith.select %217, %349, %346 : vector<8x128xi1>, vector<8x128xf32>
    %351 = vector.extract_strided_slice %350 {offsets = [0, 0], sizes = [8, 32], strides = [1, 1]} : vector<8x128xf32> to vector<8x32xf32>
    %352 = vector.extract_strided_slice %350 {offsets = [0, 32], sizes = [8, 32], strides = [1, 1]} : vector<8x128xf32> to vector<8x32xf32>
    %353 = vector.extract_strided_slice %350 {offsets = [0, 64], sizes = [8, 32], strides = [1, 1]} : vector<8x128xf32> to vector<8x32xf32>
    %354 = vector.extract_strided_slice %350 {offsets = [0, 96], sizes = [8, 32], strides = [1, 1]} : vector<8x128xf32> to vector<8x32xf32>
    %355 = arith.mulf %352, %333 : vector<8x32xf32>
    %356 = arith.mulf %351, %353 : vector<8x32xf32>
    %357 = arith.addf %355, %356 : vector<8x32xf32>
    %358 = math.tanh %357 : vector<8x32xf32>
    %359 = arith.mulf %354, %358 : vector<8x32xf32>
    %360 = vector.extract_strided_slice %210 {offsets = [48, 0], sizes = [8, 128], strides = [1, 1]} : vector<64x128xf32> to vector<8x128xf32>
    %361 = arith.truncf %359 : vector<8x32xf32> to vector<8x32xbf16>
    %cst_56 = arith.constant dense<0.000000e+00> : vector<8x128xf32>
    %362 = tpu.matmul %361, %211, %cst_56 {dimension_numbers = #tpu.dot_dimension_numbers<[1], [0], [0], [1], [0, 0, 1, 1], [], []>} : vector<8x32xbf16>, vector<32x128xbf16>, vector<8x128xf32> -> vector<8x128xf32>
    %363 = arith.addf %360, %362 : vector<8x128xf32>
    %364 = arith.addf %363, %363 : vector<8x128xf32>
    %365 = arith.select %217, %364, %363 : vector<8x128xi1>, vector<8x128xf32>
    %366 = arith.negf %365 : vector<8x128xf32>
    %367 = math.exp %366 : vector<8x128xf32>
    %cst_57 = arith.constant 1.000000e+00 : f32
    %368 = vector.broadcast %cst_57 : f32 to vector<8x128xf32>
    %369 = arith.addf %368, %367 : vector<8x128xf32>
    %370 = arith.divf %368, %369 : vector<8x128xf32>
    %371 = arith.addf %370, %370 : vector<8x128xf32>
    %cst_58 = arith.constant 1.000000e+00 : f32
    %372 = vector.broadcast %cst_58 : f32 to vector<8x128xf32>
    %373 = arith.subf %371, %372 : vector<8x128xf32>
    %374 = arith.select %217, %373, %370 : vector<8x128xi1>, vector<8x128xf32>
    %375 = vector.extract_strided_slice %374 {offsets = [0, 0], sizes = [8, 32], strides = [1, 1]} : vector<8x128xf32> to vector<8x32xf32>
    %376 = vector.extract_strided_slice %374 {offsets = [0, 32], sizes = [8, 32], strides = [1, 1]} : vector<8x128xf32> to vector<8x32xf32>
    %377 = vector.extract_strided_slice %374 {offsets = [0, 64], sizes = [8, 32], strides = [1, 1]} : vector<8x128xf32> to vector<8x32xf32>
    %378 = vector.extract_strided_slice %374 {offsets = [0, 96], sizes = [8, 32], strides = [1, 1]} : vector<8x128xf32> to vector<8x32xf32>
    %379 = arith.mulf %376, %357 : vector<8x32xf32>
    %380 = arith.mulf %375, %377 : vector<8x32xf32>
    %381 = arith.addf %379, %380 : vector<8x32xf32>
    %382 = math.tanh %381 : vector<8x32xf32>
    %383 = arith.mulf %378, %382 : vector<8x32xf32>
    %384 = vector.extract_strided_slice %210 {offsets = [56, 0], sizes = [8, 128], strides = [1, 1]} : vector<64x128xf32> to vector<8x128xf32>
    %385 = arith.truncf %383 : vector<8x32xf32> to vector<8x32xbf16>
    %cst_59 = arith.constant dense<0.000000e+00> : vector<8x128xf32>
    %386 = tpu.matmul %385, %211, %cst_59 {dimension_numbers = #tpu.dot_dimension_numbers<[1], [0], [0], [1], [0, 0, 1, 1], [], []>} : vector<8x32xbf16>, vector<32x128xbf16>, vector<8x128xf32> -> vector<8x128xf32>
    %387 = arith.addf %384, %386 : vector<8x128xf32>
    %388 = arith.addf %387, %387 : vector<8x128xf32>
    %389 = arith.select %217, %388, %387 : vector<8x128xi1>, vector<8x128xf32>
    %390 = arith.negf %389 : vector<8x128xf32>
    %391 = math.exp %390 : vector<8x128xf32>
    %cst_60 = arith.constant 1.000000e+00 : f32
    %392 = vector.broadcast %cst_60 : f32 to vector<8x128xf32>
    %393 = arith.addf %392, %391 : vector<8x128xf32>
    %394 = arith.divf %392, %393 : vector<8x128xf32>
    %395 = arith.addf %394, %394 : vector<8x128xf32>
    %cst_61 = arith.constant 1.000000e+00 : f32
    %396 = vector.broadcast %cst_61 : f32 to vector<8x128xf32>
    %397 = arith.subf %395, %396 : vector<8x128xf32>
    %398 = arith.select %217, %397, %394 : vector<8x128xi1>, vector<8x128xf32>
    %399 = vector.extract_strided_slice %398 {offsets = [0, 0], sizes = [8, 32], strides = [1, 1]} : vector<8x128xf32> to vector<8x32xf32>
    %400 = vector.extract_strided_slice %398 {offsets = [0, 32], sizes = [8, 32], strides = [1, 1]} : vector<8x128xf32> to vector<8x32xf32>
    %401 = vector.extract_strided_slice %398 {offsets = [0, 64], sizes = [8, 32], strides = [1, 1]} : vector<8x128xf32> to vector<8x32xf32>
    %402 = vector.extract_strided_slice %398 {offsets = [0, 96], sizes = [8, 32], strides = [1, 1]} : vector<8x128xf32> to vector<8x32xf32>
    %403 = arith.mulf %400, %381 : vector<8x32xf32>
    %404 = arith.mulf %399, %401 : vector<8x32xf32>
    %405 = arith.addf %403, %404 : vector<8x32xf32>
    %406 = math.tanh %405 : vector<8x32xf32>
    %407 = arith.mulf %402, %406 : vector<8x32xf32>
    %408 = tpu.concatenate %239, %263, %287, %311, %335, %359, %383, %407 in 0 : vector<8x32xf32>, vector<8x32xf32>, vector<8x32xf32>, vector<8x32xf32>, vector<8x32xf32>, vector<8x32xf32>, vector<8x32xf32>, vector<8x32xf32> -> vector<64x32xf32>
    %409 = arith.truncf %408 : vector<64x32xf32> to vector<64x32xbf16>
    %c0_62 = arith.constant 0 : index
    %c0_63 = arith.constant 0 : index
    %410 = vector.load %arg7[%c0_62, %c0_63] : memref<32x128xbf16, #tpu.memory_space<vmem>>, vector<32x128xbf16>
    %cst_64 = arith.constant dense<0.000000e+00> : vector<64x128xf32>
    %411 = tpu.matmul %409, %410, %cst_64 {dimension_numbers = #tpu.dot_dimension_numbers<[1], [0], [0], [1], [0, 0, 1, 1], [], []>} : vector<64x32xbf16>, vector<32x128xbf16>, vector<64x128xf32> -> vector<64x128xf32>
    %c0_65 = arith.constant 0 : index
    %c0_66 = arith.constant 0 : index
    %412 = vector.load %arg9[%c0_65, %c0_66] : memref<1x128xf32, #tpu.memory_space<vmem>>, vector<1x128xf32>
    %413 = vector.broadcast %412 : vector<1x128xf32> to vector<64x128xf32>
    %414 = arith.addf %411, %413 : vector<64x128xf32>
    %c0_67 = arith.constant 0 : index
    %c0_68 = arith.constant 0 : index
    %415 = vector.load %arg8[%c0_67, %c0_68] : memref<32x128xbf16, #tpu.memory_space<vmem>>, vector<32x128xbf16>
    %416 = tpu.iota {dimensions = array<i32: 1>} : vector<8x128xi32>
    %c64_i32_69 = arith.constant 64 : i32
    %417 = vector.broadcast %c64_i32_69 : i32 to vector<8x128xi32>
    %418 = arith.cmpi sge, %416, %417 : vector<8x128xi32>
    %c96_i32_70 = arith.constant 96 : i32
    %419 = vector.broadcast %c96_i32_70 : i32 to vector<8x128xi32>
    %420 = arith.cmpi slt, %416, %419 : vector<8x128xi32>
    %421 = arith.andi %418, %420 : vector<8x128xi1>
    %cst_71 = arith.constant 0.000000e+00 : f32
    %422 = vector.broadcast %cst_71 : f32 to vector<8x32xf32>
    %423 = vector.extract_strided_slice %414 {offsets = [0, 0], sizes = [8, 128], strides = [1, 1]} : vector<64x128xf32> to vector<8x128xf32>
    %424 = arith.addf %423, %423 : vector<8x128xf32>
    %425 = arith.select %421, %424, %423 : vector<8x128xi1>, vector<8x128xf32>
    %426 = arith.negf %425 : vector<8x128xf32>
    %427 = math.exp %426 : vector<8x128xf32>
    %cst_72 = arith.constant 1.000000e+00 : f32
    %428 = vector.broadcast %cst_72 : f32 to vector<8x128xf32>
    %429 = arith.addf %428, %427 : vector<8x128xf32>
    %430 = arith.divf %428, %429 : vector<8x128xf32>
    %431 = arith.addf %430, %430 : vector<8x128xf32>
    %cst_73 = arith.constant 1.000000e+00 : f32
    %432 = vector.broadcast %cst_73 : f32 to vector<8x128xf32>
    %433 = arith.subf %431, %432 : vector<8x128xf32>
    %434 = arith.select %421, %433, %430 : vector<8x128xi1>, vector<8x128xf32>
    %435 = vector.extract_strided_slice %434 {offsets = [0, 0], sizes = [8, 32], strides = [1, 1]} : vector<8x128xf32> to vector<8x32xf32>
    %436 = vector.extract_strided_slice %434 {offsets = [0, 32], sizes = [8, 32], strides = [1, 1]} : vector<8x128xf32> to vector<8x32xf32>
    %437 = vector.extract_strided_slice %434 {offsets = [0, 64], sizes = [8, 32], strides = [1, 1]} : vector<8x128xf32> to vector<8x32xf32>
    %438 = vector.extract_strided_slice %434 {offsets = [0, 96], sizes = [8, 32], strides = [1, 1]} : vector<8x128xf32> to vector<8x32xf32>
    %439 = arith.mulf %436, %422 : vector<8x32xf32>
    %440 = arith.mulf %435, %437 : vector<8x32xf32>
    %441 = arith.addf %439, %440 : vector<8x32xf32>
    %442 = math.tanh %441 : vector<8x32xf32>
    %443 = arith.mulf %438, %442 : vector<8x32xf32>
    %444 = vector.extract_strided_slice %414 {offsets = [8, 0], sizes = [8, 128], strides = [1, 1]} : vector<64x128xf32> to vector<8x128xf32>
    %445 = arith.truncf %443 : vector<8x32xf32> to vector<8x32xbf16>
    %cst_74 = arith.constant dense<0.000000e+00> : vector<8x128xf32>
    %446 = tpu.matmul %445, %415, %cst_74 {dimension_numbers = #tpu.dot_dimension_numbers<[1], [0], [0], [1], [0, 0, 1, 1], [], []>} : vector<8x32xbf16>, vector<32x128xbf16>, vector<8x128xf32> -> vector<8x128xf32>
    %447 = arith.addf %444, %446 : vector<8x128xf32>
    %448 = arith.addf %447, %447 : vector<8x128xf32>
    %449 = arith.select %421, %448, %447 : vector<8x128xi1>, vector<8x128xf32>
    %450 = arith.negf %449 : vector<8x128xf32>
    %451 = math.exp %450 : vector<8x128xf32>
    %cst_75 = arith.constant 1.000000e+00 : f32
    %452 = vector.broadcast %cst_75 : f32 to vector<8x128xf32>
    %453 = arith.addf %452, %451 : vector<8x128xf32>
    %454 = arith.divf %452, %453 : vector<8x128xf32>
    %455 = arith.addf %454, %454 : vector<8x128xf32>
    %cst_76 = arith.constant 1.000000e+00 : f32
    %456 = vector.broadcast %cst_76 : f32 to vector<8x128xf32>
    %457 = arith.subf %455, %456 : vector<8x128xf32>
    %458 = arith.select %421, %457, %454 : vector<8x128xi1>, vector<8x128xf32>
    %459 = vector.extract_strided_slice %458 {offsets = [0, 0], sizes = [8, 32], strides = [1, 1]} : vector<8x128xf32> to vector<8x32xf32>
    %460 = vector.extract_strided_slice %458 {offsets = [0, 32], sizes = [8, 32], strides = [1, 1]} : vector<8x128xf32> to vector<8x32xf32>
    %461 = vector.extract_strided_slice %458 {offsets = [0, 64], sizes = [8, 32], strides = [1, 1]} : vector<8x128xf32> to vector<8x32xf32>
    %462 = vector.extract_strided_slice %458 {offsets = [0, 96], sizes = [8, 32], strides = [1, 1]} : vector<8x128xf32> to vector<8x32xf32>
    %463 = arith.mulf %460, %441 : vector<8x32xf32>
    %464 = arith.mulf %459, %461 : vector<8x32xf32>
    %465 = arith.addf %463, %464 : vector<8x32xf32>
    %466 = math.tanh %465 : vector<8x32xf32>
    %467 = arith.mulf %462, %466 : vector<8x32xf32>
    %468 = vector.extract_strided_slice %414 {offsets = [16, 0], sizes = [8, 128], strides = [1, 1]} : vector<64x128xf32> to vector<8x128xf32>
    %469 = arith.truncf %467 : vector<8x32xf32> to vector<8x32xbf16>
    %cst_77 = arith.constant dense<0.000000e+00> : vector<8x128xf32>
    %470 = tpu.matmul %469, %415, %cst_77 {dimension_numbers = #tpu.dot_dimension_numbers<[1], [0], [0], [1], [0, 0, 1, 1], [], []>} : vector<8x32xbf16>, vector<32x128xbf16>, vector<8x128xf32> -> vector<8x128xf32>
    %471 = arith.addf %468, %470 : vector<8x128xf32>
    %472 = arith.addf %471, %471 : vector<8x128xf32>
    %473 = arith.select %421, %472, %471 : vector<8x128xi1>, vector<8x128xf32>
    %474 = arith.negf %473 : vector<8x128xf32>
    %475 = math.exp %474 : vector<8x128xf32>
    %cst_78 = arith.constant 1.000000e+00 : f32
    %476 = vector.broadcast %cst_78 : f32 to vector<8x128xf32>
    %477 = arith.addf %476, %475 : vector<8x128xf32>
    %478 = arith.divf %476, %477 : vector<8x128xf32>
    %479 = arith.addf %478, %478 : vector<8x128xf32>
    %cst_79 = arith.constant 1.000000e+00 : f32
    %480 = vector.broadcast %cst_79 : f32 to vector<8x128xf32>
    %481 = arith.subf %479, %480 : vector<8x128xf32>
    %482 = arith.select %421, %481, %478 : vector<8x128xi1>, vector<8x128xf32>
    %483 = vector.extract_strided_slice %482 {offsets = [0, 0], sizes = [8, 32], strides = [1, 1]} : vector<8x128xf32> to vector<8x32xf32>
    %484 = vector.extract_strided_slice %482 {offsets = [0, 32], sizes = [8, 32], strides = [1, 1]} : vector<8x128xf32> to vector<8x32xf32>
    %485 = vector.extract_strided_slice %482 {offsets = [0, 64], sizes = [8, 32], strides = [1, 1]} : vector<8x128xf32> to vector<8x32xf32>
    %486 = vector.extract_strided_slice %482 {offsets = [0, 96], sizes = [8, 32], strides = [1, 1]} : vector<8x128xf32> to vector<8x32xf32>
    %487 = arith.mulf %484, %465 : vector<8x32xf32>
    %488 = arith.mulf %483, %485 : vector<8x32xf32>
    %489 = arith.addf %487, %488 : vector<8x32xf32>
    %490 = math.tanh %489 : vector<8x32xf32>
    %491 = arith.mulf %486, %490 : vector<8x32xf32>
    %492 = vector.extract_strided_slice %414 {offsets = [24, 0], sizes = [8, 128], strides = [1, 1]} : vector<64x128xf32> to vector<8x128xf32>
    %493 = arith.truncf %491 : vector<8x32xf32> to vector<8x32xbf16>
    %cst_80 = arith.constant dense<0.000000e+00> : vector<8x128xf32>
    %494 = tpu.matmul %493, %415, %cst_80 {dimension_numbers = #tpu.dot_dimension_numbers<[1], [0], [0], [1], [0, 0, 1, 1], [], []>} : vector<8x32xbf16>, vector<32x128xbf16>, vector<8x128xf32> -> vector<8x128xf32>
    %495 = arith.addf %492, %494 : vector<8x128xf32>
    %496 = arith.addf %495, %495 : vector<8x128xf32>
    %497 = arith.select %421, %496, %495 : vector<8x128xi1>, vector<8x128xf32>
    %498 = arith.negf %497 : vector<8x128xf32>
    %499 = math.exp %498 : vector<8x128xf32>
    %cst_81 = arith.constant 1.000000e+00 : f32
    %500 = vector.broadcast %cst_81 : f32 to vector<8x128xf32>
    %501 = arith.addf %500, %499 : vector<8x128xf32>
    %502 = arith.divf %500, %501 : vector<8x128xf32>
    %503 = arith.addf %502, %502 : vector<8x128xf32>
    %cst_82 = arith.constant 1.000000e+00 : f32
    %504 = vector.broadcast %cst_82 : f32 to vector<8x128xf32>
    %505 = arith.subf %503, %504 : vector<8x128xf32>
    %506 = arith.select %421, %505, %502 : vector<8x128xi1>, vector<8x128xf32>
    %507 = vector.extract_strided_slice %506 {offsets = [0, 0], sizes = [8, 32], strides = [1, 1]} : vector<8x128xf32> to vector<8x32xf32>
    %508 = vector.extract_strided_slice %506 {offsets = [0, 32], sizes = [8, 32], strides = [1, 1]} : vector<8x128xf32> to vector<8x32xf32>
    %509 = vector.extract_strided_slice %506 {offsets = [0, 64], sizes = [8, 32], strides = [1, 1]} : vector<8x128xf32> to vector<8x32xf32>
    %510 = vector.extract_strided_slice %506 {offsets = [0, 96], sizes = [8, 32], strides = [1, 1]} : vector<8x128xf32> to vector<8x32xf32>
    %511 = arith.mulf %508, %489 : vector<8x32xf32>
    %512 = arith.mulf %507, %509 : vector<8x32xf32>
    %513 = arith.addf %511, %512 : vector<8x32xf32>
    %514 = math.tanh %513 : vector<8x32xf32>
    %515 = arith.mulf %510, %514 : vector<8x32xf32>
    %516 = vector.extract_strided_slice %414 {offsets = [32, 0], sizes = [8, 128], strides = [1, 1]} : vector<64x128xf32> to vector<8x128xf32>
    %517 = arith.truncf %515 : vector<8x32xf32> to vector<8x32xbf16>
    %cst_83 = arith.constant dense<0.000000e+00> : vector<8x128xf32>
    %518 = tpu.matmul %517, %415, %cst_83 {dimension_numbers = #tpu.dot_dimension_numbers<[1], [0], [0], [1], [0, 0, 1, 1], [], []>} : vector<8x32xbf16>, vector<32x128xbf16>, vector<8x128xf32> -> vector<8x128xf32>
    %519 = arith.addf %516, %518 : vector<8x128xf32>
    %520 = arith.addf %519, %519 : vector<8x128xf32>
    %521 = arith.select %421, %520, %519 : vector<8x128xi1>, vector<8x128xf32>
    %522 = arith.negf %521 : vector<8x128xf32>
    %523 = math.exp %522 : vector<8x128xf32>
    %cst_84 = arith.constant 1.000000e+00 : f32
    %524 = vector.broadcast %cst_84 : f32 to vector<8x128xf32>
    %525 = arith.addf %524, %523 : vector<8x128xf32>
    %526 = arith.divf %524, %525 : vector<8x128xf32>
    %527 = arith.addf %526, %526 : vector<8x128xf32>
    %cst_85 = arith.constant 1.000000e+00 : f32
    %528 = vector.broadcast %cst_85 : f32 to vector<8x128xf32>
    %529 = arith.subf %527, %528 : vector<8x128xf32>
    %530 = arith.select %421, %529, %526 : vector<8x128xi1>, vector<8x128xf32>
    %531 = vector.extract_strided_slice %530 {offsets = [0, 0], sizes = [8, 32], strides = [1, 1]} : vector<8x128xf32> to vector<8x32xf32>
    %532 = vector.extract_strided_slice %530 {offsets = [0, 32], sizes = [8, 32], strides = [1, 1]} : vector<8x128xf32> to vector<8x32xf32>
    %533 = vector.extract_strided_slice %530 {offsets = [0, 64], sizes = [8, 32], strides = [1, 1]} : vector<8x128xf32> to vector<8x32xf32>
    %534 = vector.extract_strided_slice %530 {offsets = [0, 96], sizes = [8, 32], strides = [1, 1]} : vector<8x128xf32> to vector<8x32xf32>
    %535 = arith.mulf %532, %513 : vector<8x32xf32>
    %536 = arith.mulf %531, %533 : vector<8x32xf32>
    %537 = arith.addf %535, %536 : vector<8x32xf32>
    %538 = math.tanh %537 : vector<8x32xf32>
    %539 = arith.mulf %534, %538 : vector<8x32xf32>
    %540 = vector.extract_strided_slice %414 {offsets = [40, 0], sizes = [8, 128], strides = [1, 1]} : vector<64x128xf32> to vector<8x128xf32>
    %541 = arith.truncf %539 : vector<8x32xf32> to vector<8x32xbf16>
    %cst_86 = arith.constant dense<0.000000e+00> : vector<8x128xf32>
    %542 = tpu.matmul %541, %415, %cst_86 {dimension_numbers = #tpu.dot_dimension_numbers<[1], [0], [0], [1], [0, 0, 1, 1], [], []>} : vector<8x32xbf16>, vector<32x128xbf16>, vector<8x128xf32> -> vector<8x128xf32>
    %543 = arith.addf %540, %542 : vector<8x128xf32>
    %544 = arith.addf %543, %543 : vector<8x128xf32>
    %545 = arith.select %421, %544, %543 : vector<8x128xi1>, vector<8x128xf32>
    %546 = arith.negf %545 : vector<8x128xf32>
    %547 = math.exp %546 : vector<8x128xf32>
    %cst_87 = arith.constant 1.000000e+00 : f32
    %548 = vector.broadcast %cst_87 : f32 to vector<8x128xf32>
    %549 = arith.addf %548, %547 : vector<8x128xf32>
    %550 = arith.divf %548, %549 : vector<8x128xf32>
    %551 = arith.addf %550, %550 : vector<8x128xf32>
    %cst_88 = arith.constant 1.000000e+00 : f32
    %552 = vector.broadcast %cst_88 : f32 to vector<8x128xf32>
    %553 = arith.subf %551, %552 : vector<8x128xf32>
    %554 = arith.select %421, %553, %550 : vector<8x128xi1>, vector<8x128xf32>
    %555 = vector.extract_strided_slice %554 {offsets = [0, 0], sizes = [8, 32], strides = [1, 1]} : vector<8x128xf32> to vector<8x32xf32>
    %556 = vector.extract_strided_slice %554 {offsets = [0, 32], sizes = [8, 32], strides = [1, 1]} : vector<8x128xf32> to vector<8x32xf32>
    %557 = vector.extract_strided_slice %554 {offsets = [0, 64], sizes = [8, 32], strides = [1, 1]} : vector<8x128xf32> to vector<8x32xf32>
    %558 = vector.extract_strided_slice %554 {offsets = [0, 96], sizes = [8, 32], strides = [1, 1]} : vector<8x128xf32> to vector<8x32xf32>
    %559 = arith.mulf %556, %537 : vector<8x32xf32>
    %560 = arith.mulf %555, %557 : vector<8x32xf32>
    %561 = arith.addf %559, %560 : vector<8x32xf32>
    %562 = math.tanh %561 : vector<8x32xf32>
    %563 = arith.mulf %558, %562 : vector<8x32xf32>
    %564 = vector.extract_strided_slice %414 {offsets = [48, 0], sizes = [8, 128], strides = [1, 1]} : vector<64x128xf32> to vector<8x128xf32>
    %565 = arith.truncf %563 : vector<8x32xf32> to vector<8x32xbf16>
    %cst_89 = arith.constant dense<0.000000e+00> : vector<8x128xf32>
    %566 = tpu.matmul %565, %415, %cst_89 {dimension_numbers = #tpu.dot_dimension_numbers<[1], [0], [0], [1], [0, 0, 1, 1], [], []>} : vector<8x32xbf16>, vector<32x128xbf16>, vector<8x128xf32> -> vector<8x128xf32>
    %567 = arith.addf %564, %566 : vector<8x128xf32>
    %568 = arith.addf %567, %567 : vector<8x128xf32>
    %569 = arith.select %421, %568, %567 : vector<8x128xi1>, vector<8x128xf32>
    %570 = arith.negf %569 : vector<8x128xf32>
    %571 = math.exp %570 : vector<8x128xf32>
    %cst_90 = arith.constant 1.000000e+00 : f32
    %572 = vector.broadcast %cst_90 : f32 to vector<8x128xf32>
    %573 = arith.addf %572, %571 : vector<8x128xf32>
    %574 = arith.divf %572, %573 : vector<8x128xf32>
    %575 = arith.addf %574, %574 : vector<8x128xf32>
    %cst_91 = arith.constant 1.000000e+00 : f32
    %576 = vector.broadcast %cst_91 : f32 to vector<8x128xf32>
    %577 = arith.subf %575, %576 : vector<8x128xf32>
    %578 = arith.select %421, %577, %574 : vector<8x128xi1>, vector<8x128xf32>
    %579 = vector.extract_strided_slice %578 {offsets = [0, 0], sizes = [8, 32], strides = [1, 1]} : vector<8x128xf32> to vector<8x32xf32>
    %580 = vector.extract_strided_slice %578 {offsets = [0, 32], sizes = [8, 32], strides = [1, 1]} : vector<8x128xf32> to vector<8x32xf32>
    %581 = vector.extract_strided_slice %578 {offsets = [0, 64], sizes = [8, 32], strides = [1, 1]} : vector<8x128xf32> to vector<8x32xf32>
    %582 = vector.extract_strided_slice %578 {offsets = [0, 96], sizes = [8, 32], strides = [1, 1]} : vector<8x128xf32> to vector<8x32xf32>
    %583 = arith.mulf %580, %561 : vector<8x32xf32>
    %584 = arith.mulf %579, %581 : vector<8x32xf32>
    %585 = arith.addf %583, %584 : vector<8x32xf32>
    %586 = math.tanh %585 : vector<8x32xf32>
    %587 = arith.mulf %582, %586 : vector<8x32xf32>
    %588 = vector.extract_strided_slice %414 {offsets = [56, 0], sizes = [8, 128], strides = [1, 1]} : vector<64x128xf32> to vector<8x128xf32>
    %589 = arith.truncf %587 : vector<8x32xf32> to vector<8x32xbf16>
    %cst_92 = arith.constant dense<0.000000e+00> : vector<8x128xf32>
    %590 = tpu.matmul %589, %415, %cst_92 {dimension_numbers = #tpu.dot_dimension_numbers<[1], [0], [0], [1], [0, 0, 1, 1], [], []>} : vector<8x32xbf16>, vector<32x128xbf16>, vector<8x128xf32> -> vector<8x128xf32>
    %591 = arith.addf %588, %590 : vector<8x128xf32>
    %592 = arith.addf %591, %591 : vector<8x128xf32>
    %593 = arith.select %421, %592, %591 : vector<8x128xi1>, vector<8x128xf32>
    %594 = arith.negf %593 : vector<8x128xf32>
    %595 = math.exp %594 : vector<8x128xf32>
    %cst_93 = arith.constant 1.000000e+00 : f32
    %596 = vector.broadcast %cst_93 : f32 to vector<8x128xf32>
    %597 = arith.addf %596, %595 : vector<8x128xf32>
    %598 = arith.divf %596, %597 : vector<8x128xf32>
    %599 = arith.addf %598, %598 : vector<8x128xf32>
    %cst_94 = arith.constant 1.000000e+00 : f32
    %600 = vector.broadcast %cst_94 : f32 to vector<8x128xf32>
    %601 = arith.subf %599, %600 : vector<8x128xf32>
    %602 = arith.select %421, %601, %598 : vector<8x128xi1>, vector<8x128xf32>
    %603 = vector.extract_strided_slice %602 {offsets = [0, 0], sizes = [8, 32], strides = [1, 1]} : vector<8x128xf32> to vector<8x32xf32>
    %604 = vector.extract_strided_slice %602 {offsets = [0, 32], sizes = [8, 32], strides = [1, 1]} : vector<8x128xf32> to vector<8x32xf32>
    %605 = vector.extract_strided_slice %602 {offsets = [0, 64], sizes = [8, 32], strides = [1, 1]} : vector<8x128xf32> to vector<8x32xf32>
    %606 = vector.extract_strided_slice %602 {offsets = [0, 96], sizes = [8, 32], strides = [1, 1]} : vector<8x128xf32> to vector<8x32xf32>
    %607 = arith.mulf %604, %585 : vector<8x32xf32>
    %608 = arith.mulf %603, %605 : vector<8x32xf32>
    %609 = arith.addf %607, %608 : vector<8x32xf32>
    %610 = math.tanh %609 : vector<8x32xf32>
    %611 = arith.mulf %606, %610 : vector<8x32xf32>
    %612 = tpu.concatenate %443, %467, %491, %515, %539, %563, %587, %611 in 0 : vector<8x32xf32>, vector<8x32xf32>, vector<8x32xf32>, vector<8x32xf32>, vector<8x32xf32>, vector<8x32xf32>, vector<8x32xf32>, vector<8x32xf32> -> vector<64x32xf32>
    %613 = arith.truncf %612 : vector<64x32xf32> to vector<64x32xbf16>
    %c0_95 = arith.constant 0 : index
    %c0_96 = arith.constant 0 : index
    %614 = vector.load %arg10[%c0_95, %c0_96] : memref<32x128xbf16, #tpu.memory_space<vmem>>, vector<32x128xbf16>
    %cst_97 = arith.constant dense<0.000000e+00> : vector<64x128xf32>
    %615 = tpu.matmul %613, %614, %cst_97 {dimension_numbers = #tpu.dot_dimension_numbers<[1], [0], [0], [1], [0, 0, 1, 1], [], []>} : vector<64x32xbf16>, vector<32x128xbf16>, vector<64x128xf32> -> vector<64x128xf32>
    %c0_98 = arith.constant 0 : index
    %c0_99 = arith.constant 0 : index
    %616 = vector.load %arg12[%c0_98, %c0_99] : memref<1x128xf32, #tpu.memory_space<vmem>>, vector<1x128xf32>
    %617 = vector.broadcast %616 : vector<1x128xf32> to vector<64x128xf32>
    %618 = arith.addf %615, %617 : vector<64x128xf32>
    %c0_100 = arith.constant 0 : index
    %c0_101 = arith.constant 0 : index
    %619 = vector.load %arg11[%c0_100, %c0_101] : memref<32x128xbf16, #tpu.memory_space<vmem>>, vector<32x128xbf16>
    %620 = tpu.iota {dimensions = array<i32: 1>} : vector<8x128xi32>
    %c64_i32_102 = arith.constant 64 : i32
    %621 = vector.broadcast %c64_i32_102 : i32 to vector<8x128xi32>
    %622 = arith.cmpi sge, %620, %621 : vector<8x128xi32>
    %c96_i32_103 = arith.constant 96 : i32
    %623 = vector.broadcast %c96_i32_103 : i32 to vector<8x128xi32>
    %624 = arith.cmpi slt, %620, %623 : vector<8x128xi32>
    %625 = arith.andi %622, %624 : vector<8x128xi1>
    %cst_104 = arith.constant 0.000000e+00 : f32
    %626 = vector.broadcast %cst_104 : f32 to vector<8x32xf32>
    %627 = vector.extract_strided_slice %618 {offsets = [0, 0], sizes = [8, 128], strides = [1, 1]} : vector<64x128xf32> to vector<8x128xf32>
    %628 = arith.addf %627, %627 : vector<8x128xf32>
    %629 = arith.select %625, %628, %627 : vector<8x128xi1>, vector<8x128xf32>
    %630 = arith.negf %629 : vector<8x128xf32>
    %631 = math.exp %630 : vector<8x128xf32>
    %cst_105 = arith.constant 1.000000e+00 : f32
    %632 = vector.broadcast %cst_105 : f32 to vector<8x128xf32>
    %633 = arith.addf %632, %631 : vector<8x128xf32>
    %634 = arith.divf %632, %633 : vector<8x128xf32>
    %635 = arith.addf %634, %634 : vector<8x128xf32>
    %cst_106 = arith.constant 1.000000e+00 : f32
    %636 = vector.broadcast %cst_106 : f32 to vector<8x128xf32>
    %637 = arith.subf %635, %636 : vector<8x128xf32>
    %638 = arith.select %625, %637, %634 : vector<8x128xi1>, vector<8x128xf32>
    %639 = vector.extract_strided_slice %638 {offsets = [0, 0], sizes = [8, 32], strides = [1, 1]} : vector<8x128xf32> to vector<8x32xf32>
    %640 = vector.extract_strided_slice %638 {offsets = [0, 32], sizes = [8, 32], strides = [1, 1]} : vector<8x128xf32> to vector<8x32xf32>
    %641 = vector.extract_strided_slice %638 {offsets = [0, 64], sizes = [8, 32], strides = [1, 1]} : vector<8x128xf32> to vector<8x32xf32>
    %642 = vector.extract_strided_slice %638 {offsets = [0, 96], sizes = [8, 32], strides = [1, 1]} : vector<8x128xf32> to vector<8x32xf32>
    %643 = arith.mulf %640, %626 : vector<8x32xf32>
    %644 = arith.mulf %639, %641 : vector<8x32xf32>
    %645 = arith.addf %643, %644 : vector<8x32xf32>
    %646 = math.tanh %645 : vector<8x32xf32>
    %647 = arith.mulf %642, %646 : vector<8x32xf32>
    %648 = vector.extract_strided_slice %618 {offsets = [8, 0], sizes = [8, 128], strides = [1, 1]} : vector<64x128xf32> to vector<8x128xf32>
    %649 = arith.truncf %647 : vector<8x32xf32> to vector<8x32xbf16>
    %cst_107 = arith.constant dense<0.000000e+00> : vector<8x128xf32>
    %650 = tpu.matmul %649, %619, %cst_107 {dimension_numbers = #tpu.dot_dimension_numbers<[1], [0], [0], [1], [0, 0, 1, 1], [], []>} : vector<8x32xbf16>, vector<32x128xbf16>, vector<8x128xf32> -> vector<8x128xf32>
    %651 = arith.addf %648, %650 : vector<8x128xf32>
    %652 = arith.addf %651, %651 : vector<8x128xf32>
    %653 = arith.select %625, %652, %651 : vector<8x128xi1>, vector<8x128xf32>
    %654 = arith.negf %653 : vector<8x128xf32>
    %655 = math.exp %654 : vector<8x128xf32>
    %cst_108 = arith.constant 1.000000e+00 : f32
    %656 = vector.broadcast %cst_108 : f32 to vector<8x128xf32>
    %657 = arith.addf %656, %655 : vector<8x128xf32>
    %658 = arith.divf %656, %657 : vector<8x128xf32>
    %659 = arith.addf %658, %658 : vector<8x128xf32>
    %cst_109 = arith.constant 1.000000e+00 : f32
    %660 = vector.broadcast %cst_109 : f32 to vector<8x128xf32>
    %661 = arith.subf %659, %660 : vector<8x128xf32>
    %662 = arith.select %625, %661, %658 : vector<8x128xi1>, vector<8x128xf32>
    %663 = vector.extract_strided_slice %662 {offsets = [0, 0], sizes = [8, 32], strides = [1, 1]} : vector<8x128xf32> to vector<8x32xf32>
    %664 = vector.extract_strided_slice %662 {offsets = [0, 32], sizes = [8, 32], strides = [1, 1]} : vector<8x128xf32> to vector<8x32xf32>
    %665 = vector.extract_strided_slice %662 {offsets = [0, 64], sizes = [8, 32], strides = [1, 1]} : vector<8x128xf32> to vector<8x32xf32>
    %666 = vector.extract_strided_slice %662 {offsets = [0, 96], sizes = [8, 32], strides = [1, 1]} : vector<8x128xf32> to vector<8x32xf32>
    %667 = arith.mulf %664, %645 : vector<8x32xf32>
    %668 = arith.mulf %663, %665 : vector<8x32xf32>
    %669 = arith.addf %667, %668 : vector<8x32xf32>
    %670 = math.tanh %669 : vector<8x32xf32>
    %671 = arith.mulf %666, %670 : vector<8x32xf32>
    %672 = vector.extract_strided_slice %618 {offsets = [16, 0], sizes = [8, 128], strides = [1, 1]} : vector<64x128xf32> to vector<8x128xf32>
    %673 = arith.truncf %671 : vector<8x32xf32> to vector<8x32xbf16>
    %cst_110 = arith.constant dense<0.000000e+00> : vector<8x128xf32>
    %674 = tpu.matmul %673, %619, %cst_110 {dimension_numbers = #tpu.dot_dimension_numbers<[1], [0], [0], [1], [0, 0, 1, 1], [], []>} : vector<8x32xbf16>, vector<32x128xbf16>, vector<8x128xf32> -> vector<8x128xf32>
    %675 = arith.addf %672, %674 : vector<8x128xf32>
    %676 = arith.addf %675, %675 : vector<8x128xf32>
    %677 = arith.select %625, %676, %675 : vector<8x128xi1>, vector<8x128xf32>
    %678 = arith.negf %677 : vector<8x128xf32>
    %679 = math.exp %678 : vector<8x128xf32>
    %cst_111 = arith.constant 1.000000e+00 : f32
    %680 = vector.broadcast %cst_111 : f32 to vector<8x128xf32>
    %681 = arith.addf %680, %679 : vector<8x128xf32>
    %682 = arith.divf %680, %681 : vector<8x128xf32>
    %683 = arith.addf %682, %682 : vector<8x128xf32>
    %cst_112 = arith.constant 1.000000e+00 : f32
    %684 = vector.broadcast %cst_112 : f32 to vector<8x128xf32>
    %685 = arith.subf %683, %684 : vector<8x128xf32>
    %686 = arith.select %625, %685, %682 : vector<8x128xi1>, vector<8x128xf32>
    %687 = vector.extract_strided_slice %686 {offsets = [0, 0], sizes = [8, 32], strides = [1, 1]} : vector<8x128xf32> to vector<8x32xf32>
    %688 = vector.extract_strided_slice %686 {offsets = [0, 32], sizes = [8, 32], strides = [1, 1]} : vector<8x128xf32> to vector<8x32xf32>
    %689 = vector.extract_strided_slice %686 {offsets = [0, 64], sizes = [8, 32], strides = [1, 1]} : vector<8x128xf32> to vector<8x32xf32>
    %690 = vector.extract_strided_slice %686 {offsets = [0, 96], sizes = [8, 32], strides = [1, 1]} : vector<8x128xf32> to vector<8x32xf32>
    %691 = arith.mulf %688, %669 : vector<8x32xf32>
    %692 = arith.mulf %687, %689 : vector<8x32xf32>
    %693 = arith.addf %691, %692 : vector<8x32xf32>
    %694 = math.tanh %693 : vector<8x32xf32>
    %695 = arith.mulf %690, %694 : vector<8x32xf32>
    %696 = vector.extract_strided_slice %618 {offsets = [24, 0], sizes = [8, 128], strides = [1, 1]} : vector<64x128xf32> to vector<8x128xf32>
    %697 = arith.truncf %695 : vector<8x32xf32> to vector<8x32xbf16>
    %cst_113 = arith.constant dense<0.000000e+00> : vector<8x128xf32>
    %698 = tpu.matmul %697, %619, %cst_113 {dimension_numbers = #tpu.dot_dimension_numbers<[1], [0], [0], [1], [0, 0, 1, 1], [], []>} : vector<8x32xbf16>, vector<32x128xbf16>, vector<8x128xf32> -> vector<8x128xf32>
    %699 = arith.addf %696, %698 : vector<8x128xf32>
    %700 = arith.addf %699, %699 : vector<8x128xf32>
    %701 = arith.select %625, %700, %699 : vector<8x128xi1>, vector<8x128xf32>
    %702 = arith.negf %701 : vector<8x128xf32>
    %703 = math.exp %702 : vector<8x128xf32>
    %cst_114 = arith.constant 1.000000e+00 : f32
    %704 = vector.broadcast %cst_114 : f32 to vector<8x128xf32>
    %705 = arith.addf %704, %703 : vector<8x128xf32>
    %706 = arith.divf %704, %705 : vector<8x128xf32>
    %707 = arith.addf %706, %706 : vector<8x128xf32>
    %cst_115 = arith.constant 1.000000e+00 : f32
    %708 = vector.broadcast %cst_115 : f32 to vector<8x128xf32>
    %709 = arith.subf %707, %708 : vector<8x128xf32>
    %710 = arith.select %625, %709, %706 : vector<8x128xi1>, vector<8x128xf32>
    %711 = vector.extract_strided_slice %710 {offsets = [0, 0], sizes = [8, 32], strides = [1, 1]} : vector<8x128xf32> to vector<8x32xf32>
    %712 = vector.extract_strided_slice %710 {offsets = [0, 32], sizes = [8, 32], strides = [1, 1]} : vector<8x128xf32> to vector<8x32xf32>
    %713 = vector.extract_strided_slice %710 {offsets = [0, 64], sizes = [8, 32], strides = [1, 1]} : vector<8x128xf32> to vector<8x32xf32>
    %714 = vector.extract_strided_slice %710 {offsets = [0, 96], sizes = [8, 32], strides = [1, 1]} : vector<8x128xf32> to vector<8x32xf32>
    %715 = arith.mulf %712, %693 : vector<8x32xf32>
    %716 = arith.mulf %711, %713 : vector<8x32xf32>
    %717 = arith.addf %715, %716 : vector<8x32xf32>
    %718 = math.tanh %717 : vector<8x32xf32>
    %719 = arith.mulf %714, %718 : vector<8x32xf32>
    %720 = vector.extract_strided_slice %618 {offsets = [32, 0], sizes = [8, 128], strides = [1, 1]} : vector<64x128xf32> to vector<8x128xf32>
    %721 = arith.truncf %719 : vector<8x32xf32> to vector<8x32xbf16>
    %cst_116 = arith.constant dense<0.000000e+00> : vector<8x128xf32>
    %722 = tpu.matmul %721, %619, %cst_116 {dimension_numbers = #tpu.dot_dimension_numbers<[1], [0], [0], [1], [0, 0, 1, 1], [], []>} : vector<8x32xbf16>, vector<32x128xbf16>, vector<8x128xf32> -> vector<8x128xf32>
    %723 = arith.addf %720, %722 : vector<8x128xf32>
    %724 = arith.addf %723, %723 : vector<8x128xf32>
    %725 = arith.select %625, %724, %723 : vector<8x128xi1>, vector<8x128xf32>
    %726 = arith.negf %725 : vector<8x128xf32>
    %727 = math.exp %726 : vector<8x128xf32>
    %cst_117 = arith.constant 1.000000e+00 : f32
    %728 = vector.broadcast %cst_117 : f32 to vector<8x128xf32>
    %729 = arith.addf %728, %727 : vector<8x128xf32>
    %730 = arith.divf %728, %729 : vector<8x128xf32>
    %731 = arith.addf %730, %730 : vector<8x128xf32>
    %cst_118 = arith.constant 1.000000e+00 : f32
    %732 = vector.broadcast %cst_118 : f32 to vector<8x128xf32>
    %733 = arith.subf %731, %732 : vector<8x128xf32>
    %734 = arith.select %625, %733, %730 : vector<8x128xi1>, vector<8x128xf32>
    %735 = vector.extract_strided_slice %734 {offsets = [0, 0], sizes = [8, 32], strides = [1, 1]} : vector<8x128xf32> to vector<8x32xf32>
    %736 = vector.extract_strided_slice %734 {offsets = [0, 32], sizes = [8, 32], strides = [1, 1]} : vector<8x128xf32> to vector<8x32xf32>
    %737 = vector.extract_strided_slice %734 {offsets = [0, 64], sizes = [8, 32], strides = [1, 1]} : vector<8x128xf32> to vector<8x32xf32>
    %738 = vector.extract_strided_slice %734 {offsets = [0, 96], sizes = [8, 32], strides = [1, 1]} : vector<8x128xf32> to vector<8x32xf32>
    %739 = arith.mulf %736, %717 : vector<8x32xf32>
    %740 = arith.mulf %735, %737 : vector<8x32xf32>
    %741 = arith.addf %739, %740 : vector<8x32xf32>
    %742 = math.tanh %741 : vector<8x32xf32>
    %743 = arith.mulf %738, %742 : vector<8x32xf32>
    %744 = vector.extract_strided_slice %618 {offsets = [40, 0], sizes = [8, 128], strides = [1, 1]} : vector<64x128xf32> to vector<8x128xf32>
    %745 = arith.truncf %743 : vector<8x32xf32> to vector<8x32xbf16>
    %cst_119 = arith.constant dense<0.000000e+00> : vector<8x128xf32>
    %746 = tpu.matmul %745, %619, %cst_119 {dimension_numbers = #tpu.dot_dimension_numbers<[1], [0], [0], [1], [0, 0, 1, 1], [], []>} : vector<8x32xbf16>, vector<32x128xbf16>, vector<8x128xf32> -> vector<8x128xf32>
    %747 = arith.addf %744, %746 : vector<8x128xf32>
    %748 = arith.addf %747, %747 : vector<8x128xf32>
    %749 = arith.select %625, %748, %747 : vector<8x128xi1>, vector<8x128xf32>
    %750 = arith.negf %749 : vector<8x128xf32>
    %751 = math.exp %750 : vector<8x128xf32>
    %cst_120 = arith.constant 1.000000e+00 : f32
    %752 = vector.broadcast %cst_120 : f32 to vector<8x128xf32>
    %753 = arith.addf %752, %751 : vector<8x128xf32>
    %754 = arith.divf %752, %753 : vector<8x128xf32>
    %755 = arith.addf %754, %754 : vector<8x128xf32>
    %cst_121 = arith.constant 1.000000e+00 : f32
    %756 = vector.broadcast %cst_121 : f32 to vector<8x128xf32>
    %757 = arith.subf %755, %756 : vector<8x128xf32>
    %758 = arith.select %625, %757, %754 : vector<8x128xi1>, vector<8x128xf32>
    %759 = vector.extract_strided_slice %758 {offsets = [0, 0], sizes = [8, 32], strides = [1, 1]} : vector<8x128xf32> to vector<8x32xf32>
    %760 = vector.extract_strided_slice %758 {offsets = [0, 32], sizes = [8, 32], strides = [1, 1]} : vector<8x128xf32> to vector<8x32xf32>
    %761 = vector.extract_strided_slice %758 {offsets = [0, 64], sizes = [8, 32], strides = [1, 1]} : vector<8x128xf32> to vector<8x32xf32>
    %762 = vector.extract_strided_slice %758 {offsets = [0, 96], sizes = [8, 32], strides = [1, 1]} : vector<8x128xf32> to vector<8x32xf32>
    %763 = arith.mulf %760, %741 : vector<8x32xf32>
    %764 = arith.mulf %759, %761 : vector<8x32xf32>
    %765 = arith.addf %763, %764 : vector<8x32xf32>
    %766 = math.tanh %765 : vector<8x32xf32>
    %767 = arith.mulf %762, %766 : vector<8x32xf32>
    %768 = vector.extract_strided_slice %618 {offsets = [48, 0], sizes = [8, 128], strides = [1, 1]} : vector<64x128xf32> to vector<8x128xf32>
    %769 = arith.truncf %767 : vector<8x32xf32> to vector<8x32xbf16>
    %cst_122 = arith.constant dense<0.000000e+00> : vector<8x128xf32>
    %770 = tpu.matmul %769, %619, %cst_122 {dimension_numbers = #tpu.dot_dimension_numbers<[1], [0], [0], [1], [0, 0, 1, 1], [], []>} : vector<8x32xbf16>, vector<32x128xbf16>, vector<8x128xf32> -> vector<8x128xf32>
    %771 = arith.addf %768, %770 : vector<8x128xf32>
    %772 = arith.addf %771, %771 : vector<8x128xf32>
    %773 = arith.select %625, %772, %771 : vector<8x128xi1>, vector<8x128xf32>
    %774 = arith.negf %773 : vector<8x128xf32>
    %775 = math.exp %774 : vector<8x128xf32>
    %cst_123 = arith.constant 1.000000e+00 : f32
    %776 = vector.broadcast %cst_123 : f32 to vector<8x128xf32>
    %777 = arith.addf %776, %775 : vector<8x128xf32>
    %778 = arith.divf %776, %777 : vector<8x128xf32>
    %779 = arith.addf %778, %778 : vector<8x128xf32>
    %cst_124 = arith.constant 1.000000e+00 : f32
    %780 = vector.broadcast %cst_124 : f32 to vector<8x128xf32>
    %781 = arith.subf %779, %780 : vector<8x128xf32>
    %782 = arith.select %625, %781, %778 : vector<8x128xi1>, vector<8x128xf32>
    %783 = vector.extract_strided_slice %782 {offsets = [0, 0], sizes = [8, 32], strides = [1, 1]} : vector<8x128xf32> to vector<8x32xf32>
    %784 = vector.extract_strided_slice %782 {offsets = [0, 32], sizes = [8, 32], strides = [1, 1]} : vector<8x128xf32> to vector<8x32xf32>
    %785 = vector.extract_strided_slice %782 {offsets = [0, 64], sizes = [8, 32], strides = [1, 1]} : vector<8x128xf32> to vector<8x32xf32>
    %786 = vector.extract_strided_slice %782 {offsets = [0, 96], sizes = [8, 32], strides = [1, 1]} : vector<8x128xf32> to vector<8x32xf32>
    %787 = arith.mulf %784, %765 : vector<8x32xf32>
    %788 = arith.mulf %783, %785 : vector<8x32xf32>
    %789 = arith.addf %787, %788 : vector<8x32xf32>
    %790 = math.tanh %789 : vector<8x32xf32>
    %791 = arith.mulf %786, %790 : vector<8x32xf32>
    %792 = vector.extract_strided_slice %618 {offsets = [56, 0], sizes = [8, 128], strides = [1, 1]} : vector<64x128xf32> to vector<8x128xf32>
    %793 = arith.truncf %791 : vector<8x32xf32> to vector<8x32xbf16>
    %cst_125 = arith.constant dense<0.000000e+00> : vector<8x128xf32>
    %794 = tpu.matmul %793, %619, %cst_125 {dimension_numbers = #tpu.dot_dimension_numbers<[1], [0], [0], [1], [0, 0, 1, 1], [], []>} : vector<8x32xbf16>, vector<32x128xbf16>, vector<8x128xf32> -> vector<8x128xf32>
    %795 = arith.addf %792, %794 : vector<8x128xf32>
    %796 = arith.addf %795, %795 : vector<8x128xf32>
    %797 = arith.select %625, %796, %795 : vector<8x128xi1>, vector<8x128xf32>
    %798 = arith.negf %797 : vector<8x128xf32>
    %799 = math.exp %798 : vector<8x128xf32>
    %cst_126 = arith.constant 1.000000e+00 : f32
    %800 = vector.broadcast %cst_126 : f32 to vector<8x128xf32>
    %801 = arith.addf %800, %799 : vector<8x128xf32>
    %802 = arith.divf %800, %801 : vector<8x128xf32>
    %803 = arith.addf %802, %802 : vector<8x128xf32>
    %cst_127 = arith.constant 1.000000e+00 : f32
    %804 = vector.broadcast %cst_127 : f32 to vector<8x128xf32>
    %805 = arith.subf %803, %804 : vector<8x128xf32>
    %806 = arith.select %625, %805, %802 : vector<8x128xi1>, vector<8x128xf32>
    %807 = vector.extract_strided_slice %806 {offsets = [0, 0], sizes = [8, 32], strides = [1, 1]} : vector<8x128xf32> to vector<8x32xf32>
    %808 = vector.extract_strided_slice %806 {offsets = [0, 32], sizes = [8, 32], strides = [1, 1]} : vector<8x128xf32> to vector<8x32xf32>
    %809 = vector.extract_strided_slice %806 {offsets = [0, 64], sizes = [8, 32], strides = [1, 1]} : vector<8x128xf32> to vector<8x32xf32>
    %810 = vector.extract_strided_slice %806 {offsets = [0, 96], sizes = [8, 32], strides = [1, 1]} : vector<8x128xf32> to vector<8x32xf32>
    %811 = arith.mulf %808, %789 : vector<8x32xf32>
    %812 = arith.mulf %807, %809 : vector<8x32xf32>
    %813 = arith.addf %811, %812 : vector<8x32xf32>
    %814 = math.tanh %813 : vector<8x32xf32>
    %815 = arith.mulf %810, %814 : vector<8x32xf32>
    %816 = tpu.concatenate %647, %671, %695, %719, %743, %767, %791, %815 in 0 : vector<8x32xf32>, vector<8x32xf32>, vector<8x32xf32>, vector<8x32xf32>, vector<8x32xf32>, vector<8x32xf32>, vector<8x32xf32>, vector<8x32xf32> -> vector<64x32xf32>
    %817 = arith.truncf %816 : vector<64x32xf32> to vector<64x32xbf16>
    %c0_128 = arith.constant 0 : index
    %c0_129 = arith.constant 0 : index
    %818 = vector.load %arg13[%c0_128, %c0_129] : memref<32x128xbf16, #tpu.memory_space<vmem>>, vector<32x128xbf16>
    %cst_130 = arith.constant dense<0.000000e+00> : vector<64x128xf32>
    %819 = tpu.matmul %817, %818, %cst_130 {dimension_numbers = #tpu.dot_dimension_numbers<[1], [0], [0], [1], [0, 0, 1, 1], [], []>} : vector<64x32xbf16>, vector<32x128xbf16>, vector<64x128xf32> -> vector<64x128xf32>
    %c0_131 = arith.constant 0 : index
    %c0_132 = arith.constant 0 : index
    %820 = vector.load %arg15[%c0_131, %c0_132] : memref<1x128xf32, #tpu.memory_space<vmem>>, vector<1x128xf32>
    %821 = vector.broadcast %820 : vector<1x128xf32> to vector<64x128xf32>
    %822 = arith.addf %819, %821 : vector<64x128xf32>
    %c0_133 = arith.constant 0 : index
    %c0_134 = arith.constant 0 : index
    %823 = vector.load %arg14[%c0_133, %c0_134] : memref<32x128xbf16, #tpu.memory_space<vmem>>, vector<32x128xbf16>
    %824 = tpu.iota {dimensions = array<i32: 1>} : vector<8x128xi32>
    %c64_i32_135 = arith.constant 64 : i32
    %825 = vector.broadcast %c64_i32_135 : i32 to vector<8x128xi32>
    %826 = arith.cmpi sge, %824, %825 : vector<8x128xi32>
    %c96_i32_136 = arith.constant 96 : i32
    %827 = vector.broadcast %c96_i32_136 : i32 to vector<8x128xi32>
    %828 = arith.cmpi slt, %824, %827 : vector<8x128xi32>
    %829 = arith.andi %826, %828 : vector<8x128xi1>
    %cst_137 = arith.constant 0.000000e+00 : f32
    %830 = vector.broadcast %cst_137 : f32 to vector<8x32xf32>
    %831 = vector.extract_strided_slice %822 {offsets = [0, 0], sizes = [8, 128], strides = [1, 1]} : vector<64x128xf32> to vector<8x128xf32>
    %832 = arith.addf %831, %831 : vector<8x128xf32>
    %833 = arith.select %829, %832, %831 : vector<8x128xi1>, vector<8x128xf32>
    %834 = arith.negf %833 : vector<8x128xf32>
    %835 = math.exp %834 : vector<8x128xf32>
    %cst_138 = arith.constant 1.000000e+00 : f32
    %836 = vector.broadcast %cst_138 : f32 to vector<8x128xf32>
    %837 = arith.addf %836, %835 : vector<8x128xf32>
    %838 = arith.divf %836, %837 : vector<8x128xf32>
    %839 = arith.addf %838, %838 : vector<8x128xf32>
    %cst_139 = arith.constant 1.000000e+00 : f32
    %840 = vector.broadcast %cst_139 : f32 to vector<8x128xf32>
    %841 = arith.subf %839, %840 : vector<8x128xf32>
    %842 = arith.select %829, %841, %838 : vector<8x128xi1>, vector<8x128xf32>
    %843 = vector.extract_strided_slice %842 {offsets = [0, 0], sizes = [8, 32], strides = [1, 1]} : vector<8x128xf32> to vector<8x32xf32>
    %844 = vector.extract_strided_slice %842 {offsets = [0, 32], sizes = [8, 32], strides = [1, 1]} : vector<8x128xf32> to vector<8x32xf32>
    %845 = vector.extract_strided_slice %842 {offsets = [0, 64], sizes = [8, 32], strides = [1, 1]} : vector<8x128xf32> to vector<8x32xf32>
    %846 = vector.extract_strided_slice %842 {offsets = [0, 96], sizes = [8, 32], strides = [1, 1]} : vector<8x128xf32> to vector<8x32xf32>
    %847 = arith.mulf %844, %830 : vector<8x32xf32>
    %848 = arith.mulf %843, %845 : vector<8x32xf32>
    %849 = arith.addf %847, %848 : vector<8x32xf32>
    %850 = math.tanh %849 : vector<8x32xf32>
    %851 = arith.mulf %846, %850 : vector<8x32xf32>
    %852 = vector.extract_strided_slice %822 {offsets = [8, 0], sizes = [8, 128], strides = [1, 1]} : vector<64x128xf32> to vector<8x128xf32>
    %853 = arith.truncf %851 : vector<8x32xf32> to vector<8x32xbf16>
    %cst_140 = arith.constant dense<0.000000e+00> : vector<8x128xf32>
    %854 = tpu.matmul %853, %823, %cst_140 {dimension_numbers = #tpu.dot_dimension_numbers<[1], [0], [0], [1], [0, 0, 1, 1], [], []>} : vector<8x32xbf16>, vector<32x128xbf16>, vector<8x128xf32> -> vector<8x128xf32>
    %855 = arith.addf %852, %854 : vector<8x128xf32>
    %856 = arith.addf %855, %855 : vector<8x128xf32>
    %857 = arith.select %829, %856, %855 : vector<8x128xi1>, vector<8x128xf32>
    %858 = arith.negf %857 : vector<8x128xf32>
    %859 = math.exp %858 : vector<8x128xf32>
    %cst_141 = arith.constant 1.000000e+00 : f32
    %860 = vector.broadcast %cst_141 : f32 to vector<8x128xf32>
    %861 = arith.addf %860, %859 : vector<8x128xf32>
    %862 = arith.divf %860, %861 : vector<8x128xf32>
    %863 = arith.addf %862, %862 : vector<8x128xf32>
    %cst_142 = arith.constant 1.000000e+00 : f32
    %864 = vector.broadcast %cst_142 : f32 to vector<8x128xf32>
    %865 = arith.subf %863, %864 : vector<8x128xf32>
    %866 = arith.select %829, %865, %862 : vector<8x128xi1>, vector<8x128xf32>
    %867 = vector.extract_strided_slice %866 {offsets = [0, 0], sizes = [8, 32], strides = [1, 1]} : vector<8x128xf32> to vector<8x32xf32>
    %868 = vector.extract_strided_slice %866 {offsets = [0, 32], sizes = [8, 32], strides = [1, 1]} : vector<8x128xf32> to vector<8x32xf32>
    %869 = vector.extract_strided_slice %866 {offsets = [0, 64], sizes = [8, 32], strides = [1, 1]} : vector<8x128xf32> to vector<8x32xf32>
    %870 = vector.extract_strided_slice %866 {offsets = [0, 96], sizes = [8, 32], strides = [1, 1]} : vector<8x128xf32> to vector<8x32xf32>
    %871 = arith.mulf %868, %849 : vector<8x32xf32>
    %872 = arith.mulf %867, %869 : vector<8x32xf32>
    %873 = arith.addf %871, %872 : vector<8x32xf32>
    %874 = math.tanh %873 : vector<8x32xf32>
    %875 = arith.mulf %870, %874 : vector<8x32xf32>
    %876 = vector.extract_strided_slice %822 {offsets = [16, 0], sizes = [8, 128], strides = [1, 1]} : vector<64x128xf32> to vector<8x128xf32>
    %877 = arith.truncf %875 : vector<8x32xf32> to vector<8x32xbf16>
    %cst_143 = arith.constant dense<0.000000e+00> : vector<8x128xf32>
    %878 = tpu.matmul %877, %823, %cst_143 {dimension_numbers = #tpu.dot_dimension_numbers<[1], [0], [0], [1], [0, 0, 1, 1], [], []>} : vector<8x32xbf16>, vector<32x128xbf16>, vector<8x128xf32> -> vector<8x128xf32>
    %879 = arith.addf %876, %878 : vector<8x128xf32>
    %880 = arith.addf %879, %879 : vector<8x128xf32>
    %881 = arith.select %829, %880, %879 : vector<8x128xi1>, vector<8x128xf32>
    %882 = arith.negf %881 : vector<8x128xf32>
    %883 = math.exp %882 : vector<8x128xf32>
    %cst_144 = arith.constant 1.000000e+00 : f32
    %884 = vector.broadcast %cst_144 : f32 to vector<8x128xf32>
    %885 = arith.addf %884, %883 : vector<8x128xf32>
    %886 = arith.divf %884, %885 : vector<8x128xf32>
    %887 = arith.addf %886, %886 : vector<8x128xf32>
    %cst_145 = arith.constant 1.000000e+00 : f32
    %888 = vector.broadcast %cst_145 : f32 to vector<8x128xf32>
    %889 = arith.subf %887, %888 : vector<8x128xf32>
    %890 = arith.select %829, %889, %886 : vector<8x128xi1>, vector<8x128xf32>
    %891 = vector.extract_strided_slice %890 {offsets = [0, 0], sizes = [8, 32], strides = [1, 1]} : vector<8x128xf32> to vector<8x32xf32>
    %892 = vector.extract_strided_slice %890 {offsets = [0, 32], sizes = [8, 32], strides = [1, 1]} : vector<8x128xf32> to vector<8x32xf32>
    %893 = vector.extract_strided_slice %890 {offsets = [0, 64], sizes = [8, 32], strides = [1, 1]} : vector<8x128xf32> to vector<8x32xf32>
    %894 = vector.extract_strided_slice %890 {offsets = [0, 96], sizes = [8, 32], strides = [1, 1]} : vector<8x128xf32> to vector<8x32xf32>
    %895 = arith.mulf %892, %873 : vector<8x32xf32>
    %896 = arith.mulf %891, %893 : vector<8x32xf32>
    %897 = arith.addf %895, %896 : vector<8x32xf32>
    %898 = math.tanh %897 : vector<8x32xf32>
    %899 = arith.mulf %894, %898 : vector<8x32xf32>
    %900 = vector.extract_strided_slice %822 {offsets = [24, 0], sizes = [8, 128], strides = [1, 1]} : vector<64x128xf32> to vector<8x128xf32>
    %901 = arith.truncf %899 : vector<8x32xf32> to vector<8x32xbf16>
    %cst_146 = arith.constant dense<0.000000e+00> : vector<8x128xf32>
    %902 = tpu.matmul %901, %823, %cst_146 {dimension_numbers = #tpu.dot_dimension_numbers<[1], [0], [0], [1], [0, 0, 1, 1], [], []>} : vector<8x32xbf16>, vector<32x128xbf16>, vector<8x128xf32> -> vector<8x128xf32>
    %903 = arith.addf %900, %902 : vector<8x128xf32>
    %904 = arith.addf %903, %903 : vector<8x128xf32>
    %905 = arith.select %829, %904, %903 : vector<8x128xi1>, vector<8x128xf32>
    %906 = arith.negf %905 : vector<8x128xf32>
    %907 = math.exp %906 : vector<8x128xf32>
    %cst_147 = arith.constant 1.000000e+00 : f32
    %908 = vector.broadcast %cst_147 : f32 to vector<8x128xf32>
    %909 = arith.addf %908, %907 : vector<8x128xf32>
    %910 = arith.divf %908, %909 : vector<8x128xf32>
    %911 = arith.addf %910, %910 : vector<8x128xf32>
    %cst_148 = arith.constant 1.000000e+00 : f32
    %912 = vector.broadcast %cst_148 : f32 to vector<8x128xf32>
    %913 = arith.subf %911, %912 : vector<8x128xf32>
    %914 = arith.select %829, %913, %910 : vector<8x128xi1>, vector<8x128xf32>
    %915 = vector.extract_strided_slice %914 {offsets = [0, 0], sizes = [8, 32], strides = [1, 1]} : vector<8x128xf32> to vector<8x32xf32>
    %916 = vector.extract_strided_slice %914 {offsets = [0, 32], sizes = [8, 32], strides = [1, 1]} : vector<8x128xf32> to vector<8x32xf32>
    %917 = vector.extract_strided_slice %914 {offsets = [0, 64], sizes = [8, 32], strides = [1, 1]} : vector<8x128xf32> to vector<8x32xf32>
    %918 = vector.extract_strided_slice %914 {offsets = [0, 96], sizes = [8, 32], strides = [1, 1]} : vector<8x128xf32> to vector<8x32xf32>
    %919 = arith.mulf %916, %897 : vector<8x32xf32>
    %920 = arith.mulf %915, %917 : vector<8x32xf32>
    %921 = arith.addf %919, %920 : vector<8x32xf32>
    %922 = math.tanh %921 : vector<8x32xf32>
    %923 = arith.mulf %918, %922 : vector<8x32xf32>
    %924 = vector.extract_strided_slice %822 {offsets = [32, 0], sizes = [8, 128], strides = [1, 1]} : vector<64x128xf32> to vector<8x128xf32>
    %925 = arith.truncf %923 : vector<8x32xf32> to vector<8x32xbf16>
    %cst_149 = arith.constant dense<0.000000e+00> : vector<8x128xf32>
    %926 = tpu.matmul %925, %823, %cst_149 {dimension_numbers = #tpu.dot_dimension_numbers<[1], [0], [0], [1], [0, 0, 1, 1], [], []>} : vector<8x32xbf16>, vector<32x128xbf16>, vector<8x128xf32> -> vector<8x128xf32>
    %927 = arith.addf %924, %926 : vector<8x128xf32>
    %928 = arith.addf %927, %927 : vector<8x128xf32>
    %929 = arith.select %829, %928, %927 : vector<8x128xi1>, vector<8x128xf32>
    %930 = arith.negf %929 : vector<8x128xf32>
    %931 = math.exp %930 : vector<8x128xf32>
    %cst_150 = arith.constant 1.000000e+00 : f32
    %932 = vector.broadcast %cst_150 : f32 to vector<8x128xf32>
    %933 = arith.addf %932, %931 : vector<8x128xf32>
    %934 = arith.divf %932, %933 : vector<8x128xf32>
    %935 = arith.addf %934, %934 : vector<8x128xf32>
    %cst_151 = arith.constant 1.000000e+00 : f32
    %936 = vector.broadcast %cst_151 : f32 to vector<8x128xf32>
    %937 = arith.subf %935, %936 : vector<8x128xf32>
    %938 = arith.select %829, %937, %934 : vector<8x128xi1>, vector<8x128xf32>
    %939 = vector.extract_strided_slice %938 {offsets = [0, 0], sizes = [8, 32], strides = [1, 1]} : vector<8x128xf32> to vector<8x32xf32>
    %940 = vector.extract_strided_slice %938 {offsets = [0, 32], sizes = [8, 32], strides = [1, 1]} : vector<8x128xf32> to vector<8x32xf32>
    %941 = vector.extract_strided_slice %938 {offsets = [0, 64], sizes = [8, 32], strides = [1, 1]} : vector<8x128xf32> to vector<8x32xf32>
    %942 = vector.extract_strided_slice %938 {offsets = [0, 96], sizes = [8, 32], strides = [1, 1]} : vector<8x128xf32> to vector<8x32xf32>
    %943 = arith.mulf %940, %921 : vector<8x32xf32>
    %944 = arith.mulf %939, %941 : vector<8x32xf32>
    %945 = arith.addf %943, %944 : vector<8x32xf32>
    %946 = math.tanh %945 : vector<8x32xf32>
    %947 = arith.mulf %942, %946 : vector<8x32xf32>
    %948 = vector.extract_strided_slice %822 {offsets = [40, 0], sizes = [8, 128], strides = [1, 1]} : vector<64x128xf32> to vector<8x128xf32>
    %949 = arith.truncf %947 : vector<8x32xf32> to vector<8x32xbf16>
    %cst_152 = arith.constant dense<0.000000e+00> : vector<8x128xf32>
    %950 = tpu.matmul %949, %823, %cst_152 {dimension_numbers = #tpu.dot_dimension_numbers<[1], [0], [0], [1], [0, 0, 1, 1], [], []>} : vector<8x32xbf16>, vector<32x128xbf16>, vector<8x128xf32> -> vector<8x128xf32>
    %951 = arith.addf %948, %950 : vector<8x128xf32>
    %952 = arith.addf %951, %951 : vector<8x128xf32>
    %953 = arith.select %829, %952, %951 : vector<8x128xi1>, vector<8x128xf32>
    %954 = arith.negf %953 : vector<8x128xf32>
    %955 = math.exp %954 : vector<8x128xf32>
    %cst_153 = arith.constant 1.000000e+00 : f32
    %956 = vector.broadcast %cst_153 : f32 to vector<8x128xf32>
    %957 = arith.addf %956, %955 : vector<8x128xf32>
    %958 = arith.divf %956, %957 : vector<8x128xf32>
    %959 = arith.addf %958, %958 : vector<8x128xf32>
    %cst_154 = arith.constant 1.000000e+00 : f32
    %960 = vector.broadcast %cst_154 : f32 to vector<8x128xf32>
    %961 = arith.subf %959, %960 : vector<8x128xf32>
    %962 = arith.select %829, %961, %958 : vector<8x128xi1>, vector<8x128xf32>
    %963 = vector.extract_strided_slice %962 {offsets = [0, 0], sizes = [8, 32], strides = [1, 1]} : vector<8x128xf32> to vector<8x32xf32>
    %964 = vector.extract_strided_slice %962 {offsets = [0, 32], sizes = [8, 32], strides = [1, 1]} : vector<8x128xf32> to vector<8x32xf32>
    %965 = vector.extract_strided_slice %962 {offsets = [0, 64], sizes = [8, 32], strides = [1, 1]} : vector<8x128xf32> to vector<8x32xf32>
    %966 = vector.extract_strided_slice %962 {offsets = [0, 96], sizes = [8, 32], strides = [1, 1]} : vector<8x128xf32> to vector<8x32xf32>
    %967 = arith.mulf %964, %945 : vector<8x32xf32>
    %968 = arith.mulf %963, %965 : vector<8x32xf32>
    %969 = arith.addf %967, %968 : vector<8x32xf32>
    %970 = math.tanh %969 : vector<8x32xf32>
    %971 = arith.mulf %966, %970 : vector<8x32xf32>
    %972 = vector.extract_strided_slice %822 {offsets = [48, 0], sizes = [8, 128], strides = [1, 1]} : vector<64x128xf32> to vector<8x128xf32>
    %973 = arith.truncf %971 : vector<8x32xf32> to vector<8x32xbf16>
    %cst_155 = arith.constant dense<0.000000e+00> : vector<8x128xf32>
    %974 = tpu.matmul %973, %823, %cst_155 {dimension_numbers = #tpu.dot_dimension_numbers<[1], [0], [0], [1], [0, 0, 1, 1], [], []>} : vector<8x32xbf16>, vector<32x128xbf16>, vector<8x128xf32> -> vector<8x128xf32>
    %975 = arith.addf %972, %974 : vector<8x128xf32>
    %976 = arith.addf %975, %975 : vector<8x128xf32>
    %977 = arith.select %829, %976, %975 : vector<8x128xi1>, vector<8x128xf32>
    %978 = arith.negf %977 : vector<8x128xf32>
    %979 = math.exp %978 : vector<8x128xf32>
    %cst_156 = arith.constant 1.000000e+00 : f32
    %980 = vector.broadcast %cst_156 : f32 to vector<8x128xf32>
    %981 = arith.addf %980, %979 : vector<8x128xf32>
    %982 = arith.divf %980, %981 : vector<8x128xf32>
    %983 = arith.addf %982, %982 : vector<8x128xf32>
    %cst_157 = arith.constant 1.000000e+00 : f32
    %984 = vector.broadcast %cst_157 : f32 to vector<8x128xf32>
    %985 = arith.subf %983, %984 : vector<8x128xf32>
    %986 = arith.select %829, %985, %982 : vector<8x128xi1>, vector<8x128xf32>
    %987 = vector.extract_strided_slice %986 {offsets = [0, 0], sizes = [8, 32], strides = [1, 1]} : vector<8x128xf32> to vector<8x32xf32>
    %988 = vector.extract_strided_slice %986 {offsets = [0, 32], sizes = [8, 32], strides = [1, 1]} : vector<8x128xf32> to vector<8x32xf32>
    %989 = vector.extract_strided_slice %986 {offsets = [0, 64], sizes = [8, 32], strides = [1, 1]} : vector<8x128xf32> to vector<8x32xf32>
    %990 = vector.extract_strided_slice %986 {offsets = [0, 96], sizes = [8, 32], strides = [1, 1]} : vector<8x128xf32> to vector<8x32xf32>
    %991 = arith.mulf %988, %969 : vector<8x32xf32>
    %992 = arith.mulf %987, %989 : vector<8x32xf32>
    %993 = arith.addf %991, %992 : vector<8x32xf32>
    %994 = math.tanh %993 : vector<8x32xf32>
    %995 = arith.mulf %990, %994 : vector<8x32xf32>
    %996 = vector.extract_strided_slice %822 {offsets = [56, 0], sizes = [8, 128], strides = [1, 1]} : vector<64x128xf32> to vector<8x128xf32>
    %997 = arith.truncf %995 : vector<8x32xf32> to vector<8x32xbf16>
    %cst_158 = arith.constant dense<0.000000e+00> : vector<8x128xf32>
    %998 = tpu.matmul %997, %823, %cst_158 {dimension_numbers = #tpu.dot_dimension_numbers<[1], [0], [0], [1], [0, 0, 1, 1], [], []>} : vector<8x32xbf16>, vector<32x128xbf16>, vector<8x128xf32> -> vector<8x128xf32>
    %999 = arith.addf %996, %998 : vector<8x128xf32>
    %1000 = arith.addf %999, %999 : vector<8x128xf32>
    %1001 = arith.select %829, %1000, %999 : vector<8x128xi1>, vector<8x128xf32>
    %1002 = arith.negf %1001 : vector<8x128xf32>
    %1003 = math.exp %1002 : vector<8x128xf32>
    %cst_159 = arith.constant 1.000000e+00 : f32
    %1004 = vector.broadcast %cst_159 : f32 to vector<8x128xf32>
    %1005 = arith.addf %1004, %1003 : vector<8x128xf32>
    %1006 = arith.divf %1004, %1005 : vector<8x128xf32>
    %1007 = arith.addf %1006, %1006 : vector<8x128xf32>
    %cst_160 = arith.constant 1.000000e+00 : f32
    %1008 = vector.broadcast %cst_160 : f32 to vector<8x128xf32>
    %1009 = arith.subf %1007, %1008 : vector<8x128xf32>
    %1010 = arith.select %829, %1009, %1006 : vector<8x128xi1>, vector<8x128xf32>
    %1011 = vector.extract_strided_slice %1010 {offsets = [0, 0], sizes = [8, 32], strides = [1, 1]} : vector<8x128xf32> to vector<8x32xf32>
    %1012 = vector.extract_strided_slice %1010 {offsets = [0, 32], sizes = [8, 32], strides = [1, 1]} : vector<8x128xf32> to vector<8x32xf32>
    %1013 = vector.extract_strided_slice %1010 {offsets = [0, 64], sizes = [8, 32], strides = [1, 1]} : vector<8x128xf32> to vector<8x32xf32>
    %1014 = vector.extract_strided_slice %1010 {offsets = [0, 96], sizes = [8, 32], strides = [1, 1]} : vector<8x128xf32> to vector<8x32xf32>
    %1015 = arith.mulf %1012, %993 : vector<8x32xf32>
    %1016 = arith.mulf %1011, %1013 : vector<8x32xf32>
    %1017 = arith.addf %1015, %1016 : vector<8x32xf32>
    %1018 = math.tanh %1017 : vector<8x32xf32>
    %1019 = arith.mulf %1014, %1018 : vector<8x32xf32>
    %1020 = arith.truncf %1019 : vector<8x32xf32> to vector<8x32xbf16>
    %c0_161 = arith.constant 0 : index
    %c0_162 = arith.constant 0 : index
    %1021 = vector.load %arg16[%c0_161, %c0_162] : memref<32x128xbf16, #tpu.memory_space<vmem>>, vector<32x128xbf16>
    %cst_163 = arith.constant dense<0.000000e+00> : vector<8x128xf32>
    %1022 = tpu.matmul %1020, %1021, %cst_163 {dimension_numbers = #tpu.dot_dimension_numbers<[1], [0], [0], [1], [0, 0, 1, 1], [], []>} : vector<8x32xbf16>, vector<32x128xbf16>, vector<8x128xf32> -> vector<8x128xf32>
    %c0_164 = arith.constant 0 : index
    %c0_165 = arith.constant 0 : index
    %1023 = vector.load %arg17[%c0_164, %c0_165] : memref<1x128xf32, #tpu.memory_space<vmem>>, vector<1x128xf32>
    %1024 = vector.broadcast %1023 : vector<1x128xf32> to vector<8x128xf32>
    %1025 = arith.addf %1022, %1024 : vector<8x128xf32>
    %cst_166 = arith.constant 0.000000e+00 : f32
    %1026 = vector.broadcast %cst_166 : f32 to vector<8x128xf32>
    %1027 = arith.maximumf %1025, %1026 : vector<8x128xf32>
    %1028 = arith.truncf %1027 : vector<8x128xf32> to vector<8x128xbf16>
    %c0_167 = arith.constant 0 : index
    %c0_168 = arith.constant 0 : index
    %1029 = vector.load %arg18[%c0_167, %c0_168] : memref<128x3xbf16, #tpu.memory_space<vmem>>, vector<128x3xbf16>
    %cst_169 = arith.constant dense<0.000000e+00> : vector<8x3xf32>
    %1030 = tpu.matmul %1028, %1029, %cst_169 {dimension_numbers = #tpu.dot_dimension_numbers<[1], [0], [0], [1], [0, 0, 1, 1], [], []>} : vector<8x128xbf16>, vector<128x3xbf16>, vector<8x3xf32> -> vector<8x3xf32>
    %c0_170 = arith.constant 0 : index
    %c0_171 = arith.constant 0 : index
    %1031 = vector.load %arg19[%c0_170, %c0_171] : memref<1x3xf32, #tpu.memory_space<vmem>>, vector<1x3xf32>
    %1032 = vector.broadcast %1031 : vector<1x3xf32> to vector<8x3xf32>
    %1033 = arith.addf %1030, %1032 : vector<8x3xf32>
    %c0_172 = arith.constant 0 : index
    %c0_173 = arith.constant 0 : index
    %1034 = vector.load %arg20[%c0_172, %c0_173] : memref<8x3xf32, #tpu.memory_space<vmem>>, vector<8x3xf32>
    tpu.vector_store %arg20[%c0_172, %c0_173], %1033 {strides = array<i32>} : memref<8x3xf32, #tpu.memory_space<vmem>>, vector<8x3xf32>,
    return
  }
}

</mosaic_0001>

<llo_original>
// kernel: tpu_custom_call.1
$region0: #{tpu_custom_call.1}
  #allocation0 [shape = 'u32[]', space=smem, size = 0x4, offset = 0x4, fixed_abs, tag = 'smem constant byte address 0x4 - core index']
  #allocation1 [shape = 'u32[144,128]{1,0:T(1,128)}', space=vmem, size = 0x12000, scoped, tag = 'internal scratch']
  %s0 = inlined_call_operand.vmem [shape: f32[8,4], index: 0, kind: input, shape index: {}]
  %s1 = inlined_call_operand.hbm [shape: bf16[4,128], index: 1, kind: input, shape index: {}]
  %s2 = inlined_call_operand.hbm [shape: f32[1,128], index: 2, kind: input, shape index: {}]
  %s3 = inlined_call_operand.hbm [shape: bf16[4,16], index: 3, kind: input, shape index: {}]
  %s4 = inlined_call_operand.hbm [shape: bf16[4,128], index: 4, kind: input, shape index: {}]
  %s5 = inlined_call_operand.vmem [shape: bf16[32,128], index: 5, kind: input, shape index: {}]
  %s6 = inlined_call_operand.hbm [shape: f32[1,128], index: 6, kind: input, shape index: {}]
  %s7 = inlined_call_operand.vmem [shape: bf16[32,128], index: 7, kind: input, shape index: {}]
  %s8 = inlined_call_operand.vmem [shape: bf16[32,128], index: 8, kind: input, shape index: {}]
  %s9 = inlined_call_operand.hbm [shape: f32[1,128], index: 9, kind: input, shape index: {}]
  %s10 = inlined_call_operand.vmem [shape: bf16[32,128], index: 10, kind: input, shape index: {}]
  %s11 = inlined_call_operand.vmem [shape: bf16[32,128], index: 11, kind: input, shape index: {}]
  %s12 = inlined_call_operand.vmem [shape: f32[1,128], index: 12, kind: input, shape index: {}]
  %s13 = inlined_call_operand.vmem [shape: bf16[32,128], index: 13, kind: input, shape index: {}]
  %s14 = inlined_call_operand.vmem [shape: bf16[32,128], index: 14, kind: input, shape index: {}]
  %s15 = inlined_call_operand.vmem [shape: f32[1,128], index: 15, kind: input, shape index: {}]
  %s16 = inlined_call_operand.vmem [shape: bf16[32,128], index: 16, kind: input, shape index: {}]
  %s17 = inlined_call_operand.vmem [shape: f32[1,128], index: 17, kind: input, shape index: {}]
  %s18 = inlined_call_operand.vmem [shape: bf16[128,3], index: 18, kind: input, shape index: {}]
  %s19 = inlined_call_operand.vmem [shape: f32[1,3], index: 19, kind: input, shape index: {}]
  %s20 = inlined_call_operand.vmem [shape: f32[8,3], index: 20, kind: output, shape index: {}]
  %s21 = sld [smem:[#allocation0]]
  $region114: #{tpu_custom_call.1} parent=0
    _
  %s23 = ssub.s32 1, %s21
  %s24 = scalar_select 0, %s23, %s21
  $region1: #{tpu_custom_call.1} parent=0
    #allocation2 [shape = 'u8[1024]{0}', space=vmem, size = 0x400, scoped, tag = 'input window, operand 1, single buffered']
    #allocation3 [shape = 's32[1]{0}', space=sflag, size = 0x4, scoped, tag = 'scoped memory for tpu_custom_call.1']
    #allocation4 [shape = 'u8[512]{0}', space=vmem, size = 0x400, scoped, tag = 'input window, operand 2, single buffered']
    #allocation5 [shape = 's32[1]{0}', space=sflag, size = 0x4, scoped, tag = 'scoped memory for tpu_custom_call.1']
    #allocation6 [shape = 'u8[1024]{0}', space=vmem, size = 0x400, scoped, tag = 'input window, operand 3, single buffered']
    #allocation7 [shape = 'u8[1024]{0}', space=vmem, size = 0x400, scoped, tag = 'input window, operand 4, single buffered']
    #allocation8 [shape = 's32[1]{0}', space=sflag, size = 0x4, scoped, tag = 'scoped memory for tpu_custom_call.1']
    #allocation9 [shape = 'u8[512]{0}', space=vmem, size = 0x400, scoped, tag = 'input window, operand 6, single buffered']
    #allocation10 [shape = 'u8[512]{0}', space=vmem, size = 0x400, scoped, tag = 'input window, operand 9, single buffered']
    #allocation11 [shape = 's32[1]{0}', space=sflag, size = 0x4, scoped, tag = 'scoped memory for tpu_custom_call.1']
    %25 = vsyncpa [#allocation3], 0
    %26 = vsyncpa [#allocation5], 0
    %27 = vsyncpa [#allocation8], 0
    %28 = vsyncpa [#allocation11], 0
    // Predicated region
    $region2: #{tpu_custom_call.1} parent=1 // pred_check
      _
    $region3: #{tpu_custom_call.1} parent=1 // pred_check_branch
      %30 = sbr.rel (0) target = $region5
    $region4: #{tpu_custom_call.1} parent=1 // pred_region
      _
    $region5: #{tpu_custom_call.1} parent=1 // pred_fallthru
      _
    // Predicated region
    $region6: #{tpu_custom_call.1} parent=1 // pred_check
      _
    $region7: #{tpu_custom_call.1} parent=1 // pred_check_branch
      %32 = sbr.rel (0) target = $region9
    $region8: #{tpu_custom_call.1} parent=1 // pred_region
      %s34 = ssub.s32 32, 32
      %35 = vsyncadd [#allocation3], %s34
      %s37 = sshll.u32 [#allocation2], 4
      %s38 = int_to_ptr.vmem [resolvable:$true] %s37
      %40 = dma.hbm_to_vmem [thread:$0]  %s1, 32, %s38, [#allocation3]
    $region9: #{tpu_custom_call.1} parent=1 // pred_fallthru
      _
    // Predicated region
    $region10: #{tpu_custom_call.1} parent=1 // pred_check
      _
    $region11: #{tpu_custom_call.1} parent=1 // pred_check_branch
      %42 = sbr.rel (0) target = $region13
    $region12: #{tpu_custom_call.1} parent=1 // pred_region
      %s44 = ssub.s32 16, 16
      %45 = vsyncadd [#allocation5], %s44
      %s47 = sshll.u32 [#allocation4], 4
      %s48 = int_to_ptr.vmem [resolvable:$true] %s47
      %50 = dma.hbm_to_vmem [thread:$0]  %s2, 16, %s48, [#allocation5]
    $region13: #{tpu_custom_call.1} parent=1 // pred_fallthru
      _
    // Predicated region
    $region14: #{tpu_custom_call.1} parent=1 // pred_check
      _
    $region15: #{tpu_custom_call.1} parent=1 // pred_check_branch
      %52 = sbr.rel (0) target = $region17
    $region16: #{tpu_custom_call.1} parent=1 // pred_region
      %s54 = ssub.s32 32, 32
      %55 = vsyncadd [#allocation5], %s54
      %s57 = sshll.u32 [#allocation6], 4
      %s58 = int_to_ptr.vmem [resolvable:$true] %s57
      %60 = dma.hbm_to_vmem [thread:$0]  %s3, 32, %s58, [#allocation5]
    $region17: #{tpu_custom_call.1} parent=1 // pred_fallthru
      _
    // Predicated region
    $region18: #{tpu_custom_call.1} parent=1 // pred_check
      _
    $region19: #{tpu_custom_call.1} parent=1 // pred_check_branch
      %62 = sbr.rel (0) target = $region21
    $region20: #{tpu_custom_call.1} parent=1 // pred_region
      %s64 = ssub.s32 32, 32
      %65 = vsyncadd [#allocation8], %s64
      %s67 = sshll.u32 [#allocation7], 4
      %s68 = int_to_ptr.vmem [resolvable:$true] %s67
      %70 = dma.hbm_to_vmem [thread:$0]  %s4, 32, %s68, [#allocation8]
    $region21: #{tpu_custom_call.1} parent=1 // pred_fallthru
      _
    // Predicated region
    $region22: #{tpu_custom_call.1} parent=1 // pred_check
      _
    $region23: #{tpu_custom_call.1} parent=1 // pred_check_branch
      %72 = sbr.rel (0) target = $region25
    $region24: #{tpu_custom_call.1} parent=1 // pred_region
      _
    $region25: #{tpu_custom_call.1} parent=1 // pred_fallthru
      _
    // Predicated region
    $region26: #{tpu_custom_call.1} parent=1 // pred_check
      _
    $region27: #{tpu_custom_call.1} parent=1 // pred_check_branch
      %74 = sbr.rel (0) target = $region29
    $region28: #{tpu_custom_call.1} parent=1 // pred_region
      %s76 = ssub.s32 16, 16
      %77 = vsyncadd [#allocation8], %s76
      %s79 = sshll.u32 [#allocation9], 4
      %s80 = int_to_ptr.vmem [resolvable:$true] %s79
      %82 = dma.hbm_to_vmem [thread:$0]  %s6, 16, %s80, [#allocation8]
    $region29: #{tpu_custom_call.1} parent=1 // pred_fallthru
      _
    // Predicated region
    $region30: #{tpu_custom_call.1} parent=1 // pred_check
      _
    $region31: #{tpu_custom_call.1} parent=1 // pred_check_branch
      %84 = sbr.rel (0) target = $region33
    $region32: #{tpu_custom_call.1} parent=1 // pred_region
      _
    $region33: #{tpu_custom_call.1} parent=1 // pred_fallthru
      _
    // Predicated region
    $region34: #{tpu_custom_call.1} parent=1 // pred_check
      _
    $region35: #{tpu_custom_call.1} parent=1 // pred_check_branch
      %86 = sbr.rel (0) target = $region37
    $region36: #{tpu_custom_call.1} parent=1 // pred_region
      _
    $region37: #{tpu_custom_call.1} parent=1 // pred_fallthru
      _
    // Predicated region
    $region38: #{tpu_custom_call.1} parent=1 // pred_check
      _
    $region39: #{tpu_custom_call.1} parent=1 // pred_check_branch
      %88 = sbr.rel (0) target = $region41
    $region40: #{tpu_custom_call.1} parent=1 // pred_region
      %s90 = ssub.s32 16, 16
      %91 = vsyncadd [#allocation11], %s90
      %s93 = sshll.u32 [#allocation10], 4
      %s94 = int_to_ptr.vmem [resolvable:$true] %s93
      %96 = dma.hbm_to_vmem [thread:$0]  %s9, 16, %s94, [#allocation11]
    $region41: #{tpu_custom_call.1} parent=1 // pred_fallthru
      _
    // Predicated region
    $region42: #{tpu_custom_call.1} parent=1 // pred_check
      _
    $region43: #{tpu_custom_call.1} parent=1 // pred_check_branch
      %98 = sbr.rel (0) target = $region45
    $region44: #{tpu_custom_call.1} parent=1 // pred_region
      _
    $region45: #{tpu_custom_call.1} parent=1 // pred_fallthru
      _
    // Predicated region
    $region46: #{tpu_custom_call.1} parent=1 // pred_check
      _
    $region47: #{tpu_custom_call.1} parent=1 // pred_check_branch
      %100 = sbr.rel (0) target = $region49
    $region48: #{tpu_custom_call.1} parent=1 // pred_region
      _
    $region49: #{tpu_custom_call.1} parent=1 // pred_fallthru
      _
    // Predicated region
    $region50: #{tpu_custom_call.1} parent=1 // pred_check
      _
    $region51: #{tpu_custom_call.1} parent=1 // pred_check_branch
      %102 = sbr.rel (0) target = $region53
    $region52: #{tpu_custom_call.1} parent=1 // pred_region
      _
    $region53: #{tpu_custom_call.1} parent=1 // pred_fallthru
      _
    // Predicated region
    $region54: #{tpu_custom_call.1} parent=1 // pred_check
      _
    $region55: #{tpu_custom_call.1} parent=1 // pred_check_branch
      %104 = sbr.rel (0) target = $region57
    $region56: #{tpu_custom_call.1} parent=1 // pred_region
      _
    $region57: #{tpu_custom_call.1} parent=1 // pred_fallthru
      _
    // Predicated region
    $region58: #{tpu_custom_call.1} parent=1 // pred_check
      _
    $region59: #{tpu_custom_call.1} parent=1 // pred_check_branch
      %106 = sbr.rel (0) target = $region61
    $region60: #{tpu_custom_call.1} parent=1 // pred_region
      _
    $region61: #{tpu_custom_call.1} parent=1 // pred_fallthru
      _
    // Predicated region
    $region62: #{tpu_custom_call.1} parent=1 // pred_check
      _
    $region63: #{tpu_custom_call.1} parent=1 // pred_check_branch
      %108 = sbr.rel (0) target = $region65
    $region64: #{tpu_custom_call.1} parent=1 // pred_region
      _
    $region65: #{tpu_custom_call.1} parent=1 // pred_fallthru
      _
    // Predicated region
    $region66: #{tpu_custom_call.1} parent=1 // pred_check
      _
    $region67: #{tpu_custom_call.1} parent=1 // pred_check_branch
      %110 = sbr.rel (0) target = $region69
    $region68: #{tpu_custom_call.1} parent=1 // pred_region
      _
    $region69: #{tpu_custom_call.1} parent=1 // pred_fallthru
      _
    // Predicated region
    $region70: #{tpu_custom_call.1} parent=1 // pred_check
      _
    $region71: #{tpu_custom_call.1} parent=1 // pred_check_branch
      %112 = sbr.rel (0) target = $region73
    $region72: #{tpu_custom_call.1} parent=1 // pred_region
      _
    $region73: #{tpu_custom_call.1} parent=1 // pred_fallthru
      _
    // Predicated region
    $region74: #{tpu_custom_call.1} parent=1 // pred_check
      _
    $region75: #{tpu_custom_call.1} parent=1 // pred_check_branch
      %114 = sbr.rel (0) target = $region77
    $region76: #{tpu_custom_call.1} parent=1 // pred_region
      _
    $region77: #{tpu_custom_call.1} parent=1 // pred_fallthru
      _
    // Predicated region
    $region78: #{tpu_custom_call.1} parent=1 // pred_check
      _
    $region79: #{tpu_custom_call.1} parent=1 // pred_check_branch
      %116 = sbr.rel (0) target = $region81
    $region80: #{tpu_custom_call.1} parent=1 // pred_region
      _
    $region81: #{tpu_custom_call.1} parent=1 // pred_fallthru
      _
    // Predicated region
    $region82: #{tpu_custom_call.1} parent=1 // pred_check
      _
    $region83: #{tpu_custom_call.1} parent=1 // pred_check_branch
      %118 = sbr.rel (0) target = $region85
    $region84: #{tpu_custom_call.1} parent=1 // pred_region
      %119 = dma.done [#allocation3], 32
    $region85: #{tpu_custom_call.1} parent=1 // pred_fallthru
      _
    // Predicated region
    $region86: #{tpu_custom_call.1} parent=1 // pred_check
      _
    $region87: #{tpu_custom_call.1} parent=1 // pred_check_branch
      %121 = sbr.rel (0) target = $region89
    $region88: #{tpu_custom_call.1} parent=1 // pred_region
      %122 = dma.done [#allocation5], 16
    $region89: #{tpu_custom_call.1} parent=1 // pred_fallthru
      _
    // Predicated region
    $region90: #{tpu_custom_call.1} parent=1 // pred_check
      _
    $region91: #{tpu_custom_call.1} parent=1 // pred_check_branch
      %124 = sbr.rel (0) target = $region93
    $region92: #{tpu_custom_call.1} parent=1 // pred_region
      %125 = dma.done [#allocation5], 32
    $region93: #{tpu_custom_call.1} parent=1 // pred_fallthru
      _
    // Predicated region
    $region94: #{tpu_custom_call.1} parent=1 // pred_check
      _
    $region95: #{tpu_custom_call.1} parent=1 // pred_check_branch
      %127 = sbr.rel (0) target = $region97
    $region96: #{tpu_custom_call.1} parent=1 // pred_region
      %128 = dma.done [#allocation8], 32
    $region97: #{tpu_custom_call.1} parent=1 // pred_fallthru
      _
    // Predicated region
    $region98: #{tpu_custom_call.1} parent=1 // pred_check
      _
    $region99: #{tpu_custom_call.1} parent=1 // pred_check_branch
      %130 = sbr.rel (0) target = $region101
    $region100: #{tpu_custom_call.1} parent=1 // pred_region
      %131 = dma.done [#allocation8], 16
    $region101: #{tpu_custom_call.1} parent=1 // pred_fallthru
      _
    // Predicated region
    $region102: #{tpu_custom_call.1} parent=1 // pred_check
      _
    $region103: #{tpu_custom_call.1} parent=1 // pred_check_branch
      %133 = sbr.rel (0) target = $region105
    $region104: #{tpu_custom_call.1} parent=1 // pred_region
      %134 = dma.done [#allocation11], 16
    $region105: #{tpu_custom_call.1} parent=1 // pred_fallthru
      _
    %v136 = vld [vmem:[%s0] sm:$0xff]
    %v137 = vpack.c.bf16 %v136, %v136
    %v138 = vld [vmem:[#allocation2] sm:$0x3]
    %v139 = vld [vmem:[#allocation4] sm:$0x1]
    %v141 = vlaneseq
    %v142 = vshrl.u32 %v141, 7
    %v143 = vsub.s32 0, %v142
    %v144 = vrot.slane %v139, %v143
    %vm146 = vcmask 31744
    %v148 = vsel %vm146, %v137, 0
    %vm150 = vcmask 1041408
    %v152 = vsel %vm150, %v138, 0
    %154 = vmatprep.subr.bf16.mxu0 0
    %155 = vmatpush1.bf16.msra.mxu0 %v152
    %156 = vmatprep.subr.bf16.mxu0 0
    %157 = vmatpush1.bf16.msra.mxu0 0
    %158 = vmatprep.subr.bf16.mxu0 0
    %159 = vmatpush1.bf16.msra.mxu0 0
    %160 = vmatprep.subr.bf16.mxu0 0
    %161 = vmatpush1.bf16.msra.mxu0 0
    %162 = vmatprep.subr.bf16.mxu0 0
    %163 = vmatpush1.bf16.msra.mxu0 0
    %164 = vmatprep.subr.bf16.mxu0 0
    %165 = vmatpush1.bf16.msra.mxu0 0
    %166 = vmatprep.subr.bf16.mxu0 0
    %167 = vmatpush1.bf16.msra.mxu0 0
    %168 = vmatprep.subr.bf16.mxu0 0
    %169 = vmatpush1.bf16.msra.mxu0 0
    %170 = vmatprep.subr.bf16.mxu0 0
    %171 = vmatpush1.bf16.msra.mxu0 0
    %172 = vmatprep.subr.bf16.mxu0 0
    %173 = vmatpush1.bf16.msra.mxu0 0
    %174 = vmatprep.subr.bf16.mxu0 0
    %175 = vmatpush1.bf16.msra.mxu0 0
    %176 = vmatprep.subr.bf16.mxu0 0
    %177 = vmatpush1.bf16.msra.mxu0 0
    %178 = vmatprep.subr.bf16.mxu0 0
    %179 = vmatpush1.bf16.msra.mxu0 0
    %180 = vmatprep.subr.bf16.mxu0 0
    %181 = vmatpush1.bf16.msra.mxu0 0
    %182 = vmatprep.subr.bf16.mxu0 0
    %183 = vmatpush1.bf16.msra.mxu0 0
    %184 = vmatprep.subr.bf16.mxu0 0
    %185 = vmatpush1.bf16.msra.mxu0 0
    %186 = vmatprep.mubr.bf16.mxu0 0
    %187 = vmatmul.mubr.bf16.gmra.mrb[0].mxu0 %v148
    %v188 = vpop.f32.mrb[0].mxu0
    %v189 = vadd.f32 %v144, %v188
    %v190 = vpop.f32.mrb[0].mxu0
    %v191 = vpop.f32.mrb[0].mxu0
    %v192 = vpop.f32.mrb[0].mxu0
    %193 = vdwg.mxu0
    %v194 = vld [vmem:[#allocation6] sm:$0x3]
    %v195 = vlaneseq
    %v196 = vand.u32 %v195, 127
    %vm197 = vcmp.ge.s32.totalorder %v196, 8
    %vm198 = vcmp.lt.s32.totalorder %v196, 12
    %vm199 = vmand %vm197, %vm198
    %v200 = vadd.f32 %v189, %v189
    %v201 = vsel %vm199, %v200, %v189
    %v202 = vxor.u32 %v201, 2147483648
    %v203 = vmul.f32 %v202, 1.442695
    %v204 = vpow.pop %v203
    %v205 = vadd.f32 %v204, 1.0
    %v206 = vrcp.pop %v205
    %v207 = vmul.f32 1.0, %v206
    %v208 = vadd.f32 %v207, %v207
    %v209 = vsub.f32 %v208, 1.0
    %v210 = vsel %vm199, %v209, %v207
    %v211 = vmul.f32 %v210, 0.0
    %213 = vrot.lane.b32.xlu0 %v210, 120
    %v214 = vpop.permute.xlu0 %213
    %v216 = vmul.f32 %v210, %v214
    %218 = vrot.lane.b32.xlu0 %v216, 4
    %v219 = vpop.permute.xlu0 %218
    %v221 = vadd.f32 %v211, %v219
    %v222 = vtanh.pop %v221
    %224 = vrot.lane.b32.xlu0 %v222, 8
    %v225 = vpop.permute.xlu0 %224
    %v227 = vmul.f32 %v210, %v225
    %v228 = vpack.c.bf16 %v227, %v227
    %230 = vrot.lane.b32.xlu0 %v228, 116
    %v231 = vpop.permute.xlu0 %230
    %v233 = vsel %vm146, %v231, 0
    %v236 = vsel %vm150, %v194, 0
    %238 = vmatprep.subr.bf16.mxu0 0
    %239 = vmatpush1.bf16.msra.mxu0 %v236
    %240 = vmatprep.subr.bf16.mxu0 0
    %241 = vmatpush1.bf16.msra.mxu0 0
    %242 = vmatprep.subr.bf16.mxu0 0
    %243 = vmatpush1.bf16.msra.mxu0 0
    %244 = vmatprep.subr.bf16.mxu0 0
    %245 = vmatpush1.bf16.msra.mxu0 0
    %246 = vmatprep.subr.bf16.mxu0 0
    %247 = vmatpush1.bf16.msra.mxu0 0
    %248 = vmatprep.subr.bf16.mxu0 0
    %249 = vmatpush1.bf16.msra.mxu0 0
    %250 = vmatprep.subr.bf16.mxu0 0
    %251 = vmatpush1.bf16.msra.mxu0 0
    %252 = vmatprep.subr.bf16.mxu0 0
    %253 = vmatpush1.bf16.msra.mxu0 0
    %254 = vmatprep.subr.bf16.mxu0 0
    %255 = vmatpush1.bf16.msra.mxu0 0
    %256 = vmatprep.subr.bf16.mxu0 0
    %257 = vmatpush1.bf16.msra.mxu0 0
    %258 = vmatprep.subr.bf16.mxu0 0
    %259 = vmatpush1.bf16.msra.mxu0 0
    %260 = vmatprep.subr.bf16.mxu0 0
    %261 = vmatpush1.bf16.msra.mxu0 0
    %262 = vmatprep.subr.bf16.mxu0 0
    %263 = vmatpush1.bf16.msra.mxu0 0
    %264 = vmatprep.subr.bf16.mxu0 0
    %265 = vmatpush1.bf16.msra.mxu0 0
    %266 = vmatprep.subr.bf16.mxu0 0
    %267 = vmatpush1.bf16.msra.mxu0 0
    %268 = vmatprep.subr.bf16.mxu0 0
    %269 = vmatpush1.bf16.msra.mxu0 0
    %270 = vmatprep.mubr.bf16.mxu0 0
    %271 = vmatmul.mubr.bf16.gmra.mrb[0].mxu0 %v233
    %v272 = vpop.f32.mrb[0].mxu0
    %v273 = vadd.f32 0.0, %v272
    %v274 = vpop.f32.mrb[0].mxu0
    %v275 = vpop.f32.mrb[0].mxu0
    %v276 = vpop.f32.mrb[0].mxu0
    %277 = vdwg.mxu0
    %279 = vrot.lane.b32.xlu0 %v273, 16
    %v280 = vpop.permute.xlu0 %279
    %v282 = vadd.f32 %v189, %v280
    %v283 = vadd.f32 %v282, %v282
    %285 = vrot.lane.b32.xlu0 %v283, 112
    %v286 = vpop.permute.xlu0 %285
    %289 = vrot.lane.b32.xlu0 %v282, 112
    %v290 = vpop.permute.xlu0 %289
    %v292 = vsel %vm199, %v286, %v290
    %v293 = vxor.u32 %v292, 2147483648
    %v294 = vmul.f32 %v293, 1.442695
    %v295 = vpow.pop %v294
    %v296 = vadd.f32 %v295, 1.0
    %v297 = vrcp.pop %v296
    %v298 = vmul.f32 1.0, %v297
    %v299 = vadd.f32 %v298, %v298
    %v300 = vsub.f32 %v299, 1.0
    %v301 = vsel %vm199, %v300, %v298
    %v302 = vmul.f32 %v301, %v221
    %304 = vrot.lane.b32.xlu0 %v301, 120
    %v305 = vpop.permute.xlu0 %304
    %v307 = vmul.f32 %v301, %v305
    %309 = vrot.lane.b32.xlu0 %v307, 4
    %v310 = vpop.permute.xlu0 %309
    %v312 = vadd.f32 %v302, %v310
    %v313 = vtanh.pop %v312
    %315 = vrot.lane.b32.xlu0 %v313, 8
    %v316 = vpop.permute.xlu0 %315
    %v318 = vmul.f32 %v301, %v316
    %v319 = vpack.c.bf16 %v318, %v318
    %321 = vrot.lane.b32.xlu0 %v319, 116
    %v322 = vpop.permute.xlu0 %321
    %v324 = vsel %vm146, %v322, 0
    %326 = vmatprep.subr.bf16.mxu0 0
    %327 = vmatpush1.bf16.msra.mxu0 %v236
    %328 = vmatprep.subr.bf16.mxu0 0
    %329 = vmatpush1.bf16.msra.mxu0 0
    %330 = vmatprep.subr.bf16.mxu0 0
    %331 = vmatpush1.bf16.msra.mxu0 0
    %332 = vmatprep.subr.bf16.mxu0 0
    %333 = vmatpush1.bf16.msra.mxu0 0
    %334 = vmatprep.subr.bf16.mxu0 0
    %335 = vmatpush1.bf16.msra.mxu0 0
    %336 = vmatprep.subr.bf16.mxu0 0
    %337 = vmatpush1.bf16.msra.mxu0 0
    %338 = vmatprep.subr.bf16.mxu0 0
    %339 = vmatpush1.bf16.msra.mxu0 0
    %340 = vmatprep.subr.bf16.mxu0 0
    %341 = vmatpush1.bf16.msra.mxu0 0
    %342 = vmatprep.subr.bf16.mxu0 0
    %343 = vmatpush1.bf16.msra.mxu0 0
    %344 = vmatprep.subr.bf16.mxu0 0
    %345 = vmatpush1.bf16.msra.mxu0 0
    %346 = vmatprep.subr.bf16.mxu0 0
    %347 = vmatpush1.bf16.msra.mxu0 0
    %348 = vmatprep.subr.bf16.mxu0 0
    %349 = vmatpush1.bf16.msra.mxu0 0
    %350 = vmatprep.subr.bf16.mxu0 0
    %351 = vmatpush1.bf16.msra.mxu0 0
    %352 = vmatprep.subr.bf16.mxu0 0
    %353 = vmatpush1.bf16.msra.mxu0 0
    %354 = vmatprep.subr.bf16.mxu0 0
    %355 = vmatpush1.bf16.msra.mxu0 0
    %356 = vmatprep.subr.bf16.mxu0 0
    %357 = vmatpush1.bf16.msra.mxu0 0
    %358 = vmatprep.mubr.bf16.mxu0 0
    %359 = vmatmul.mubr.bf16.gmra.mrb[0].mxu0 %v324
    %v360 = vpop.f32.mrb[0].mxu0
    %v361 = vadd.f32 0.0, %v360
    %v362 = vpop.f32.mrb[0].mxu0
    %v363 = vpop.f32.mrb[0].mxu0
    %v364 = vpop.f32.mrb[0].mxu0
    %365 = vdwg.mxu0
    %367 = vrot.lane.b32.xlu0 %v361, 32
    %v368 = vpop.permute.xlu0 %367
    %v370 = vadd.f32 %v189, %v368
    %v371 = vadd.f32 %v370, %v370
    %373 = vrot.lane.b32.xlu0 %v371, 96
    %v374 = vpop.permute.xlu0 %373
    %377 = vrot.lane.b32.xlu0 %v370, 96
    %v378 = vpop.permute.xlu0 %377
    %v380 = vsel %vm199, %v374, %v378
    %v381 = vxor.u32 %v380, 2147483648
    %v382 = vmul.f32 %v381, 1.442695
    %v383 = vpow.pop %v382
    %v384 = vadd.f32 %v383, 1.0
    %v385 = vrcp.pop %v384
    %v386 = vmul.f32 1.0, %v385
    %v387 = vadd.f32 %v386, %v386
    %v388 = vsub.f32 %v387, 1.0
    %v389 = vsel %vm199, %v388, %v386
    %v390 = vmul.f32 %v389, %v312
    %392 = vrot.lane.b32.xlu0 %v389, 120
    %v393 = vpop.permute.xlu0 %392
    %v395 = vmul.f32 %v389, %v393
    %397 = vrot.lane.b32.xlu0 %v395, 4
    %v398 = vpop.permute.xlu0 %397
    %v400 = vadd.f32 %v390, %v398
    %v401 = vtanh.pop %v400
    %403 = vrot.lane.b32.xlu0 %v401, 8
    %v404 = vpop.permute.xlu0 %403
    %v406 = vmul.f32 %v389, %v404
    %v407 = vpack.c.bf16 %v406, %v406
    %409 = vrot.lane.b32.xlu0 %v407, 116
    %v410 = vpop.permute.xlu0 %409
    %v412 = vsel %vm146, %v410, 0
    %414 = vmatprep.subr.bf16.mxu0 0
    %415 = vmatpush1.bf16.msra.mxu0 %v236
    %416 = vmatprep.subr.bf16.mxu0 0
    %417 = vmatpush1.bf16.msra.mxu0 0
    %418 = vmatprep.subr.bf16.mxu0 0
    %419 = vmatpush1.bf16.msra.mxu0 0
    %420 = vmatprep.subr.bf16.mxu0 0
    %421 = vmatpush1.bf16.msra.mxu0 0
    %422 = vmatprep.subr.bf16.mxu0 0
    %423 = vmatpush1.bf16.msra.mxu0 0
    %424 = vmatprep.subr.bf16.mxu0 0
    %425 = vmatpush1.bf16.msra.mxu0 0
    %426 = vmatprep.subr.bf16.mxu0 0
    %427 = vmatpush1.bf16.msra.mxu0 0
    %428 = vmatprep.subr.bf16.mxu0 0
    %429 = vmatpush1.bf16.msra.mxu0 0
    %430 = vmatprep.subr.bf16.mxu0 0
    %431 = vmatpush1.bf16.msra.mxu0 0
    %432 = vmatprep.subr.bf16.mxu0 0
    %433 = vmatpush1.bf16.msra.mxu0 0
    %434 = vmatprep.subr.bf16.mxu0 0
    %435 = vmatpush1.bf16.msra.mxu0 0
    %436 = vmatprep.subr.bf16.mxu0 0
    %437 = vmatpush1.bf16.msra.mxu0 0
    %438 = vmatprep.subr.bf16.mxu0 0
    %439 = vmatpush1.bf16.msra.mxu0 0
    %440 = vmatprep.subr.bf16.mxu0 0
    %441 = vmatpush1.bf16.msra.mxu0 0
    %442 = vmatprep.subr.bf16.mxu0 0
    %443 = vmatpush1.bf16.msra.mxu0 0
    %444 = vmatprep.subr.bf16.mxu0 0
    %445 = vmatpush1.bf16.msra.mxu0 0
    %446 = vmatprep.mubr.bf16.mxu0 0
    %447 = vmatmul.mubr.bf16.gmra.mrb[0].mxu0 %v412
    %v448 = vpop.f32.mrb[0].mxu0
    %v449 = vadd.f32 0.0, %v448
    %v450 = vpop.f32.mrb[0].mxu0
    %v451 = vpop.f32.mrb[0].mxu0
    %v452 = vpop.f32.mrb[0].mxu0
    %453 = vdwg.mxu0
    %455 = vrot.lane.b32.xlu0 %v449, 48
    %v456 = vpop.permute.xlu0 %455
    %v458 = vadd.f32 %v189, %v456
    %v459 = vadd.f32 %v458, %v458
    %461 = vrot.lane.b32.xlu0 %v459, 80
    %v462 = vpop.permute.xlu0 %461
    %465 = vrot.lane.b32.xlu0 %v458, 80
    %v466 = vpop.permute.xlu0 %465
    %v468 = vsel %vm199, %v462, %v466
    %v469 = vxor.u32 %v468, 2147483648
    %v470 = vmul.f32 %v469, 1.442695
    %v471 = vpow.pop %v470
    %v472 = vadd.f32 %v471, 1.0
    %v473 = vrcp.pop %v472
    %v474 = vmul.f32 1.0, %v473
    %v475 = vadd.f32 %v474, %v474
    %v476 = vsub.f32 %v475, 1.0
    %v477 = vsel %vm199, %v476, %v474
    %v478 = vmul.f32 %v477, %v400
    %480 = vrot.lane.b32.xlu0 %v477, 120
    %v481 = vpop.permute.xlu0 %480
    %v483 = vmul.f32 %v477, %v481
    %485 = vrot.lane.b32.xlu0 %v483, 4
    %v486 = vpop.permute.xlu0 %485
    %v488 = vadd.f32 %v478, %v486
    %v489 = vtanh.pop %v488
    %491 = vrot.lane.b32.xlu0 %v489, 8
    %v492 = vpop.permute.xlu0 %491
    %v494 = vmul.f32 %v477, %v492
    %v495 = vpack.c.bf16 %v494, %v494
    %497 = vrot.lane.b32.xlu0 %v495, 116
    %v498 = vpop.permute.xlu0 %497
    %v500 = vsel %vm146, %v498, 0
    %502 = vmatprep.subr.bf16.mxu0 0
    %503 = vmatpush1.bf16.msra.mxu0 %v236
    %504 = vmatprep.subr.bf16.mxu0 0
    %505 = vmatpush1.bf16.msra.mxu0 0
    %506 = vmatprep.subr.bf16.mxu0 0
    %507 = vmatpush1.bf16.msra.mxu0 0
    %508 = vmatprep.subr.bf16.mxu0 0
    %509 = vmatpush1.bf16.msra.mxu0 0
    %510 = vmatprep.subr.bf16.mxu0 0
    %511 = vmatpush1.bf16.msra.mxu0 0
    %512 = vmatprep.subr.bf16.mxu0 0
    %513 = vmatpush1.bf16.msra.mxu0 0
    %514 = vmatprep.subr.bf16.mxu0 0
    %515 = vmatpush1.bf16.msra.mxu0 0
    %516 = vmatprep.subr.bf16.mxu0 0
    %517 = vmatpush1.bf16.msra.mxu0 0
    %518 = vmatprep.subr.bf16.mxu0 0
    %519 = vmatpush1.bf16.msra.mxu0 0
    %520 = vmatprep.subr.bf16.mxu0 0
    %521 = vmatpush1.bf16.msra.mxu0 0
    %522 = vmatprep.subr.bf16.mxu0 0
    %523 = vmatpush1.bf16.msra.mxu0 0
    %524 = vmatprep.subr.bf16.mxu0 0
    %525 = vmatpush1.bf16.msra.mxu0 0
    %526 = vmatprep.subr.bf16.mxu0 0
    %527 = vmatpush1.bf16.msra.mxu0 0
    %528 = vmatprep.subr.bf16.mxu0 0
    %529 = vmatpush1.bf16.msra.mxu0 0
    %530 = vmatprep.subr.bf16.mxu0 0
    %531 = vmatpush1.bf16.msra.mxu0 0
    %532 = vmatprep.subr.bf16.mxu0 0
    %533 = vmatpush1.bf16.msra.mxu0 0
    %534 = vmatprep.mubr.bf16.mxu0 0
    %535 = vmatmul.mubr.bf16.gmra.mrb[0].mxu0 %v500
    %v536 = vpop.f32.mrb[0].mxu0
    %v537 = vadd.f32 0.0, %v536
    %v538 = vpop.f32.mrb[0].mxu0
    %v539 = vpop.f32.mrb[0].mxu0
    %v540 = vpop.f32.mrb[0].mxu0
    %541 = vdwg.mxu0
    %543 = vrot.lane.b32.xlu0 %v537, 64
    %v544 = vpop.permute.xlu0 %543
    %v546 = vadd.f32 %v189, %v544
    %v547 = vadd.f32 %v546, %v546
    %549 = vrot.lane.b32.xlu0 %v547, 64
    %v550 = vpop.permute.xlu0 %549
    %553 = vrot.lane.b32.xlu0 %v546, 64
    %v554 = vpop.permute.xlu0 %553
    %v556 = vsel %vm199, %v550, %v554
    %v557 = vxor.u32 %v556, 2147483648
    %v558 = vmul.f32 %v557, 1.442695
    %v559 = vpow.pop %v558
    %v560 = vadd.f32 %v559, 1.0
    %v561 = vrcp.pop %v560
    %v562 = vmul.f32 1.0, %v561
    %v563 = vadd.f32 %v562, %v562
    %v564 = vsub.f32 %v563, 1.0
    %v565 = vsel %vm199, %v564, %v562
    %v566 = vmul.f32 %v565, %v488
    %568 = vrot.lane.b32.xlu0 %v565, 120
    %v569 = vpop.permute.xlu0 %568
    %v571 = vmul.f32 %v565, %v569
    %573 = vrot.lane.b32.xlu0 %v571, 4
    %v574 = vpop.permute.xlu0 %573
    %v576 = vadd.f32 %v566, %v574
    %v577 = vtanh.pop %v576
    %579 = vrot.lane.b32.xlu0 %v577, 8
    %v580 = vpop.permute.xlu0 %579
    %v582 = vmul.f32 %v565, %v580
    %v583 = vpack.c.bf16 %v582, %v582
    %585 = vrot.lane.b32.xlu0 %v583, 116
    %v586 = vpop.permute.xlu0 %585
    %v588 = vsel %vm146, %v586, 0
    %590 = vmatprep.subr.bf16.mxu0 0
    %591 = vmatpush1.bf16.msra.mxu0 %v236
    %592 = vmatprep.subr.bf16.mxu0 0
    %593 = vmatpush1.bf16.msra.mxu0 0
    %594 = vmatprep.subr.bf16.mxu0 0
    %595 = vmatpush1.bf16.msra.mxu0 0
    %596 = vmatprep.subr.bf16.mxu0 0
    %597 = vmatpush1.bf16.msra.mxu0 0
    %598 = vmatprep.subr.bf16.mxu0 0
    %599 = vmatpush1.bf16.msra.mxu0 0
    %600 = vmatprep.subr.bf16.mxu0 0
    %601 = vmatpush1.bf16.msra.mxu0 0
    %602 = vmatprep.subr.bf16.mxu0 0
    %603 = vmatpush1.bf16.msra.mxu0 0
    %604 = vmatprep.subr.bf16.mxu0 0
    %605 = vmatpush1.bf16.msra.mxu0 0
    %606 = vmatprep.subr.bf16.mxu0 0
    %607 = vmatpush1.bf16.msra.mxu0 0
    %608 = vmatprep.subr.bf16.mxu0 0
    %609 = vmatpush1.bf16.msra.mxu0 0
    %610 = vmatprep.subr.bf16.mxu0 0
    %611 = vmatpush1.bf16.msra.mxu0 0
    %612 = vmatprep.subr.bf16.mxu0 0
    %613 = vmatpush1.bf16.msra.mxu0 0
    %614 = vmatprep.subr.bf16.mxu0 0
    %615 = vmatpush1.bf16.msra.mxu0 0
    %616 = vmatprep.subr.bf16.mxu0 0
    %617 = vmatpush1.bf16.msra.mxu0 0
    %618 = vmatprep.subr.bf16.mxu0 0
    %619 = vmatpush1.bf16.msra.mxu0 0
    %620 = vmatprep.subr.bf16.mxu0 0
    %621 = vmatpush1.bf16.msra.mxu0 0
    %622 = vmatprep.mubr.bf16.mxu0 0
    %623 = vmatmul.mubr.bf16.gmra.mrb[0].mxu0 %v588
    %v624 = vpop.f32.mrb[0].mxu0
    %v625 = vadd.f32 0.0, %v624
    %v626 = vpop.f32.mrb[0].mxu0
    %v627 = vpop.f32.mrb[0].mxu0
    %v628 = vpop.f32.mrb[0].mxu0
    %629 = vdwg.mxu0
    %631 = vrot.lane.b32.xlu0 %v625, 80
    %v632 = vpop.permute.xlu0 %631
    %v634 = vadd.f32 %v189, %v632
    %v635 = vadd.f32 %v634, %v634
    %637 = vrot.lane.b32.xlu0 %v635, 48
    %v638 = vpop.permute.xlu0 %637
    %641 = vrot.lane.b32.xlu0 %v634, 48
    %v642 = vpop.permute.xlu0 %641
    %v644 = vsel %vm199, %v638, %v642
    %v645 = vxor.u32 %v644, 2147483648
    %v646 = vmul.f32 %v645, 1.442695
    %v647 = vpow.pop %v646
    %v648 = vadd.f32 %v647, 1.0
    %v649 = vrcp.pop %v648
    %v650 = vmul.f32 1.0, %v649
    %v651 = vadd.f32 %v650, %v650
    %v652 = vsub.f32 %v651, 1.0
    %v653 = vsel %vm199, %v652, %v650
    %v654 = vmul.f32 %v653, %v576
    %656 = vrot.lane.b32.xlu0 %v653, 120
    %v657 = vpop.permute.xlu0 %656
    %v659 = vmul.f32 %v653, %v657
    %661 = vrot.lane.b32.xlu0 %v659, 4
    %v662 = vpop.permute.xlu0 %661
    %v664 = vadd.f32 %v654, %v662
    %v665 = vtanh.pop %v664
    %667 = vrot.lane.b32.xlu0 %v665, 8
    %v668 = vpop.permute.xlu0 %667
    %v670 = vmul.f32 %v653, %v668
    %v671 = vpack.c.bf16 %v670, %v670
    %673 = vrot.lane.b32.xlu0 %v671, 116
    %v674 = vpop.permute.xlu0 %673
    %v676 = vsel %vm146, %v674, 0
    %678 = vmatprep.subr.bf16.mxu0 0
    %679 = vmatpush1.bf16.msra.mxu0 %v236
    %680 = vmatprep.subr.bf16.mxu0 0
    %681 = vmatpush1.bf16.msra.mxu0 0
    %682 = vmatprep.subr.bf16.mxu0 0
    %683 = vmatpush1.bf16.msra.mxu0 0
    %684 = vmatprep.subr.bf16.mxu0 0
    %685 = vmatpush1.bf16.msra.mxu0 0
    %686 = vmatprep.subr.bf16.mxu0 0
    %687 = vmatpush1.bf16.msra.mxu0 0
    %688 = vmatprep.subr.bf16.mxu0 0
    %689 = vmatpush1.bf16.msra.mxu0 0
    %690 = vmatprep.subr.bf16.mxu0 0
    %691 = vmatpush1.bf16.msra.mxu0 0
    %692 = vmatprep.subr.bf16.mxu0 0
    %693 = vmatpush1.bf16.msra.mxu0 0
    %694 = vmatprep.subr.bf16.mxu0 0
    %695 = vmatpush1.bf16.msra.mxu0 0
    %696 = vmatprep.subr.bf16.mxu0 0
    %697 = vmatpush1.bf16.msra.mxu0 0
    %698 = vmatprep.subr.bf16.mxu0 0
    %699 = vmatpush1.bf16.msra.mxu0 0
    %700 = vmatprep.subr.bf16.mxu0 0
    %701 = vmatpush1.bf16.msra.mxu0 0
    %702 = vmatprep.subr.bf16.mxu0 0
    %703 = vmatpush1.bf16.msra.mxu0 0
    %704 = vmatprep.subr.bf16.mxu0 0
    %705 = vmatpush1.bf16.msra.mxu0 0
    %706 = vmatprep.subr.bf16.mxu0 0
    %707 = vmatpush1.bf16.msra.mxu0 0
    %708 = vmatprep.subr.bf16.mxu0 0
    %709 = vmatpush1.bf16.msra.mxu0 0
    %710 = vmatprep.mubr.bf16.mxu0 0
    %711 = vmatmul.mubr.bf16.gmra.mrb[0].mxu0 %v676
    %v712 = vpop.f32.mrb[0].mxu0
    %v713 = vadd.f32 0.0, %v712
    %v714 = vpop.f32.mrb[0].mxu0
    %v715 = vpop.f32.mrb[0].mxu0
    %v716 = vpop.f32.mrb[0].mxu0
    %717 = vdwg.mxu0
    %719 = vrot.lane.b32.xlu0 %v713, 96
    %v720 = vpop.permute.xlu0 %719
    %v722 = vadd.f32 %v189, %v720
    %v723 = vadd.f32 %v722, %v722
    %725 = vrot.lane.b32.xlu0 %v723, 32
    %v726 = vpop.permute.xlu0 %725
    %729 = vrot.lane.b32.xlu0 %v722, 32
    %v730 = vpop.permute.xlu0 %729
    %v732 = vsel %vm199, %v726, %v730
    %v733 = vxor.u32 %v732, 2147483648
    %v734 = vmul.f32 %v733, 1.442695
    %v735 = vpow.pop %v734
    %v736 = vadd.f32 %v735, 1.0
    %v737 = vrcp.pop %v736
    %v738 = vmul.f32 1.0, %v737
    %v739 = vadd.f32 %v738, %v738
    %v740 = vsub.f32 %v739, 1.0
    %v741 = vsel %vm199, %v740, %v738
    %v742 = vmul.f32 %v741, %v664
    %744 = vrot.lane.b32.xlu0 %v741, 120
    %v745 = vpop.permute.xlu0 %744
    %v747 = vmul.f32 %v741, %v745
    %749 = vrot.lane.b32.xlu0 %v747, 4
    %v750 = vpop.permute.xlu0 %749
    %v752 = vadd.f32 %v742, %v750
    %v753 = vtanh.pop %v752
    %755 = vrot.lane.b32.xlu0 %v753, 8
    %v756 = vpop.permute.xlu0 %755
    %v758 = vmul.f32 %v741, %v756
    %v759 = vpack.c.bf16 %v758, %v758
    %761 = vrot.lane.b32.xlu0 %v759, 116
    %v762 = vpop.permute.xlu0 %761
    %v764 = vsel %vm146, %v762, 0
    %766 = vmatprep.subr.bf16.mxu0 0
    %767 = vmatpush1.bf16.msra.mxu0 %v236
    %768 = vmatprep.subr.bf16.mxu0 0
    %769 = vmatpush1.bf16.msra.mxu0 0
    %770 = vmatprep.subr.bf16.mxu0 0
    %771 = vmatpush1.bf16.msra.mxu0 0
    %772 = vmatprep.subr.bf16.mxu0 0
    %773 = vmatpush1.bf16.msra.mxu0 0
    %774 = vmatprep.subr.bf16.mxu0 0
    %775 = vmatpush1.bf16.msra.mxu0 0
    %776 = vmatprep.subr.bf16.mxu0 0
    %777 = vmatpush1.bf16.msra.mxu0 0
    %778 = vmatprep.subr.bf16.mxu0 0
    %779 = vmatpush1.bf16.msra.mxu0 0
    %780 = vmatprep.subr.bf16.mxu0 0
    %781 = vmatpush1.bf16.msra.mxu0 0
    %782 = vmatprep.subr.bf16.mxu0 0
    %783 = vmatpush1.bf16.msra.mxu0 0
    %784 = vmatprep.subr.bf16.mxu0 0
    %785 = vmatpush1.bf16.msra.mxu0 0
    %786 = vmatprep.subr.bf16.mxu0 0
    %787 = vmatpush1.bf16.msra.mxu0 0
    %788 = vmatprep.subr.bf16.mxu0 0
    %789 = vmatpush1.bf16.msra.mxu0 0
    %790 = vmatprep.subr.bf16.mxu0 0
    %791 = vmatpush1.bf16.msra.mxu0 0
    %792 = vmatprep.subr.bf16.mxu0 0
    %793 = vmatpush1.bf16.msra.mxu0 0
    %794 = vmatprep.subr.bf16.mxu0 0
    %795 = vmatpush1.bf16.msra.mxu0 0
    %796 = vmatprep.subr.bf16.mxu0 0
    %797 = vmatpush1.bf16.msra.mxu0 0
    %798 = vmatprep.mubr.bf16.mxu0 0
    %799 = vmatmul.mubr.bf16.gmra.mrb[0].mxu0 %v764
    %v800 = vpop.f32.mrb[0].mxu0
    %v801 = vadd.f32 0.0, %v800
    %v802 = vpop.f32.mrb[0].mxu0
    %v803 = vpop.f32.mrb[0].mxu0
    %v804 = vpop.f32.mrb[0].mxu0
    %805 = vdwg.mxu0
    %807 = vrot.lane.b32.xlu0 %v801, 112
    %v808 = vpop.permute.xlu0 %807
    %v810 = vadd.f32 %v189, %v808
    %v811 = vadd.f32 %v810, %v810
    %813 = vrot.lane.b32.xlu0 %v811, 16
    %v814 = vpop.permute.xlu0 %813
    %817 = vrot.lane.b32.xlu0 %v810, 16
    %v818 = vpop.permute.xlu0 %817
    %v820 = vsel %vm199, %v814, %v818
    %v821 = vxor.u32 %v820, 2147483648
    %v822 = vmul.f32 %v821, 1.442695
    %v823 = vpow.pop %v822
    %v824 = vadd.f32 %v823, 1.0
    %v825 = vrcp.pop %v824
    %v826 = vmul.f32 1.0, %v825
    %v827 = vadd.f32 %v826, %v826
    %v828 = vsub.f32 %v827, 1.0
    %v829 = vsel %vm199, %v828, %v826
    %v830 = vmul.f32 %v829, %v752
    %832 = vrot.lane.b32.xlu0 %v829, 120
    %v833 = vpop.permute.xlu0 %832
    %v835 = vmul.f32 %v829, %v833
    %837 = vrot.lane.b32.xlu0 %v835, 4
    %v838 = vpop.permute.xlu0 %837
    %v840 = vadd.f32 %v830, %v838
    %v841 = vtanh.pop %v840
    %843 = vrot.lane.b32.xlu0 %v841, 8
    %v844 = vpop.permute.xlu0 %843
    %v846 = vmul.f32 %v829, %v844
    %v847 = vpack.c.bf16 %v318, %v227
    %v848 = vpack.c.bf16 %v494, %v406
    %v849 = vpack.c.bf16 %v670, %v582
    %v850 = vpack.c.bf16 %v846, %v758
    %v851 = vld [vmem:[#allocation7] sm:$0x3]
    %v852 = vld [vmem:[#allocation9] sm:$0x1]
    %v854 = vlaneseq
    %v855 = vshrl.u32 %v854, 7
    %v856 = vsub.s32 0, %v855
    %v857 = vrot.slane %v852, %v856
    %863 = vrot.lane.b32.xlu0 %v847, 116
    %v864 = vpop.permute.xlu0 %863
    %865 = vrot.lane.b32.xlu0 %v848, 116
    %v866 = vpop.permute.xlu0 %865
    %867 = vrot.lane.b32.xlu0 %v849, 116
    %v868 = vpop.permute.xlu0 %867
    %869 = vrot.lane.b32.xlu0 %v850, 116
    %v870 = vpop.permute.xlu0 %869
    %v872 = vsel %vm146, %v864, 0
    %v875 = vsel %vm146, %v866, 0
    %v878 = vsel %vm146, %v868, 0
    %v881 = vsel %vm146, %v870, 0
    %v884 = vsel %vm150, %v851, 0
    %886 = vmatprep.subr.bf16.mxu0 0
    %887 = vmatpush1.bf16.msra.mxu0 %v884
    %888 = vmatprep.subr.bf16.mxu0 0
    %889 = vmatpush1.bf16.msra.mxu0 0
    %890 = vmatprep.subr.bf16.mxu0 0
    %891 = vmatpush1.bf16.msra.mxu0 0
    %892 = vmatprep.subr.bf16.mxu0 0
    %893 = vmatpush1.bf16.msra.mxu0 0
    %894 = vmatprep.subr.bf16.mxu0 0
    %895 = vmatpush1.bf16.msra.mxu0 0
    %896 = vmatprep.subr.bf16.mxu0 0
    %897 = vmatpush1.bf16.msra.mxu0 0
    %898 = vmatprep.subr.bf16.mxu0 0
    %899 = vmatpush1.bf16.msra.mxu0 0
    %900 = vmatprep.subr.bf16.mxu0 0
    %901 = vmatpush1.bf16.msra.mxu0 0
    %902 = vmatprep.subr.bf16.mxu0 0
    %903 = vmatpush1.bf16.msra.mxu0 0
    %904 = vmatprep.subr.bf16.mxu0 0
    %905 = vmatpush1.bf16.msra.mxu0 0
    %906 = vmatprep.subr.bf16.mxu0 0
    %907 = vmatpush1.bf16.msra.mxu0 0
    %908 = vmatprep.subr.bf16.mxu0 0
    %909 = vmatpush1.bf16.msra.mxu0 0
    %910 = vmatprep.subr.bf16.mxu0 0
    %911 = vmatpush1.bf16.msra.mxu0 0
    %912 = vmatprep.subr.bf16.mxu0 0
    %913 = vmatpush1.bf16.msra.mxu0 0
    %914 = vmatprep.subr.bf16.mxu0 0
    %915 = vmatpush1.bf16.msra.mxu0 0
    %916 = vmatprep.subr.bf16.mxu0 0
    %917 = vmatpush1.bf16.msra.mxu0 0
    %918 = vmatprep.mubr.bf16.mxu0 0
    %919 = vmatmul.mubr.bf16.gmra.mrb[0].mxu0 %v872
    %v920 = vpop.f32.mrb[0].mxu0
    %v921 = vadd.f32 %v857, %v920
    %v922 = vpop.f32.mrb[0].mxu0
    %v923 = vpop.f32.mrb[0].mxu0
    %v924 = vadd.f32 %v857, %v923
    %v925 = vpop.f32.mrb[0].mxu0
    %926 = vmatprep.mubr.bf16.mxu0 0
    %927 = vmatmul.mubr.bf16.gmra.mrb[0].mxu0 %v875
    %v928 = vpop.f32.mrb[0].mxu0
    %v929 = vadd.f32 %v857, %v928
    %v930 = vpop.f32.mrb[0].mxu0
    %v931 = vpop.f32.mrb[0].mxu0
    %v932 = vadd.f32 %v857, %v931
    %v933 = vpop.f32.mrb[0].mxu0
    %934 = vmatprep.mubr.bf16.mxu0 0
    %935 = vmatmul.mubr.bf16.gmra.mrb[0].mxu0 %v878
    %v936 = vpop.f32.mrb[0].mxu0
    %v937 = vadd.f32 %v857, %v936
    %v938 = vpop.f32.mrb[0].mxu0
    %v939 = vpop.f32.mrb[0].mxu0
    %v940 = vadd.f32 %v857, %v939
    %v941 = vpop.f32.mrb[0].mxu0
    %942 = vmatprep.mubr.bf16.mxu0 0
    %943 = vmatmul.mubr.bf16.gmra.mrb[0].mxu0 %v881
    %v944 = vpop.f32.mrb[0].mxu0
    %v945 = vadd.f32 %v857, %v944
    %v946 = vpop.f32.mrb[0].mxu0
    %v947 = vpop.f32.mrb[0].mxu0
    %v948 = vadd.f32 %v857, %v947
    %v949 = vpop.f32.mrb[0].mxu0
    %950 = vdwg.mxu0
    %v951 = vld [vmem:[%s5] sm:$0xf]
    %v952 = vld [vmem:[%s5 + $0x4] sm:$0xf]
    %v953 = vld [vmem:[%s5 + $0x8] sm:$0xf]
    %v954 = vld [vmem:[%s5 + $0xc] sm:$0xf]
    %vm955 = vcmp.ge.s32.totalorder %v196, 64
    %vm956 = vcmp.lt.s32.totalorder %v196, 96
    %vm957 = vmand %vm955, %vm956
    %v958 = vadd.f32 %v921, %v921
    %v959 = vsel %vm957, %v958, %v921
    %v960 = vxor.u32 %v959, 2147483648
    %v961 = vmul.f32 %v960, 1.442695
    %v962 = vpow.pop %v961
    %v963 = vadd.f32 %v962, 1.0
    %v964 = vrcp.pop %v963
    %v965 = vmul.f32 1.0, %v964
    %v966 = vadd.f32 %v965, %v965
    %v967 = vsub.f32 %v966, 1.0
    %v968 = vsel %vm957, %v967, %v965
    %v969 = vmul.f32 %v968, 0.0
    %971 = vrot.lane.b32.xlu0 %v968, 64
    %v972 = vpop.permute.xlu0 %971
    %v974 = vmul.f32 %v968, %v972
    %976 = vrot.lane.b32.xlu0 %v974, 32
    %v977 = vpop.permute.xlu0 %976
    %v979 = vadd.f32 %v969, %v977
    %v980 = vtanh.pop %v979
    %982 = vrot.lane.b32.xlu0 %v980, 64
    %v983 = vpop.permute.xlu0 %982
    %v985 = vmul.f32 %v968, %v983
    %v986 = vpack.c.bf16 %v985, %v985
    %988 = vrot.lane.b32.xlu0 %v986, 32
    %v989 = vpop.permute.xlu0 %988
    %v994 = vunpack.c.l.b16 %v951
    %v995 = vunpack.c.l.b16 %v952
    %v996 = vunpack.c.l.b16 %v953
    %v997 = vunpack.c.l.b16 %v954
    %v998 = vpack.c.b16 %v995, %v994
    %v999 = vpack.c.b16 %v997, %v996
    %vm1002 = vcmask 261120
    %v1004 = vsel %vm1002, %v989, 0
    %1006 = vmatprep.subr.bf16.mxu0 0
    %1007 = vmatpush1.bf16.msra.mxu0 %v998
    %1008 = vmatprep.subr.bf16.mxu0 0
    %1009 = vmatpush1.bf16.msra.mxu0 %v999
    %1010 = vmatprep.subr.bf16.mxu0 0
    %1011 = vmatpush1.bf16.msra.mxu0 0
    %1012 = vmatprep.subr.bf16.mxu0 0
    %1013 = vmatpush1.bf16.msra.mxu0 0
    %1014 = vmatprep.subr.bf16.mxu0 0
    %1015 = vmatpush1.bf16.msra.mxu0 0
    %1016 = vmatprep.subr.bf16.mxu0 0
    %1017 = vmatpush1.bf16.msra.mxu0 0
    %1018 = vmatprep.subr.bf16.mxu0 0
    %1019 = vmatpush1.bf16.msra.mxu0 0
    %1020 = vmatprep.subr.bf16.mxu0 0
    %1021 = vmatpush1.bf16.msra.mxu0 0
    %1022 = vmatprep.subr.bf16.mxu0 0
    %1023 = vmatpush1.bf16.msra.mxu0 0
    %1024 = vmatprep.subr.bf16.mxu0 0
    %1025 = vmatpush1.bf16.msra.mxu0 0
    %1026 = vmatprep.subr.bf16.mxu0 0
    %1027 = vmatpush1.bf16.msra.mxu0 0
    %1028 = vmatprep.subr.bf16.mxu0 0
    %1029 = vmatpush1.bf16.msra.mxu0 0
    %1030 = vmatprep.subr.bf16.mxu0 0
    %1031 = vmatpush1.bf16.msra.mxu0 0
    %1032 = vmatprep.subr.bf16.mxu0 0
    %1033 = vmatpush1.bf16.msra.mxu0 0
    %1034 = vmatprep.subr.bf16.mxu0 0
    %1035 = vmatpush1.bf16.msra.mxu0 0
    %1036 = vmatprep.subr.bf16.mxu0 0
    %1037 = vmatpush1.bf16.msra.mxu0 0
    %1038 = vmatprep.mubr.bf16.mxu0 0
    %1039 = vmatmul.mubr.bf16.gmra.mrb[0].mxu0 %v1004
    %v1040 = vpop.f32.mrb[0].mxu0
    %v1041 = vadd.f32 0.0, %v1040
    %v1042 = vpop.f32.mrb[0].mxu0
    %v1043 = vpop.f32.mrb[0].mxu0
    %v1044 = vpop.f32.mrb[0].mxu0
    %1045 = vdwg.mxu0
    %v1046 = vadd.f32 %v924, %v1041
    %v1047 = vadd.f32 %v1046, %v1046
    %v1048 = vsel %vm957, %v1047, %v1046
    %v1049 = vxor.u32 %v1048, 2147483648
    %v1050 = vmul.f32 %v1049, 1.442695
    %v1051 = vpow.pop %v1050
    %v1052 = vadd.f32 %v1051, 1.0
    %v1053 = vrcp.pop %v1052
    %v1054 = vmul.f32 1.0, %v1053
    %v1055 = vadd.f32 %v1054, %v1054
    %v1056 = vsub.f32 %v1055, 1.0
    %v1057 = vsel %vm957, %v1056, %v1054
    %v1058 = vmul.f32 %v1057, %v979
    %1060 = vrot.lane.b32.xlu0 %v1057, 64
    %v1061 = vpop.permute.xlu0 %1060
    %v1063 = vmul.f32 %v1057, %v1061
    %1065 = vrot.lane.b32.xlu0 %v1063, 32
    %v1066 = vpop.permute.xlu0 %1065
    %v1068 = vadd.f32 %v1058, %v1066
    %v1069 = vtanh.pop %v1068
    %1071 = vrot.lane.b32.xlu0 %v1069, 64
    %v1072 = vpop.permute.xlu0 %1071
    %v1074 = vmul.f32 %v1057, %v1072
    %v1075 = vpack.c.bf16 %v1074, %v1074
    %1077 = vrot.lane.b32.xlu0 %v1075, 32
    %v1078 = vpop.permute.xlu0 %1077
    %v1080 = vsel %vm1002, %v1078, 0
    %1082 = vmatprep.subr.bf16.mxu0 0
    %1083 = vmatpush1.bf16.msra.mxu0 %v998
    %1084 = vmatprep.subr.bf16.mxu0 0
    %1085 = vmatpush1.bf16.msra.mxu0 %v999
    %1086 = vmatprep.subr.bf16.mxu0 0
    %1087 = vmatpush1.bf16.msra.mxu0 0
    %1088 = vmatprep.subr.bf16.mxu0 0
    %1089 = vmatpush1.bf16.msra.mxu0 0
    %1090 = vmatprep.subr.bf16.mxu0 0
    %1091 = vmatpush1.bf16.msra.mxu0 0
    %1092 = vmatprep.subr.bf16.mxu0 0
    %1093 = vmatpush1.bf16.msra.mxu0 0
    %1094 = vmatprep.subr.bf16.mxu0 0
    %1095 = vmatpush1.bf16.msra.mxu0 0
    %1096 = vmatprep.subr.bf16.mxu0 0
    %1097 = vmatpush1.bf16.msra.mxu0 0
    %1098 = vmatprep.subr.bf16.mxu0 0
    %1099 = vmatpush1.bf16.msra.mxu0 0
    %1100 = vmatprep.subr.bf16.mxu0 0
    %1101 = vmatpush1.bf16.msra.mxu0 0
    %1102 = vmatprep.subr.bf16.mxu0 0
    %1103 = vmatpush1.bf16.msra.mxu0 0
    %1104 = vmatprep.subr.bf16.mxu0 0
    %1105 = vmatpush1.bf16.msra.mxu0 0
    %1106 = vmatprep.subr.bf16.mxu0 0
    %1107 = vmatpush1.bf16.msra.mxu0 0
    %1108 = vmatprep.subr.bf16.mxu0 0
    %1109 = vmatpush1.bf16.msra.mxu0 0
    %1110 = vmatprep.subr.bf16.mxu0 0
    %1111 = vmatpush1.bf16.msra.mxu0 0
    %1112 = vmatprep.subr.bf16.mxu0 0
    %1113 = vmatpush1.bf16.msra.mxu0 0
    %1114 = vmatprep.mubr.bf16.mxu0 0
    %1115 = vmatmul.mubr.bf16.gmra.mrb[0].mxu0 %v1080
    %v1116 = vpop.f32.mrb[0].mxu0
    %v1117 = vadd.f32 0.0, %v1116
    %v1118 = vpop.f32.mrb[0].mxu0
    %v1119 = vpop.f32.mrb[0].mxu0
    %v1120 = vpop.f32.mrb[0].mxu0
    %1121 = vdwg.mxu0
    %v1122 = vadd.f32 %v929, %v1117
    %v1123 = vadd.f32 %v1122, %v1122
    %v1124 = vsel %vm957, %v1123, %v1122
    %v1125 = vxor.u32 %v1124, 2147483648
    %v1126 = vmul.f32 %v1125, 1.442695
    %v1127 = vpow.pop %v1126
    %v1128 = vadd.f32 %v1127, 1.0
    %v1129 = vrcp.pop %v1128
    %v1130 = vmul.f32 1.0, %v1129
    %v1131 = vadd.f32 %v1130, %v1130
    %v1132 = vsub.f32 %v1131, 1.0
    %v1133 = vsel %vm957, %v1132, %v1130
    %v1134 = vmul.f32 %v1133, %v1068
    %1136 = vrot.lane.b32.xlu0 %v1133, 64
    %v1137 = vpop.permute.xlu0 %1136
    %v1139 = vmul.f32 %v1133, %v1137
    %1141 = vrot.lane.b32.xlu0 %v1139, 32
    %v1142 = vpop.permute.xlu0 %1141
    %v1144 = vadd.f32 %v1134, %v1142
    %v1145 = vtanh.pop %v1144
    %1147 = vrot.lane.b32.xlu0 %v1145, 64
    %v1148 = vpop.permute.xlu0 %1147
    %v1150 = vmul.f32 %v1133, %v1148
    %v1151 = vpack.c.bf16 %v1150, %v1150
    %1153 = vrot.lane.b32.xlu0 %v1151, 32
    %v1154 = vpop.permute.xlu0 %1153
    %v1156 = vsel %vm1002, %v1154, 0
    %1158 = vmatprep.subr.bf16.mxu0 0
    %1159 = vmatpush1.bf16.msra.mxu0 %v998
    %1160 = vmatprep.subr.bf16.mxu0 0
    %1161 = vmatpush1.bf16.msra.mxu0 %v999
    %1162 = vmatprep.subr.bf16.mxu0 0
    %1163 = vmatpush1.bf16.msra.mxu0 0
    %1164 = vmatprep.subr.bf16.mxu0 0
    %1165 = vmatpush1.bf16.msra.mxu0 0
    %1166 = vmatprep.subr.bf16.mxu0 0
    %1167 = vmatpush1.bf16.msra.mxu0 0
    %1168 = vmatprep.subr.bf16.mxu0 0
    %1169 = vmatpush1.bf16.msra.mxu0 0
    %1170 = vmatprep.subr.bf16.mxu0 0
    %1171 = vmatpush1.bf16.msra.mxu0 0
    %1172 = vmatprep.subr.bf16.mxu0 0
    %1173 = vmatpush1.bf16.msra.mxu0 0
    %1174 = vmatprep.subr.bf16.mxu0 0
    %1175 = vmatpush1.bf16.msra.mxu0 0
    %1176 = vmatprep.subr.bf16.mxu0 0
    %1177 = vmatpush1.bf16.msra.mxu0 0
    %1178 = vmatprep.subr.bf16.mxu0 0
    %1179 = vmatpush1.bf16.msra.mxu0 0
    %1180 = vmatprep.subr.bf16.mxu0 0
    %1181 = vmatpush1.bf16.msra.mxu0 0
    %1182 = vmatprep.subr.bf16.mxu0 0
    %1183 = vmatpush1.bf16.msra.mxu0 0
    %1184 = vmatprep.subr.bf16.mxu0 0
    %1185 = vmatpush1.bf16.msra.mxu0 0
    %1186 = vmatprep.subr.bf16.mxu0 0
    %1187 = vmatpush1.bf16.msra.mxu0 0
    %1188 = vmatprep.subr.bf16.mxu0 0
    %1189 = vmatpush1.bf16.msra.mxu0 0
    %1190 = vmatprep.mubr.bf16.mxu0 0
    %1191 = vmatmul.mubr.bf16.gmra.mrb[0].mxu0 %v1156
    %v1192 = vpop.f32.mrb[0].mxu0
    %v1193 = vadd.f32 0.0, %v1192
    %v1194 = vpop.f32.mrb[0].mxu0
    %v1195 = vpop.f32.mrb[0].mxu0
    %v1196 = vpop.f32.mrb[0].mxu0
    %1197 = vdwg.mxu0
    %v1198 = vadd.f32 %v932, %v1193
    %v1199 = vadd.f32 %v1198, %v1198
    %v1200 = vsel %vm957, %v1199, %v1198
    %v1201 = vxor.u32 %v1200, 2147483648
    %v1202 = vmul.f32 %v1201, 1.442695
    %v1203 = vpow.pop %v1202
    %v1204 = vadd.f32 %v1203, 1.0
    %v1205 = vrcp.pop %v1204
    %v1206 = vmul.f32 1.0, %v1205
    %v1207 = vadd.f32 %v1206, %v1206
    %v1208 = vsub.f32 %v1207, 1.0
    %v1209 = vsel %vm957, %v1208, %v1206
    %v1210 = vmul.f32 %v1209, %v1144
    %1212 = vrot.lane.b32.xlu0 %v1209, 64
    %v1213 = vpop.permute.xlu0 %1212
    %v1215 = vmul.f32 %v1209, %v1213
    %1217 = vrot.lane.b32.xlu0 %v1215, 32
    %v1218 = vpop.permute.xlu0 %1217
    %v1220 = vadd.f32 %v1210, %v1218
    %v1221 = vtanh.pop %v1220
    %1223 = vrot.lane.b32.xlu0 %v1221, 64
    %v1224 = vpop.permute.xlu0 %1223
    %v1226 = vmul.f32 %v1209, %v1224
    %v1227 = vpack.c.bf16 %v1226, %v1226
    %1229 = vrot.lane.b32.xlu0 %v1227, 32
    %v1230 = vpop.permute.xlu0 %1229
    %v1232 = vsel %vm1002, %v1230, 0
    %1234 = vmatprep.subr.bf16.mxu0 0
    %1235 = vmatpush1.bf16.msra.mxu0 %v998
    %1236 = vmatprep.subr.bf16.mxu0 0
    %1237 = vmatpush1.bf16.msra.mxu0 %v999
    %1238 = vmatprep.subr.bf16.mxu0 0
    %1239 = vmatpush1.bf16.msra.mxu0 0
    %1240 = vmatprep.subr.bf16.mxu0 0
    %1241 = vmatpush1.bf16.msra.mxu0 0
    %1242 = vmatprep.subr.bf16.mxu0 0
    %1243 = vmatpush1.bf16.msra.mxu0 0
    %1244 = vmatprep.subr.bf16.mxu0 0
    %1245 = vmatpush1.bf16.msra.mxu0 0
    %1246 = vmatprep.subr.bf16.mxu0 0
    %1247 = vmatpush1.bf16.msra.mxu0 0
    %1248 = vmatprep.subr.bf16.mxu0 0
    %1249 = vmatpush1.bf16.msra.mxu0 0
    %1250 = vmatprep.subr.bf16.mxu0 0
    %1251 = vmatpush1.bf16.msra.mxu0 0
    %1252 = vmatprep.subr.bf16.mxu0 0
    %1253 = vmatpush1.bf16.msra.mxu0 0
    %1254 = vmatprep.subr.bf16.mxu0 0
    %1255 = vmatpush1.bf16.msra.mxu0 0
    %1256 = vmatprep.subr.bf16.mxu0 0
    %1257 = vmatpush1.bf16.msra.mxu0 0
    %1258 = vmatprep.subr.bf16.mxu0 0
    %1259 = vmatpush1.bf16.msra.mxu0 0
    %1260 = vmatprep.subr.bf16.mxu0 0
    %1261 = vmatpush1.bf16.msra.mxu0 0
    %1262 = vmatprep.subr.bf16.mxu0 0
    %1263 = vmatpush1.bf16.msra.mxu0 0
    %1264 = vmatprep.subr.bf16.mxu0 0
    %1265 = vmatpush1.bf16.msra.mxu0 0
    %1266 = vmatprep.mubr.bf16.mxu0 0
    %1267 = vmatmul.mubr.bf16.gmra.mrb[0].mxu0 %v1232
    %v1268 = vpop.f32.mrb[0].mxu0
    %v1269 = vadd.f32 0.0, %v1268
    %v1270 = vpop.f32.mrb[0].mxu0
    %v1271 = vpop.f32.mrb[0].mxu0
    %v1272 = vpop.f32.mrb[0].mxu0
    %1273 = vdwg.mxu0
    %v1274 = vadd.f32 %v937, %v1269
    %v1275 = vadd.f32 %v1274, %v1274
    %v1276 = vsel %vm957, %v1275, %v1274
    %v1277 = vxor.u32 %v1276, 2147483648
    %v1278 = vmul.f32 %v1277, 1.442695
    %v1279 = vpow.pop %v1278
    %v1280 = vadd.f32 %v1279, 1.0
    %v1281 = vrcp.pop %v1280
    %v1282 = vmul.f32 1.0, %v1281
    %v1283 = vadd.f32 %v1282, %v1282
    %v1284 = vsub.f32 %v1283, 1.0
    %v1285 = vsel %vm957, %v1284, %v1282
    %v1286 = vmul.f32 %v1285, %v1220
    %1288 = vrot.lane.b32.xlu0 %v1285, 64
    %v1289 = vpop.permute.xlu0 %1288
    %v1291 = vmul.f32 %v1285, %v1289
    %1293 = vrot.lane.b32.xlu0 %v1291, 32
    %v1294 = vpop.permute.xlu0 %1293
    %v1296 = vadd.f32 %v1286, %v1294
    %v1297 = vtanh.pop %v1296
    %1299 = vrot.lane.b32.xlu0 %v1297, 64
    %v1300 = vpop.permute.xlu0 %1299
    %v1302 = vmul.f32 %v1285, %v1300
    %v1303 = vpack.c.bf16 %v1302, %v1302
    %1305 = vrot.lane.b32.xlu0 %v1303, 32
    %v1306 = vpop.permute.xlu0 %1305
    %v1308 = vsel %vm1002, %v1306, 0
    %1310 = vmatprep.subr.bf16.mxu0 0
    %1311 = vmatpush1.bf16.msra.mxu0 %v998
    %1312 = vmatprep.subr.bf16.mxu0 0
    %1313 = vmatpush1.bf16.msra.mxu0 %v999
    %1314 = vmatprep.subr.bf16.mxu0 0
    %1315 = vmatpush1.bf16.msra.mxu0 0
    %1316 = vmatprep.subr.bf16.mxu0 0
    %1317 = vmatpush1.bf16.msra.mxu0 0
    %1318 = vmatprep.subr.bf16.mxu0 0
    %1319 = vmatpush1.bf16.msra.mxu0 0
    %1320 = vmatprep.subr.bf16.mxu0 0
    %1321 = vmatpush1.bf16.msra.mxu0 0
    %1322 = vmatprep.subr.bf16.mxu0 0
    %1323 = vmatpush1.bf16.msra.mxu0 0
    %1324 = vmatprep.subr.bf16.mxu0 0
    %1325 = vmatpush1.bf16.msra.mxu0 0
    %1326 = vmatprep.subr.bf16.mxu0 0
    %1327 = vmatpush1.bf16.msra.mxu0 0
    %1328 = vmatprep.subr.bf16.mxu0 0
    %1329 = vmatpush1.bf16.msra.mxu0 0
    %1330 = vmatprep.subr.bf16.mxu0 0
    %1331 = vmatpush1.bf16.msra.mxu0 0
    %1332 = vmatprep.subr.bf16.mxu0 0
    %1333 = vmatpush1.bf16.msra.mxu0 0
    %1334 = vmatprep.subr.bf16.mxu0 0
    %1335 = vmatpush1.bf16.msra.mxu0 0
    %1336 = vmatprep.subr.bf16.mxu0 0
    %1337 = vmatpush1.bf16.msra.mxu0 0
    %1338 = vmatprep.subr.bf16.mxu0 0
    %1339 = vmatpush1.bf16.msra.mxu0 0
    %1340 = vmatprep.subr.bf16.mxu0 0
    %1341 = vmatpush1.bf16.msra.mxu0 0
    %1342 = vmatprep.mubr.bf16.mxu0 0
    %1343 = vmatmul.mubr.bf16.gmra.mrb[0].mxu0 %v1308
    %v1344 = vpop.f32.mrb[0].mxu0
    %v1345 = vadd.f32 0.0, %v1344
    %v1346 = vpop.f32.mrb[0].mxu0
    %v1347 = vpop.f32.mrb[0].mxu0
    %v1348 = vpop.f32.mrb[0].mxu0
    %1349 = vdwg.mxu0
    %v1350 = vadd.f32 %v940, %v1345
    %v1351 = vadd.f32 %v1350, %v1350
    %v1352 = vsel %vm957, %v1351, %v1350
    %v1353 = vxor.u32 %v1352, 2147483648
    %v1354 = vmul.f32 %v1353, 1.442695
    %v1355 = vpow.pop %v1354
    %v1356 = vadd.f32 %v1355, 1.0
    %v1357 = vrcp.pop %v1356
    %v1358 = vmul.f32 1.0, %v1357
    %v1359 = vadd.f32 %v1358, %v1358
    %v1360 = vsub.f32 %v1359, 1.0
    %v1361 = vsel %vm957, %v1360, %v1358
    %v1362 = vmul.f32 %v1361, %v1296
    %1364 = vrot.lane.b32.xlu0 %v1361, 64
    %v1365 = vpop.permute.xlu0 %1364
    %v1367 = vmul.f32 %v1361, %v1365
    %1369 = vrot.lane.b32.xlu0 %v1367, 32
    %v1370 = vpop.permute.xlu0 %1369
    %v1372 = vadd.f32 %v1362, %v1370
    %v1373 = vtanh.pop %v1372
    %1375 = vrot.lane.b32.xlu0 %v1373, 64
    %v1376 = vpop.permute.xlu0 %1375
    %v1378 = vmul.f32 %v1361, %v1376
    %v1379 = vpack.c.bf16 %v1378, %v1378
    %1381 = vrot.lane.b32.xlu0 %v1379, 32
    %v1382 = vpop.permute.xlu0 %1381
    %v1384 = vsel %vm1002, %v1382, 0
    %1386 = vmatprep.subr.bf16.mxu0 0
    %1387 = vmatpush1.bf16.msra.mxu0 %v998
    %1388 = vmatprep.subr.bf16.mxu0 0
    %1389 = vmatpush1.bf16.msra.mxu0 %v999
    %1390 = vmatprep.subr.bf16.mxu0 0
    %1391 = vmatpush1.bf16.msra.mxu0 0
    %1392 = vmatprep.subr.bf16.mxu0 0
    %1393 = vmatpush1.bf16.msra.mxu0 0
    %1394 = vmatprep.subr.bf16.mxu0 0
    %1395 = vmatpush1.bf16.msra.mxu0 0
    %1396 = vmatprep.subr.bf16.mxu0 0
    %1397 = vmatpush1.bf16.msra.mxu0 0
    %1398 = vmatprep.subr.bf16.mxu0 0
    %1399 = vmatpush1.bf16.msra.mxu0 0
    %1400 = vmatprep.subr.bf16.mxu0 0
    %1401 = vmatpush1.bf16.msra.mxu0 0
    %1402 = vmatprep.subr.bf16.mxu0 0
    %1403 = vmatpush1.bf16.msra.mxu0 0
    %1404 = vmatprep.subr.bf16.mxu0 0
    %1405 = vmatpush1.bf16.msra.mxu0 0
    %1406 = vmatprep.subr.bf16.mxu0 0
    %1407 = vmatpush1.bf16.msra.mxu0 0
    %1408 = vmatprep.subr.bf16.mxu0 0
    %1409 = vmatpush1.bf16.msra.mxu0 0
    %1410 = vmatprep.subr.bf16.mxu0 0
    %1411 = vmatpush1.bf16.msra.mxu0 0
    %1412 = vmatprep.subr.bf16.mxu0 0
    %1413 = vmatpush1.bf16.msra.mxu0 0
    %1414 = vmatprep.subr.bf16.mxu0 0
    %1415 = vmatpush1.bf16.msra.mxu0 0
    %1416 = vmatprep.subr.bf16.mxu0 0
    %1417 = vmatpush1.bf16.msra.mxu0 0
    %1418 = vmatprep.mubr.bf16.mxu0 0
    %1419 = vmatmul.mubr.bf16.gmra.mrb[0].mxu0 %v1384
    %v1420 = vpop.f32.mrb[0].mxu0
    %v1421 = vadd.f32 0.0, %v1420
    %v1422 = vpop.f32.mrb[0].mxu0
    %v1423 = vpop.f32.mrb[0].mxu0
    %v1424 = vpop.f32.mrb[0].mxu0
    %1425 = vdwg.mxu0
    %v1426 = vadd.f32 %v945, %v1421
    %v1427 = vadd.f32 %v1426, %v1426
    %v1428 = vsel %vm957, %v1427, %v1426
    %v1429 = vxor.u32 %v1428, 2147483648
    %v1430 = vmul.f32 %v1429, 1.442695
    %v1431 = vpow.pop %v1430
    %v1432 = vadd.f32 %v1431, 1.0
    %v1433 = vrcp.pop %v1432
    %v1434 = vmul.f32 1.0, %v1433
    %v1435 = vadd.f32 %v1434, %v1434
    %v1436 = vsub.f32 %v1435, 1.0
    %v1437 = vsel %vm957, %v1436, %v1434
    %v1438 = vmul.f32 %v1437, %v1372
    %1440 = vrot.lane.b32.xlu0 %v1437, 64
    %v1441 = vpop.permute.xlu0 %1440
    %v1443 = vmul.f32 %v1437, %v1441
    %1445 = vrot.lane.b32.xlu0 %v1443, 32
    %v1446 = vpop.permute.xlu0 %1445
    %v1448 = vadd.f32 %v1438, %v1446
    %v1449 = vtanh.pop %v1448
    %1451 = vrot.lane.b32.xlu0 %v1449, 64
    %v1452 = vpop.permute.xlu0 %1451
    %v1454 = vmul.f32 %v1437, %v1452
    %v1455 = vpack.c.bf16 %v1454, %v1454
    %1457 = vrot.lane.b32.xlu0 %v1455, 32
    %v1458 = vpop.permute.xlu0 %1457
    %v1460 = vsel %vm1002, %v1458, 0
    %1462 = vmatprep.subr.bf16.mxu0 0
    %1463 = vmatpush1.bf16.msra.mxu0 %v998
    %1464 = vmatprep.subr.bf16.mxu0 0
    %1465 = vmatpush1.bf16.msra.mxu0 %v999
    %1466 = vmatprep.subr.bf16.mxu0 0
    %1467 = vmatpush1.bf16.msra.mxu0 0
    %1468 = vmatprep.subr.bf16.mxu0 0
    %1469 = vmatpush1.bf16.msra.mxu0 0
    %1470 = vmatprep.subr.bf16.mxu0 0
    %1471 = vmatpush1.bf16.msra.mxu0 0
    %1472 = vmatprep.subr.bf16.mxu0 0
    %1473 = vmatpush1.bf16.msra.mxu0 0
    %1474 = vmatprep.subr.bf16.mxu0 0
    %1475 = vmatpush1.bf16.msra.mxu0 0
    %1476 = vmatprep.subr.bf16.mxu0 0
    %1477 = vmatpush1.bf16.msra.mxu0 0
    %1478 = vmatprep.subr.bf16.mxu0 0
    %1479 = vmatpush1.bf16.msra.mxu0 0
    %1480 = vmatprep.subr.bf16.mxu0 0
    %1481 = vmatpush1.bf16.msra.mxu0 0
    %1482 = vmatprep.subr.bf16.mxu0 0
    %1483 = vmatpush1.bf16.msra.mxu0 0
    %1484 = vmatprep.subr.bf16.mxu0 0
    %1485 = vmatpush1.bf16.msra.mxu0 0
    %1486 = vmatprep.subr.bf16.mxu0 0
    %1487 = vmatpush1.bf16.msra.mxu0 0
    %1488 = vmatprep.subr.bf16.mxu0 0
    %1489 = vmatpush1.bf16.msra.mxu0 0
    %1490 = vmatprep.subr.bf16.mxu0 0
    %1491 = vmatpush1.bf16.msra.mxu0 0
    %1492 = vmatprep.subr.bf16.mxu0 0
    %1493 = vmatpush1.bf16.msra.mxu0 0
    %1494 = vmatprep.mubr.bf16.mxu0 0
    %1495 = vmatmul.mubr.bf16.gmra.mrb[0].mxu0 %v1460
    %v1496 = vpop.f32.mrb[0].mxu0
    %v1497 = vadd.f32 0.0, %v1496
    %v1498 = vpop.f32.mrb[0].mxu0
    %v1499 = vpop.f32.mrb[0].mxu0
    %v1500 = vpop.f32.mrb[0].mxu0
    %1501 = vdwg.mxu0
    %v1502 = vadd.f32 %v948, %v1497
    %v1503 = vadd.f32 %v1502, %v1502
    %v1504 = vsel %vm957, %v1503, %v1502
    %v1505 = vxor.u32 %v1504, 2147483648
    %v1506 = vmul.f32 %v1505, 1.442695
    %v1507 = vpow.pop %v1506
    %v1508 = vadd.f32 %v1507, 1.0
    %v1509 = vrcp.pop %v1508
    %v1510 = vmul.f32 1.0, %v1509
    %v1511 = vadd.f32 %v1510, %v1510
    %v1512 = vsub.f32 %v1511, 1.0
    %v1513 = vsel %vm957, %v1512, %v1510
    %v1514 = vmul.f32 %v1513, %v1448
    %1516 = vrot.lane.b32.xlu0 %v1513, 64
    %v1517 = vpop.permute.xlu0 %1516
    %v1519 = vmul.f32 %v1513, %v1517
    %1521 = vrot.lane.b32.xlu0 %v1519, 32
    %v1522 = vpop.permute.xlu0 %1521
    %v1524 = vadd.f32 %v1514, %v1522
    %v1525 = vtanh.pop %v1524
    %1527 = vrot.lane.b32.xlu0 %v1525, 64
    %v1528 = vpop.permute.xlu0 %1527
    %v1530 = vmul.f32 %v1513, %v1528
    %v1531 = vpack.c.bf16 %v1074, %v985
    %v1532 = vpack.c.bf16 %v1226, %v1150
    %v1533 = vpack.c.bf16 %v1378, %v1302
    %v1534 = vpack.c.bf16 %v1530, %v1454
    %v1535 = vld [vmem:[%s7] sm:$0xf]
    %v1536 = vld [vmem:[%s7 + $0x4] sm:$0xf]
    %v1537 = vld [vmem:[%s7 + $0x8] sm:$0xf]
    %v1538 = vld [vmem:[%s7 + $0xc] sm:$0xf]
    %v1539 = vld [vmem:[#allocation10] sm:$0x1]
    %v1541 = vlaneseq
    %v1542 = vshrl.u32 %v1541, 7
    %v1543 = vsub.s32 0, %v1542
    %v1544 = vrot.slane %v1539, %v1543
    %1550 = vrot.lane.b32.xlu0 %v1531, 32
    %v1551 = vpop.permute.xlu0 %1550
    %1552 = vrot.lane.b32.xlu0 %v1532, 32
    %v1553 = vpop.permute.xlu0 %1552
    %1554 = vrot.lane.b32.xlu0 %v1533, 32
    %v1555 = vpop.permute.xlu0 %1554
    %1556 = vrot.lane.b32.xlu0 %v1534, 32
    %v1557 = vpop.permute.xlu0 %1556
    %v1562 = vunpack.c.l.b16 %v1535
    %v1563 = vunpack.c.l.b16 %v1536
    %v1564 = vunpack.c.l.b16 %v1537
    %v1565 = vunpack.c.l.b16 %v1538
    %v1566 = vpack.c.b16 %v1563, %v1562
    %v1567 = vpack.c.b16 %v1565, %v1564
    %v1571 = vsel %vm1002, %v1551, 0
    %v1574 = vsel %vm1002, %v1553, 0
    %v1577 = vsel %vm1002, %v1555, 0
    %v1580 = vsel %vm1002, %v1557, 0
    %1582 = vmatprep.subr.bf16.mxu0 0
    %1583 = vmatpush1.bf16.msra.mxu0 %v1566
    %1584 = vmatprep.subr.bf16.mxu0 0
    %1585 = vmatpush1.bf16.msra.mxu0 %v1567
    %1586 = vmatprep.subr.bf16.mxu0 0
    %1587 = vmatpush1.bf16.msra.mxu0 0
    %1588 = vmatprep.subr.bf16.mxu0 0
    %1589 = vmatpush1.bf16.msra.mxu0 0
    %1590 = vmatprep.subr.bf16.mxu0 0
    %1591 = vmatpush1.bf16.msra.mxu0 0
    %1592 = vmatprep.subr.bf16.mxu0 0
    %1593 = vmatpush1.bf16.msra.mxu0 0
    %1594 = vmatprep.subr.bf16.mxu0 0
    %1595 = vmatpush1.bf16.msra.mxu0 0
    %1596 = vmatprep.subr.bf16.mxu0 0
    %1597 = vmatpush1.bf16.msra.mxu0 0
    %1598 = vmatprep.subr.bf16.mxu0 0
    %1599 = vmatpush1.bf16.msra.mxu0 0
    %1600 = vmatprep.subr.bf16.mxu0 0
    %1601 = vmatpush1.bf16.msra.mxu0 0
    %1602 = vmatprep.subr.bf16.mxu0 0
    %1603 = vmatpush1.bf16.msra.mxu0 0
    %1604 = vmatprep.subr.bf16.mxu0 0
    %1605 = vmatpush1.bf16.msra.mxu0 0
    %1606 = vmatprep.subr.bf16.mxu0 0
    %1607 = vmatpush1.bf16.msra.mxu0 0
    %1608 = vmatprep.subr.bf16.mxu0 0
    %1609 = vmatpush1.bf16.msra.mxu0 0
    %1610 = vmatprep.subr.bf16.mxu0 0
    %1611 = vmatpush1.bf16.msra.mxu0 0
    %1612 = vmatprep.subr.bf16.mxu0 0
    %1613 = vmatpush1.bf16.msra.mxu0 0
    %1614 = vmatprep.mubr.bf16.mxu0 0
    %1615 = vmatmul.mubr.bf16.gmra.mrb[0].mxu0 %v1571
    %v1616 = vpop.f32.mrb[0].mxu0
    %v1617 = vadd.f32 %v1544, %v1616
    %v1618 = vpop.f32.mrb[0].mxu0
    %v1619 = vpop.f32.mrb[0].mxu0
    %v1620 = vadd.f32 %v1544, %v1619
    %v1621 = vpop.f32.mrb[0].mxu0
    %1622 = vmatprep.mubr.bf16.mxu0 0
    %1623 = vmatmul.mubr.bf16.gmra.mrb[0].mxu0 %v1574
    %v1624 = vpop.f32.mrb[0].mxu0
    %v1625 = vadd.f32 %v1544, %v1624
    %v1626 = vpop.f32.mrb[0].mxu0
    %v1627 = vpop.f32.mrb[0].mxu0
    %v1628 = vadd.f32 %v1544, %v1627
    %v1629 = vpop.f32.mrb[0].mxu0
    %1630 = vmatprep.mubr.bf16.mxu0 0
    %1631 = vmatmul.mubr.bf16.gmra.mrb[0].mxu0 %v1577
    %v1632 = vpop.f32.mrb[0].mxu0
    %v1633 = vadd.f32 %v1544, %v1632
    %v1634 = vpop.f32.mrb[0].mxu0
    %v1635 = vpop.f32.mrb[0].mxu0
    %v1636 = vadd.f32 %v1544, %v1635
    %v1637 = vpop.f32.mrb[0].mxu0
    %1638 = vmatprep.mubr.bf16.mxu0 0
    %1639 = vmatmul.mubr.bf16.gmra.mrb[0].mxu0 %v1580
    %v1640 = vpop.f32.mrb[0].mxu0
    %v1641 = vadd.f32 %v1544, %v1640
    %v1642 = vpop.f32.mrb[0].mxu0
    %v1643 = vpop.f32.mrb[0].mxu0
    %v1644 = vadd.f32 %v1544, %v1643
    %v1645 = vpop.f32.mrb[0].mxu0
    %1646 = vdwg.mxu0
    %v1647 = vld [vmem:[%s8] sm:$0xf]
    %v1648 = vld [vmem:[%s8 + $0x4] sm:$0xf]
    %v1649 = vld [vmem:[%s8 + $0x8] sm:$0xf]
    %v1650 = vld [vmem:[%s8 + $0xc] sm:$0xf]
    %v1651 = vadd.f32 %v1617, %v1617
    %v1652 = vsel %vm957, %v1651, %v1617
    %v1653 = vxor.u32 %v1652, 2147483648
    %v1654 = vmul.f32 %v1653, 1.442695
    %v1655 = vpow.pop %v1654
    %v1656 = vadd.f32 %v1655, 1.0
    %v1657 = vrcp.pop %v1656
    %v1658 = vmul.f32 1.0, %v1657
    %v1659 = vadd.f32 %v1658, %v1658
    %v1660 = vsub.f32 %v1659, 1.0
    %v1661 = vsel %vm957, %v1660, %v1658
    %v1662 = vmul.f32 %v1661, 0.0
    %1664 = vrot.lane.b32.xlu0 %v1661, 64
    %v1665 = vpop.permute.xlu0 %1664
    %v1667 = vmul.f32 %v1661, %v1665
    %1669 = vrot.lane.b32.xlu0 %v1667, 32
    %v1670 = vpop.permute.xlu0 %1669
    %v1672 = vadd.f32 %v1662, %v1670
    %v1673 = vtanh.pop %v1672
    %1675 = vrot.lane.b32.xlu0 %v1673, 64
    %v1676 = vpop.permute.xlu0 %1675
    %v1678 = vmul.f32 %v1661, %v1676
    %v1679 = vpack.c.bf16 %v1678, %v1678
    %1681 = vrot.lane.b32.xlu0 %v1679, 32
    %v1682 = vpop.permute.xlu0 %1681
    %v1687 = vunpack.c.l.b16 %v1647
    %v1688 = vunpack.c.l.b16 %v1648
    %v1689 = vunpack.c.l.b16 %v1649
    %v1690 = vunpack.c.l.b16 %v1650
    %v1691 = vpack.c.b16 %v1688, %v1687
    %v1692 = vpack.c.b16 %v1690, %v1689
    %v1696 = vsel %vm1002, %v1682, 0
    %1698 = vmatprep.subr.bf16.mxu0 0
    %1699 = vmatpush1.bf16.msra.mxu0 %v1691
    %1700 = vmatprep.subr.bf16.mxu0 0
    %1701 = vmatpush1.bf16.msra.mxu0 %v1692
    %1702 = vmatprep.subr.bf16.mxu0 0
    %1703 = vmatpush1.bf16.msra.mxu0 0
    %1704 = vmatprep.subr.bf16.mxu0 0
    %1705 = vmatpush1.bf16.msra.mxu0 0
    %1706 = vmatprep.subr.bf16.mxu0 0
    %1707 = vmatpush1.bf16.msra.mxu0 0
    %1708 = vmatprep.subr.bf16.mxu0 0
    %1709 = vmatpush1.bf16.msra.mxu0 0
    %1710 = vmatprep.subr.bf16.mxu0 0
    %1711 = vmatpush1.bf16.msra.mxu0 0
    %1712 = vmatprep.subr.bf16.mxu0 0
    %1713 = vmatpush1.bf16.msra.mxu0 0
    %1714 = vmatprep.subr.bf16.mxu0 0
    %1715 = vmatpush1.bf16.msra.mxu0 0
    %1716 = vmatprep.subr.bf16.mxu0 0
    %1717 = vmatpush1.bf16.msra.mxu0 0
    %1718 = vmatprep.subr.bf16.mxu0 0
    %1719 = vmatpush1.bf16.msra.mxu0 0
    %1720 = vmatprep.subr.bf16.mxu0 0
    %1721 = vmatpush1.bf16.msra.mxu0 0
    %1722 = vmatprep.subr.bf16.mxu0 0
    %1723 = vmatpush1.bf16.msra.mxu0 0
    %1724 = vmatprep.subr.bf16.mxu0 0
    %1725 = vmatpush1.bf16.msra.mxu0 0
    %1726 = vmatprep.subr.bf16.mxu0 0
    %1727 = vmatpush1.bf16.msra.mxu0 0
    %1728 = vmatprep.subr.bf16.mxu0 0
    %1729 = vmatpush1.bf16.msra.mxu0 0
    %1730 = vmatprep.mubr.bf16.mxu0 0
    %1731 = vmatmul.mubr.bf16.gmra.mrb[0].mxu0 %v1696
    %v1732 = vpop.f32.mrb[0].mxu0
    %v1733 = vadd.f32 0.0, %v1732
    %v1734 = vpop.f32.mrb[0].mxu0
    %v1735 = vpop.f32.mrb[0].mxu0
    %v1736 = vpop.f32.mrb[0].mxu0
    %1737 = vdwg.mxu0
    %v1738 = vadd.f32 %v1620, %v1733
    %v1739 = vadd.f32 %v1738, %v1738
    %v1740 = vsel %vm957, %v1739, %v1738
    %v1741 = vxor.u32 %v1740, 2147483648
    %v1742 = vmul.f32 %v1741, 1.442695
    %v1743 = vpow.pop %v1742
    %v1744 = vadd.f32 %v1743, 1.0
    %v1745 = vrcp.pop %v1744
    %v1746 = vmul.f32 1.0, %v1745
    %v1747 = vadd.f32 %v1746, %v1746
    %v1748 = vsub.f32 %v1747, 1.0
    %v1749 = vsel %vm957, %v1748, %v1746
    %v1750 = vmul.f32 %v1749, %v1672
    %1752 = vrot.lane.b32.xlu0 %v1749, 64
    %v1753 = vpop.permute.xlu0 %1752
    %v1755 = vmul.f32 %v1749, %v1753
    %1757 = vrot.lane.b32.xlu0 %v1755, 32
    %v1758 = vpop.permute.xlu0 %1757
    %v1760 = vadd.f32 %v1750, %v1758
    %v1761 = vtanh.pop %v1760
    %1763 = vrot.lane.b32.xlu0 %v1761, 64
    %v1764 = vpop.permute.xlu0 %1763
    %v1766 = vmul.f32 %v1749, %v1764
    %v1767 = vpack.c.bf16 %v1766, %v1766
    %1769 = vrot.lane.b32.xlu0 %v1767, 32
    %v1770 = vpop.permute.xlu0 %1769
    %v1772 = vsel %vm1002, %v1770, 0
    %1774 = vmatprep.subr.bf16.mxu0 0
    %1775 = vmatpush1.bf16.msra.mxu0 %v1691
    %1776 = vmatprep.subr.bf16.mxu0 0
    %1777 = vmatpush1.bf16.msra.mxu0 %v1692
    %1778 = vmatprep.subr.bf16.mxu0 0
    %1779 = vmatpush1.bf16.msra.mxu0 0
    %1780 = vmatprep.subr.bf16.mxu0 0
    %1781 = vmatpush1.bf16.msra.mxu0 0
    %1782 = vmatprep.subr.bf16.mxu0 0
    %1783 = vmatpush1.bf16.msra.mxu0 0
    %1784 = vmatprep.subr.bf16.mxu0 0
    %1785 = vmatpush1.bf16.msra.mxu0 0
    %1786 = vmatprep.subr.bf16.mxu0 0
    %1787 = vmatpush1.bf16.msra.mxu0 0
    %1788 = vmatprep.subr.bf16.mxu0 0
    %1789 = vmatpush1.bf16.msra.mxu0 0
    %1790 = vmatprep.subr.bf16.mxu0 0
    %1791 = vmatpush1.bf16.msra.mxu0 0
    %1792 = vmatprep.subr.bf16.mxu0 0
    %1793 = vmatpush1.bf16.msra.mxu0 0
    %1794 = vmatprep.subr.bf16.mxu0 0
    %1795 = vmatpush1.bf16.msra.mxu0 0
    %1796 = vmatprep.subr.bf16.mxu0 0
    %1797 = vmatpush1.bf16.msra.mxu0 0
    %1798 = vmatprep.subr.bf16.mxu0 0
    %1799 = vmatpush1.bf16.msra.mxu0 0
    %1800 = vmatprep.subr.bf16.mxu0 0
    %1801 = vmatpush1.bf16.msra.mxu0 0
    %1802 = vmatprep.subr.bf16.mxu0 0
    %1803 = vmatpush1.bf16.msra.mxu0 0
    %1804 = vmatprep.subr.bf16.mxu0 0
    %1805 = vmatpush1.bf16.msra.mxu0 0
    %1806 = vmatprep.mubr.bf16.mxu0 0
    %1807 = vmatmul.mubr.bf16.gmra.mrb[0].mxu0 %v1772
    %v1808 = vpop.f32.mrb[0].mxu0
    %v1809 = vadd.f32 0.0, %v1808
    %v1810 = vpop.f32.mrb[0].mxu0
    %v1811 = vpop.f32.mrb[0].mxu0
    %v1812 = vpop.f32.mrb[0].mxu0
    %1813 = vdwg.mxu0
    %v1814 = vadd.f32 %v1625, %v1809
    %v1815 = vadd.f32 %v1814, %v1814
    %v1816 = vsel %vm957, %v1815, %v1814
    %v1817 = vxor.u32 %v1816, 2147483648
    %v1818 = vmul.f32 %v1817, 1.442695
    %v1819 = vpow.pop %v1818
    %v1820 = vadd.f32 %v1819, 1.0
    %v1821 = vrcp.pop %v1820
    %v1822 = vmul.f32 1.0, %v1821
    %v1823 = vadd.f32 %v1822, %v1822
    %v1824 = vsub.f32 %v1823, 1.0
    %v1825 = vsel %vm957, %v1824, %v1822
    %v1826 = vmul.f32 %v1825, %v1760
    %1828 = vrot.lane.b32.xlu0 %v1825, 64
    %v1829 = vpop.permute.xlu0 %1828
    %v1831 = vmul.f32 %v1825, %v1829
    %1833 = vrot.lane.b32.xlu0 %v1831, 32
    %v1834 = vpop.permute.xlu0 %1833
    %v1836 = vadd.f32 %v1826, %v1834
    %v1837 = vtanh.pop %v1836
    %1839 = vrot.lane.b32.xlu0 %v1837, 64
    %v1840 = vpop.permute.xlu0 %1839
    %v1842 = vmul.f32 %v1825, %v1840
    %v1843 = vpack.c.bf16 %v1842, %v1842
    %1845 = vrot.lane.b32.xlu0 %v1843, 32
    %v1846 = vpop.permute.xlu0 %1845
    %v1848 = vsel %vm1002, %v1846, 0
    %1850 = vmatprep.subr.bf16.mxu0 0
    %1851 = vmatpush1.bf16.msra.mxu0 %v1691
    %1852 = vmatprep.subr.bf16.mxu0 0
    %1853 = vmatpush1.bf16.msra.mxu0 %v1692
    %1854 = vmatprep.subr.bf16.mxu0 0
    %1855 = vmatpush1.bf16.msra.mxu0 0
    %1856 = vmatprep.subr.bf16.mxu0 0
    %1857 = vmatpush1.bf16.msra.mxu0 0
    %1858 = vmatprep.subr.bf16.mxu0 0
    %1859 = vmatpush1.bf16.msra.mxu0 0
    %1860 = vmatprep.subr.bf16.mxu0 0
    %1861 = vmatpush1.bf16.msra.mxu0 0
    %1862 = vmatprep.subr.bf16.mxu0 0
    %1863 = vmatpush1.bf16.msra.mxu0 0
    %1864 = vmatprep.subr.bf16.mxu0 0
    %1865 = vmatpush1.bf16.msra.mxu0 0
    %1866 = vmatprep.subr.bf16.mxu0 0
    %1867 = vmatpush1.bf16.msra.mxu0 0
    %1868 = vmatprep.subr.bf16.mxu0 0
    %1869 = vmatpush1.bf16.msra.mxu0 0
    %1870 = vmatprep.subr.bf16.mxu0 0
    %1871 = vmatpush1.bf16.msra.mxu0 0
    %1872 = vmatprep.subr.bf16.mxu0 0
    %1873 = vmatpush1.bf16.msra.mxu0 0
    %1874 = vmatprep.subr.bf16.mxu0 0
    %1875 = vmatpush1.bf16.msra.mxu0 0
    %1876 = vmatprep.subr.bf16.mxu0 0
    %1877 = vmatpush1.bf16.msra.mxu0 0
    %1878 = vmatprep.subr.bf16.mxu0 0
    %1879 = vmatpush1.bf16.msra.mxu0 0
    %1880 = vmatprep.subr.bf16.mxu0 0
    %1881 = vmatpush1.bf16.msra.mxu0 0
    %1882 = vmatprep.mubr.bf16.mxu0 0
    %1883 = vmatmul.mubr.bf16.gmra.mrb[0].mxu0 %v1848
    %v1884 = vpop.f32.mrb[0].mxu0
    %v1885 = vadd.f32 0.0, %v1884
    %v1886 = vpop.f32.mrb[0].mxu0
    %v1887 = vpop.f32.mrb[0].mxu0
    %v1888 = vpop.f32.mrb[0].mxu0
    %1889 = vdwg.mxu0
    %v1890 = vadd.f32 %v1628, %v1885
    %v1891 = vadd.f32 %v1890, %v1890
    %v1892 = vsel %vm957, %v1891, %v1890
    %v1893 = vxor.u32 %v1892, 2147483648
    %v1894 = vmul.f32 %v1893, 1.442695
    %v1895 = vpow.pop %v1894
    %v1896 = vadd.f32 %v1895, 1.0
    %v1897 = vrcp.pop %v1896
    %v1898 = vmul.f32 1.0, %v1897
    %v1899 = vadd.f32 %v1898, %v1898
    %v1900 = vsub.f32 %v1899, 1.0
    %v1901 = vsel %vm957, %v1900, %v1898
    %v1902 = vmul.f32 %v1901, %v1836
    %1904 = vrot.lane.b32.xlu0 %v1901, 64
    %v1905 = vpop.permute.xlu0 %1904
    %v1907 = vmul.f32 %v1901, %v1905
    %1909 = vrot.lane.b32.xlu0 %v1907, 32
    %v1910 = vpop.permute.xlu0 %1909
    %v1912 = vadd.f32 %v1902, %v1910
    %v1913 = vtanh.pop %v1912
    %1915 = vrot.lane.b32.xlu0 %v1913, 64
    %v1916 = vpop.permute.xlu0 %1915
    %v1918 = vmul.f32 %v1901, %v1916
    %v1919 = vpack.c.bf16 %v1918, %v1918
    %1921 = vrot.lane.b32.xlu0 %v1919, 32
    %v1922 = vpop.permute.xlu0 %1921
    %v1924 = vsel %vm1002, %v1922, 0
    %1926 = vmatprep.subr.bf16.mxu0 0
    %1927 = vmatpush1.bf16.msra.mxu0 %v1691
    %1928 = vmatprep.subr.bf16.mxu0 0
    %1929 = vmatpush1.bf16.msra.mxu0 %v1692
    %1930 = vmatprep.subr.bf16.mxu0 0
    %1931 = vmatpush1.bf16.msra.mxu0 0
    %1932 = vmatprep.subr.bf16.mxu0 0
    %1933 = vmatpush1.bf16.msra.mxu0 0
    %1934 = vmatprep.subr.bf16.mxu0 0
    %1935 = vmatpush1.bf16.msra.mxu0 0
    %1936 = vmatprep.subr.bf16.mxu0 0
    %1937 = vmatpush1.bf16.msra.mxu0 0
    %1938 = vmatprep.subr.bf16.mxu0 0
    %1939 = vmatpush1.bf16.msra.mxu0 0
    %1940 = vmatprep.subr.bf16.mxu0 0
    %1941 = vmatpush1.bf16.msra.mxu0 0
    %1942 = vmatprep.subr.bf16.mxu0 0
    %1943 = vmatpush1.bf16.msra.mxu0 0
    %1944 = vmatprep.subr.bf16.mxu0 0
    %1945 = vmatpush1.bf16.msra.mxu0 0
    %1946 = vmatprep.subr.bf16.mxu0 0
    %1947 = vmatpush1.bf16.msra.mxu0 0
    %1948 = vmatprep.subr.bf16.mxu0 0
    %1949 = vmatpush1.bf16.msra.mxu0 0
    %1950 = vmatprep.subr.bf16.mxu0 0
    %1951 = vmatpush1.bf16.msra.mxu0 0
    %1952 = vmatprep.subr.bf16.mxu0 0
    %1953 = vmatpush1.bf16.msra.mxu0 0
    %1954 = vmatprep.subr.bf16.mxu0 0
    %1955 = vmatpush1.bf16.msra.mxu0 0
    %1956 = vmatprep.subr.bf16.mxu0 0
    %1957 = vmatpush1.bf16.msra.mxu0 0
    %1958 = vmatprep.mubr.bf16.mxu0 0
    %1959 = vmatmul.mubr.bf16.gmra.mrb[0].mxu0 %v1924
    %v1960 = vpop.f32.mrb[0].mxu0
    %v1961 = vadd.f32 0.0, %v1960
    %v1962 = vpop.f32.mrb[0].mxu0
    %v1963 = vpop.f32.mrb[0].mxu0
    %v1964 = vpop.f32.mrb[0].mxu0
    %1965 = vdwg.mxu0
    %v1966 = vadd.f32 %v1633, %v1961
    %v1967 = vadd.f32 %v1966, %v1966
    %v1968 = vsel %vm957, %v1967, %v1966
    %v1969 = vxor.u32 %v1968, 2147483648
    %v1970 = vmul.f32 %v1969, 1.442695
    %v1971 = vpow.pop %v1970
    %v1972 = vadd.f32 %v1971, 1.0
    %v1973 = vrcp.pop %v1972
    %v1974 = vmul.f32 1.0, %v1973
    %v1975 = vadd.f32 %v1974, %v1974
    %v1976 = vsub.f32 %v1975, 1.0
    %v1977 = vsel %vm957, %v1976, %v1974
    %v1978 = vmul.f32 %v1977, %v1912
    %1980 = vrot.lane.b32.xlu0 %v1977, 64
    %v1981 = vpop.permute.xlu0 %1980
    %v1983 = vmul.f32 %v1977, %v1981
    %1985 = vrot.lane.b32.xlu0 %v1983, 32
    %v1986 = vpop.permute.xlu0 %1985
    %v1988 = vadd.f32 %v1978, %v1986
    %v1989 = vtanh.pop %v1988
    %1991 = vrot.lane.b32.xlu0 %v1989, 64
    %v1992 = vpop.permute.xlu0 %1991
    %v1994 = vmul.f32 %v1977, %v1992
    %v1995 = vpack.c.bf16 %v1994, %v1994
    %1997 = vrot.lane.b32.xlu0 %v1995, 32
    %v1998 = vpop.permute.xlu0 %1997
    %v2000 = vsel %vm1002, %v1998, 0
    %2002 = vmatprep.subr.bf16.mxu0 0
    %2003 = vmatpush1.bf16.msra.mxu0 %v1691
    %2004 = vmatprep.subr.bf16.mxu0 0
    %2005 = vmatpush1.bf16.msra.mxu0 %v1692
    %2006 = vmatprep.subr.bf16.mxu0 0
    %2007 = vmatpush1.bf16.msra.mxu0 0
    %2008 = vmatprep.subr.bf16.mxu0 0
    %2009 = vmatpush1.bf16.msra.mxu0 0
    %2010 = vmatprep.subr.bf16.mxu0 0
    %2011 = vmatpush1.bf16.msra.mxu0 0
    %2012 = vmatprep.subr.bf16.mxu0 0
    %2013 = vmatpush1.bf16.msra.mxu0 0
    %2014 = vmatprep.subr.bf16.mxu0 0
    %2015 = vmatpush1.bf16.msra.mxu0 0
    %2016 = vmatprep.subr.bf16.mxu0 0
    %2017 = vmatpush1.bf16.msra.mxu0 0
    %2018 = vmatprep.subr.bf16.mxu0 0
    %2019 = vmatpush1.bf16.msra.mxu0 0
    %2020 = vmatprep.subr.bf16.mxu0 0
    %2021 = vmatpush1.bf16.msra.mxu0 0
    %2022 = vmatprep.subr.bf16.mxu0 0
    %2023 = vmatpush1.bf16.msra.mxu0 0
    %2024 = vmatprep.subr.bf16.mxu0 0
    %2025 = vmatpush1.bf16.msra.mxu0 0
    %2026 = vmatprep.subr.bf16.mxu0 0
    %2027 = vmatpush1.bf16.msra.mxu0 0
    %2028 = vmatprep.subr.bf16.mxu0 0
    %2029 = vmatpush1.bf16.msra.mxu0 0
    %2030 = vmatprep.subr.bf16.mxu0 0
    %2031 = vmatpush1.bf16.msra.mxu0 0
    %2032 = vmatprep.subr.bf16.mxu0 0
    %2033 = vmatpush1.bf16.msra.mxu0 0
    %2034 = vmatprep.mubr.bf16.mxu0 0
    %2035 = vmatmul.mubr.bf16.gmra.mrb[0].mxu0 %v2000
    %v2036 = vpop.f32.mrb[0].mxu0
    %v2037 = vadd.f32 0.0, %v2036
    %v2038 = vpop.f32.mrb[0].mxu0
    %v2039 = vpop.f32.mrb[0].mxu0
    %v2040 = vpop.f32.mrb[0].mxu0
    %2041 = vdwg.mxu0
    %v2042 = vadd.f32 %v1636, %v2037
    %v2043 = vadd.f32 %v2042, %v2042
    %v2044 = vsel %vm957, %v2043, %v2042
    %v2045 = vxor.u32 %v2044, 2147483648
    %v2046 = vmul.f32 %v2045, 1.442695
    %v2047 = vpow.pop %v2046
    %v2048 = vadd.f32 %v2047, 1.0
    %v2049 = vrcp.pop %v2048
    %v2050 = vmul.f32 1.0, %v2049
    %v2051 = vadd.f32 %v2050, %v2050
    %v2052 = vsub.f32 %v2051, 1.0
    %v2053 = vsel %vm957, %v2052, %v2050
    %v2054 = vmul.f32 %v2053, %v1988
    %2056 = vrot.lane.b32.xlu0 %v2053, 64
    %v2057 = vpop.permute.xlu0 %2056
    %v2059 = vmul.f32 %v2053, %v2057
    %2061 = vrot.lane.b32.xlu0 %v2059, 32
    %v2062 = vpop.permute.xlu0 %2061
    %v2064 = vadd.f32 %v2054, %v2062
    %v2065 = vtanh.pop %v2064
    %2067 = vrot.lane.b32.xlu0 %v2065, 64
    %v2068 = vpop.permute.xlu0 %2067
    %v2070 = vmul.f32 %v2053, %v2068
    %v2071 = vpack.c.bf16 %v2070, %v2070
    %2073 = vrot.lane.b32.xlu0 %v2071, 32
    %v2074 = vpop.permute.xlu0 %2073
    %v2076 = vsel %vm1002, %v2074, 0
    %2078 = vmatprep.subr.bf16.mxu0 0
    %2079 = vmatpush1.bf16.msra.mxu0 %v1691
    %2080 = vmatprep.subr.bf16.mxu0 0
    %2081 = vmatpush1.bf16.msra.mxu0 %v1692
    %2082 = vmatprep.subr.bf16.mxu0 0
    %2083 = vmatpush1.bf16.msra.mxu0 0
    %2084 = vmatprep.subr.bf16.mxu0 0
    %2085 = vmatpush1.bf16.msra.mxu0 0
    %2086 = vmatprep.subr.bf16.mxu0 0
    %2087 = vmatpush1.bf16.msra.mxu0 0
    %2088 = vmatprep.subr.bf16.mxu0 0
    %2089 = vmatpush1.bf16.msra.mxu0 0
    %2090 = vmatprep.subr.bf16.mxu0 0
    %2091 = vmatpush1.bf16.msra.mxu0 0
    %2092 = vmatprep.subr.bf16.mxu0 0
    %2093 = vmatpush1.bf16.msra.mxu0 0
    %2094 = vmatprep.subr.bf16.mxu0 0
    %2095 = vmatpush1.bf16.msra.mxu0 0
    %2096 = vmatprep.subr.bf16.mxu0 0
    %2097 = vmatpush1.bf16.msra.mxu0 0
    %2098 = vmatprep.subr.bf16.mxu0 0
    %2099 = vmatpush1.bf16.msra.mxu0 0
    %2100 = vmatprep.subr.bf16.mxu0 0
    %2101 = vmatpush1.bf16.msra.mxu0 0
    %2102 = vmatprep.subr.bf16.mxu0 0
    %2103 = vmatpush1.bf16.msra.mxu0 0
    %2104 = vmatprep.subr.bf16.mxu0 0
    %2105 = vmatpush1.bf16.msra.mxu0 0
    %2106 = vmatprep.subr.bf16.mxu0 0
    %2107 = vmatpush1.bf16.msra.mxu0 0
    %2108 = vmatprep.subr.bf16.mxu0 0
    %2109 = vmatpush1.bf16.msra.mxu0 0
    %2110 = vmatprep.mubr.bf16.mxu0 0
    %2111 = vmatmul.mubr.bf16.gmra.mrb[0].mxu0 %v2076
    %v2112 = vpop.f32.mrb[0].mxu0
    %v2113 = vadd.f32 0.0, %v2112
    %v2114 = vpop.f32.mrb[0].mxu0
    %v2115 = vpop.f32.mrb[0].mxu0
    %v2116 = vpop.f32.mrb[0].mxu0
    %2117 = vdwg.mxu0
    %v2118 = vadd.f32 %v1641, %v2113
    %v2119 = vadd.f32 %v2118, %v2118
    %v2120 = vsel %vm957, %v2119, %v2118
    %v2121 = vxor.u32 %v2120, 2147483648
    %v2122 = vmul.f32 %v2121, 1.442695
    %v2123 = vpow.pop %v2122
    %v2124 = vadd.f32 %v2123, 1.0
    %v2125 = vrcp.pop %v2124
    %v2126 = vmul.f32 1.0, %v2125
    %v2127 = vadd.f32 %v2126, %v2126
    %v2128 = vsub.f32 %v2127, 1.0
    %v2129 = vsel %vm957, %v2128, %v2126
    %v2130 = vmul.f32 %v2129, %v2064
    %2132 = vrot.lane.b32.xlu0 %v2129, 64
    %v2133 = vpop.permute.xlu0 %2132
    %v2135 = vmul.f32 %v2129, %v2133
    %2137 = vrot.lane.b32.xlu0 %v2135, 32
    %v2138 = vpop.permute.xlu0 %2137
    %v2140 = vadd.f32 %v2130, %v2138
    %v2141 = vtanh.pop %v2140
    %2143 = vrot.lane.b32.xlu0 %v2141, 64
    %v2144 = vpop.permute.xlu0 %2143
    %v2146 = vmul.f32 %v2129, %v2144
    %v2147 = vpack.c.bf16 %v2146, %v2146
    %2149 = vrot.lane.b32.xlu0 %v2147, 32
    %v2150 = vpop.permute.xlu0 %2149
    %v2152 = vsel %vm1002, %v2150, 0
    %2154 = vmatprep.subr.bf16.mxu0 0
    %2155 = vmatpush1.bf16.msra.mxu0 %v1691
    %2156 = vmatprep.subr.bf16.mxu0 0
    %2157 = vmatpush1.bf16.msra.mxu0 %v1692
    %2158 = vmatprep.subr.bf16.mxu0 0
    %2159 = vmatpush1.bf16.msra.mxu0 0
    %2160 = vmatprep.subr.bf16.mxu0 0
    %2161 = vmatpush1.bf16.msra.mxu0 0
    %2162 = vmatprep.subr.bf16.mxu0 0
    %2163 = vmatpush1.bf16.msra.mxu0 0
    %2164 = vmatprep.subr.bf16.mxu0 0
    %2165 = vmatpush1.bf16.msra.mxu0 0
    %2166 = vmatprep.subr.bf16.mxu0 0
    %2167 = vmatpush1.bf16.msra.mxu0 0
    %2168 = vmatprep.subr.bf16.mxu0 0
    %2169 = vmatpush1.bf16.msra.mxu0 0
    %2170 = vmatprep.subr.bf16.mxu0 0
    %2171 = vmatpush1.bf16.msra.mxu0 0
    %2172 = vmatprep.subr.bf16.mxu0 0
    %2173 = vmatpush1.bf16.msra.mxu0 0
    %2174 = vmatprep.subr.bf16.mxu0 0
    %2175 = vmatpush1.bf16.msra.mxu0 0
    %2176 = vmatprep.subr.bf16.mxu0 0
    %2177 = vmatpush1.bf16.msra.mxu0 0
    %2178 = vmatprep.subr.bf16.mxu0 0
    %2179 = vmatpush1.bf16.msra.mxu0 0
    %2180 = vmatprep.subr.bf16.mxu0 0
    %2181 = vmatpush1.bf16.msra.mxu0 0
    %2182 = vmatprep.subr.bf16.mxu0 0
    %2183 = vmatpush1.bf16.msra.mxu0 0
    %2184 = vmatprep.subr.bf16.mxu0 0
    %2185 = vmatpush1.bf16.msra.mxu0 0
    %2186 = vmatprep.mubr.bf16.mxu0 0
    %2187 = vmatmul.mubr.bf16.gmra.mrb[0].mxu0 %v2152
    %v2188 = vpop.f32.mrb[0].mxu0
    %v2189 = vadd.f32 0.0, %v2188
    %v2190 = vpop.f32.mrb[0].mxu0
    %v2191 = vpop.f32.mrb[0].mxu0
    %v2192 = vpop.f32.mrb[0].mxu0
    %2193 = vdwg.mxu0
    %v2194 = vadd.f32 %v1644, %v2189
    %v2195 = vadd.f32 %v2194, %v2194
    %v2196 = vsel %vm957, %v2195, %v2194
    %v2197 = vxor.u32 %v2196, 2147483648
    %v2198 = vmul.f32 %v2197, 1.442695
    %v2199 = vpow.pop %v2198
    %v2200 = vadd.f32 %v2199, 1.0
    %v2201 = vrcp.pop %v2200
    %v2202 = vmul.f32 1.0, %v2201
    %v2203 = vadd.f32 %v2202, %v2202
    %v2204 = vsub.f32 %v2203, 1.0
    %v2205 = vsel %vm957, %v2204, %v2202
    %v2206 = vmul.f32 %v2205, %v2140
    %2208 = vrot.lane.b32.xlu0 %v2205, 64
    %v2209 = vpop.permute.xlu0 %2208
    %v2211 = vmul.f32 %v2205, %v2209
    %2213 = vrot.lane.b32.xlu0 %v2211, 32
    %v2214 = vpop.permute.xlu0 %2213
    %v2216 = vadd.f32 %v2206, %v2214
    %v2217 = vtanh.pop %v2216
    %2219 = vrot.lane.b32.xlu0 %v2217, 64
    %v2220 = vpop.permute.xlu0 %2219
    %v2222 = vmul.f32 %v2205, %v2220
    %v2223 = vpack.c.bf16 %v1766, %v1678
    %v2224 = vpack.c.bf16 %v1918, %v1842
    %v2225 = vpack.c.bf16 %v2070, %v1994
    %v2226 = vpack.c.bf16 %v2222, %v2146
    %v2227 = vld [vmem:[%s10] sm:$0xf]
    %v2228 = vld [vmem:[%s10 + $0x4] sm:$0xf]
    %v2229 = vld [vmem:[%s10 + $0x8] sm:$0xf]
    %v2230 = vld [vmem:[%s10 + $0xc] sm:$0xf]
    %v2231 = vld [vmem:[%s12] sm:$0x1]
    %v2233 = vlaneseq
    %v2234 = vshrl.u32 %v2233, 7
    %v2235 = vsub.s32 0, %v2234
    %v2236 = vrot.slane %v2231, %v2235
    %2242 = vrot.lane.b32.xlu0 %v2223, 32
    %v2243 = vpop.permute.xlu0 %2242
    %2244 = vrot.lane.b32.xlu0 %v2224, 32
    %v2245 = vpop.permute.xlu0 %2244
    %2246 = vrot.lane.b32.xlu0 %v2225, 32
    %v2247 = vpop.permute.xlu0 %2246
    %2248 = vrot.lane.b32.xlu0 %v2226, 32
    %v2249 = vpop.permute.xlu0 %2248
    %v2254 = vunpack.c.l.b16 %v2227
    %v2255 = vunpack.c.l.b16 %v2228
    %v2256 = vunpack.c.l.b16 %v2229
    %v2257 = vunpack.c.l.b16 %v2230
    %v2258 = vpack.c.b16 %v2255, %v2254
    %v2259 = vpack.c.b16 %v2257, %v2256
    %v2263 = vsel %vm1002, %v2243, 0
    %v2266 = vsel %vm1002, %v2245, 0
    %v2269 = vsel %vm1002, %v2247, 0
    %v2272 = vsel %vm1002, %v2249, 0
    %2274 = vmatprep.subr.bf16.mxu0 0
    %2275 = vmatpush1.bf16.msra.mxu0 %v2258
    %2276 = vmatprep.subr.bf16.mxu0 0
    %2277 = vmatpush1.bf16.msra.mxu0 %v2259
    %2278 = vmatprep.subr.bf16.mxu0 0
    %2279 = vmatpush1.bf16.msra.mxu0 0
    %2280 = vmatprep.subr.bf16.mxu0 0
    %2281 = vmatpush1.bf16.msra.mxu0 0
    %2282 = vmatprep.subr.bf16.mxu0 0
    %2283 = vmatpush1.bf16.msra.mxu0 0
    %2284 = vmatprep.subr.bf16.mxu0 0
    %2285 = vmatpush1.bf16.msra.mxu0 0
    %2286 = vmatprep.subr.bf16.mxu0 0
    %2287 = vmatpush1.bf16.msra.mxu0 0
    %2288 = vmatprep.subr.bf16.mxu0 0
    %2289 = vmatpush1.bf16.msra.mxu0 0
    %2290 = vmatprep.subr.bf16.mxu0 0
    %2291 = vmatpush1.bf16.msra.mxu0 0
    %2292 = vmatprep.subr.bf16.mxu0 0
    %2293 = vmatpush1.bf16.msra.mxu0 0
    %2294 = vmatprep.subr.bf16.mxu0 0
    %2295 = vmatpush1.bf16.msra.mxu0 0
    %2296 = vmatprep.subr.bf16.mxu0 0
    %2297 = vmatpush1.bf16.msra.mxu0 0
    %2298 = vmatprep.subr.bf16.mxu0 0
    %2299 = vmatpush1.bf16.msra.mxu0 0
    %2300 = vmatprep.subr.bf16.mxu0 0
    %2301 = vmatpush1.bf16.msra.mxu0 0
    %2302 = vmatprep.subr.bf16.mxu0 0
    %2303 = vmatpush1.bf16.msra.mxu0 0
    %2304 = vmatprep.subr.bf16.mxu0 0
    %2305 = vmatpush1.bf16.msra.mxu0 0
    %2306 = vmatprep.mubr.bf16.mxu0 0
    %2307 = vmatmul.mubr.bf16.gmra.mrb[0].mxu0 %v2263
    %v2308 = vpop.f32.mrb[0].mxu0
    %v2309 = vadd.f32 %v2236, %v2308
    %v2310 = vpop.f32.mrb[0].mxu0
    %v2311 = vpop.f32.mrb[0].mxu0
    %v2312 = vadd.f32 %v2236, %v2311
    %v2313 = vpop.f32.mrb[0].mxu0
    %2314 = vmatprep.mubr.bf16.mxu0 0
    %2315 = vmatmul.mubr.bf16.gmra.mrb[0].mxu0 %v2266
    %v2316 = vpop.f32.mrb[0].mxu0
    %v2317 = vadd.f32 %v2236, %v2316
    %v2318 = vpop.f32.mrb[0].mxu0
    %v2319 = vpop.f32.mrb[0].mxu0
    %v2320 = vadd.f32 %v2236, %v2319
    %v2321 = vpop.f32.mrb[0].mxu0
    %2322 = vmatprep.mubr.bf16.mxu0 0
    %2323 = vmatmul.mubr.bf16.gmra.mrb[0].mxu0 %v2269
    %v2324 = vpop.f32.mrb[0].mxu0
    %v2325 = vadd.f32 %v2236, %v2324
    %v2326 = vpop.f32.mrb[0].mxu0
    %v2327 = vpop.f32.mrb[0].mxu0
    %v2328 = vadd.f32 %v2236, %v2327
    %v2329 = vpop.f32.mrb[0].mxu0
    %2330 = vmatprep.mubr.bf16.mxu0 0
    %2331 = vmatmul.mubr.bf16.gmra.mrb[0].mxu0 %v2272
    %v2332 = vpop.f32.mrb[0].mxu0
    %v2333 = vadd.f32 %v2236, %v2332
    %v2334 = vpop.f32.mrb[0].mxu0
    %v2335 = vpop.f32.mrb[0].mxu0
    %v2336 = vadd.f32 %v2236, %v2335
    %v2337 = vpop.f32.mrb[0].mxu0
    %2338 = vdwg.mxu0
    %v2339 = vld [vmem:[%s11] sm:$0xf]
    %v2340 = vld [vmem:[%s11 + $0x4] sm:$0xf]
    %v2341 = vld [vmem:[%s11 + $0x8] sm:$0xf]
    %v2342 = vld [vmem:[%s11 + $0xc] sm:$0xf]
    %v2343 = vadd.f32 %v2309, %v2309
    %v2344 = vsel %vm957, %v2343, %v2309
    %v2345 = vxor.u32 %v2344, 2147483648
    %v2346 = vmul.f32 %v2345, 1.442695
    %v2347 = vpow.pop %v2346
    %v2348 = vadd.f32 %v2347, 1.0
    %v2349 = vrcp.pop %v2348
    %v2350 = vmul.f32 1.0, %v2349
    %v2351 = vadd.f32 %v2350, %v2350
    %v2352 = vsub.f32 %v2351, 1.0
    %v2353 = vsel %vm957, %v2352, %v2350
    %v2354 = vmul.f32 %v2353, 0.0
    %2356 = vrot.lane.b32.xlu0 %v2353, 64
    %v2357 = vpop.permute.xlu0 %2356
    %v2359 = vmul.f32 %v2353, %v2357
    %2361 = vrot.lane.b32.xlu0 %v2359, 32
    %v2362 = vpop.permute.xlu0 %2361
    %v2364 = vadd.f32 %v2354, %v2362
    %v2365 = vtanh.pop %v2364
    %2367 = vrot.lane.b32.xlu0 %v2365, 64
    %v2368 = vpop.permute.xlu0 %2367
    %v2370 = vmul.f32 %v2353, %v2368
    %v2371 = vpack.c.bf16 %v2370, %v2370
    %2373 = vrot.lane.b32.xlu0 %v2371, 32
    %v2374 = vpop.permute.xlu0 %2373
    %v2379 = vunpack.c.l.b16 %v2339
    %v2380 = vunpack.c.l.b16 %v2340
    %v2381 = vunpack.c.l.b16 %v2341
    %v2382 = vunpack.c.l.b16 %v2342
    %v2383 = vpack.c.b16 %v2380, %v2379
    %v2384 = vpack.c.b16 %v2382, %v2381
    %v2388 = vsel %vm1002, %v2374, 0
    %2390 = vmatprep.subr.bf16.mxu0 0
    %2391 = vmatpush1.bf16.msra.mxu0 %v2383
    %2392 = vmatprep.subr.bf16.mxu0 0
    %2393 = vmatpush1.bf16.msra.mxu0 %v2384
    %2394 = vmatprep.subr.bf16.mxu0 0
    %2395 = vmatpush1.bf16.msra.mxu0 0
    %2396 = vmatprep.subr.bf16.mxu0 0
    %2397 = vmatpush1.bf16.msra.mxu0 0
    %2398 = vmatprep.subr.bf16.mxu0 0
    %2399 = vmatpush1.bf16.msra.mxu0 0
    %2400 = vmatprep.subr.bf16.mxu0 0
    %2401 = vmatpush1.bf16.msra.mxu0 0
    %2402 = vmatprep.subr.bf16.mxu0 0
    %2403 = vmatpush1.bf16.msra.mxu0 0
    %2404 = vmatprep.subr.bf16.mxu0 0
    %2405 = vmatpush1.bf16.msra.mxu0 0
    %2406 = vmatprep.subr.bf16.mxu0 0
    %2407 = vmatpush1.bf16.msra.mxu0 0
    %2408 = vmatprep.subr.bf16.mxu0 0
    %2409 = vmatpush1.bf16.msra.mxu0 0
    %2410 = vmatprep.subr.bf16.mxu0 0
    %2411 = vmatpush1.bf16.msra.mxu0 0
    %2412 = vmatprep.subr.bf16.mxu0 0
    %2413 = vmatpush1.bf16.msra.mxu0 0
    %2414 = vmatprep.subr.bf16.mxu0 0
    %2415 = vmatpush1.bf16.msra.mxu0 0
    %2416 = vmatprep.subr.bf16.mxu0 0
    %2417 = vmatpush1.bf16.msra.mxu0 0
    %2418 = vmatprep.subr.bf16.mxu0 0
    %2419 = vmatpush1.bf16.msra.mxu0 0
    %2420 = vmatprep.subr.bf16.mxu0 0
    %2421 = vmatpush1.bf16.msra.mxu0 0
    %2422 = vmatprep.mubr.bf16.mxu0 0
    %2423 = vmatmul.mubr.bf16.gmra.mrb[0].mxu0 %v2388
    %v2424 = vpop.f32.mrb[0].mxu0
    %v2425 = vadd.f32 0.0, %v2424
    %v2426 = vpop.f32.mrb[0].mxu0
    %v2427 = vpop.f32.mrb[0].mxu0
    %v2428 = vpop.f32.mrb[0].mxu0
    %2429 = vdwg.mxu0
    %v2430 = vadd.f32 %v2312, %v2425
    %v2431 = vadd.f32 %v2430, %v2430
    %v2432 = vsel %vm957, %v2431, %v2430
    %v2433 = vxor.u32 %v2432, 2147483648
    %v2434 = vmul.f32 %v2433, 1.442695
    %v2435 = vpow.pop %v2434
    %v2436 = vadd.f32 %v2435, 1.0
    %v2437 = vrcp.pop %v2436
    %v2438 = vmul.f32 1.0, %v2437
    %v2439 = vadd.f32 %v2438, %v2438
    %v2440 = vsub.f32 %v2439, 1.0
    %v2441 = vsel %vm957, %v2440, %v2438
    %v2442 = vmul.f32 %v2441, %v2364
    %2444 = vrot.lane.b32.xlu0 %v2441, 64
    %v2445 = vpop.permute.xlu0 %2444
    %v2447 = vmul.f32 %v2441, %v2445
    %2449 = vrot.lane.b32.xlu0 %v2447, 32
    %v2450 = vpop.permute.xlu0 %2449
    %v2452 = vadd.f32 %v2442, %v2450
    %v2453 = vtanh.pop %v2452
    %2455 = vrot.lane.b32.xlu0 %v2453, 64
    %v2456 = vpop.permute.xlu0 %2455
    %v2458 = vmul.f32 %v2441, %v2456
    %v2459 = vpack.c.bf16 %v2458, %v2458
    %2461 = vrot.lane.b32.xlu0 %v2459, 32
    %v2462 = vpop.permute.xlu0 %2461
    %v2464 = vsel %vm1002, %v2462, 0
    %2466 = vmatprep.subr.bf16.mxu0 0
    %2467 = vmatpush1.bf16.msra.mxu0 %v2383
    %2468 = vmatprep.subr.bf16.mxu0 0
    %2469 = vmatpush1.bf16.msra.mxu0 %v2384
    %2470 = vmatprep.subr.bf16.mxu0 0
    %2471 = vmatpush1.bf16.msra.mxu0 0
    %2472 = vmatprep.subr.bf16.mxu0 0
    %2473 = vmatpush1.bf16.msra.mxu0 0
    %2474 = vmatprep.subr.bf16.mxu0 0
    %2475 = vmatpush1.bf16.msra.mxu0 0
    %2476 = vmatprep.subr.bf16.mxu0 0
    %2477 = vmatpush1.bf16.msra.mxu0 0
    %2478 = vmatprep.subr.bf16.mxu0 0
    %2479 = vmatpush1.bf16.msra.mxu0 0
    %2480 = vmatprep.subr.bf16.mxu0 0
    %2481 = vmatpush1.bf16.msra.mxu0 0
    %2482 = vmatprep.subr.bf16.mxu0 0
    %2483 = vmatpush1.bf16.msra.mxu0 0
    %2484 = vmatprep.subr.bf16.mxu0 0
    %2485 = vmatpush1.bf16.msra.mxu0 0
    %2486 = vmatprep.subr.bf16.mxu0 0
    %2487 = vmatpush1.bf16.msra.mxu0 0
    %2488 = vmatprep.subr.bf16.mxu0 0
    %2489 = vmatpush1.bf16.msra.mxu0 0
    %2490 = vmatprep.subr.bf16.mxu0 0
    %2491 = vmatpush1.bf16.msra.mxu0 0
    %2492 = vmatprep.subr.bf16.mxu0 0
    %2493 = vmatpush1.bf16.msra.mxu0 0
    %2494 = vmatprep.subr.bf16.mxu0 0
    %2495 = vmatpush1.bf16.msra.mxu0 0
    %2496 = vmatprep.subr.bf16.mxu0 0
    %2497 = vmatpush1.bf16.msra.mxu0 0
    %2498 = vmatprep.mubr.bf16.mxu0 0
    %2499 = vmatmul.mubr.bf16.gmra.mrb[0].mxu0 %v2464
    %v2500 = vpop.f32.mrb[0].mxu0
    %v2501 = vadd.f32 0.0, %v2500
    %v2502 = vpop.f32.mrb[0].mxu0
    %v2503 = vpop.f32.mrb[0].mxu0
    %v2504 = vpop.f32.mrb[0].mxu0
    %2505 = vdwg.mxu0
    %v2506 = vadd.f32 %v2317, %v2501
    %v2507 = vadd.f32 %v2506, %v2506
    %v2508 = vsel %vm957, %v2507, %v2506
    %v2509 = vxor.u32 %v2508, 2147483648
    %v2510 = vmul.f32 %v2509, 1.442695
    %v2511 = vpow.pop %v2510
    %v2512 = vadd.f32 %v2511, 1.0
    %v2513 = vrcp.pop %v2512
    %v2514 = vmul.f32 1.0, %v2513
    %v2515 = vadd.f32 %v2514, %v2514
    %v2516 = vsub.f32 %v2515, 1.0
    %v2517 = vsel %vm957, %v2516, %v2514
    %v2518 = vmul.f32 %v2517, %v2452
    %2520 = vrot.lane.b32.xlu0 %v2517, 64
    %v2521 = vpop.permute.xlu0 %2520
    %v2523 = vmul.f32 %v2517, %v2521
    %2525 = vrot.lane.b32.xlu0 %v2523, 32
    %v2526 = vpop.permute.xlu0 %2525
    %v2528 = vadd.f32 %v2518, %v2526
    %v2529 = vtanh.pop %v2528
    %2531 = vrot.lane.b32.xlu0 %v2529, 64
    %v2532 = vpop.permute.xlu0 %2531
    %v2534 = vmul.f32 %v2517, %v2532
    %v2535 = vpack.c.bf16 %v2534, %v2534
    %2537 = vrot.lane.b32.xlu0 %v2535, 32
    %v2538 = vpop.permute.xlu0 %2537
    %v2540 = vsel %vm1002, %v2538, 0
    %2542 = vmatprep.subr.bf16.mxu0 0
    %2543 = vmatpush1.bf16.msra.mxu0 %v2383
    %2544 = vmatprep.subr.bf16.mxu0 0
    %2545 = vmatpush1.bf16.msra.mxu0 %v2384
    %2546 = vmatprep.subr.bf16.mxu0 0
    %2547 = vmatpush1.bf16.msra.mxu0 0
    %2548 = vmatprep.subr.bf16.mxu0 0
    %2549 = vmatpush1.bf16.msra.mxu0 0
    %2550 = vmatprep.subr.bf16.mxu0 0
    %2551 = vmatpush1.bf16.msra.mxu0 0
    %2552 = vmatprep.subr.bf16.mxu0 0
    %2553 = vmatpush1.bf16.msra.mxu0 0
    %2554 = vmatprep.subr.bf16.mxu0 0
    %2555 = vmatpush1.bf16.msra.mxu0 0
    %2556 = vmatprep.subr.bf16.mxu0 0
    %2557 = vmatpush1.bf16.msra.mxu0 0
    %2558 = vmatprep.subr.bf16.mxu0 0
    %2559 = vmatpush1.bf16.msra.mxu0 0
    %2560 = vmatprep.subr.bf16.mxu0 0
    %2561 = vmatpush1.bf16.msra.mxu0 0
    %2562 = vmatprep.subr.bf16.mxu0 0
    %2563 = vmatpush1.bf16.msra.mxu0 0
    %2564 = vmatprep.subr.bf16.mxu0 0
    %2565 = vmatpush1.bf16.msra.mxu0 0
    %2566 = vmatprep.subr.bf16.mxu0 0
    %2567 = vmatpush1.bf16.msra.mxu0 0
    %2568 = vmatprep.subr.bf16.mxu0 0
    %2569 = vmatpush1.bf16.msra.mxu0 0
    %2570 = vmatprep.subr.bf16.mxu0 0
    %2571 = vmatpush1.bf16.msra.mxu0 0
    %2572 = vmatprep.subr.bf16.mxu0 0
    %2573 = vmatpush1.bf16.msra.mxu0 0
    %2574 = vmatprep.mubr.bf16.mxu0 0
    %2575 = vmatmul.mubr.bf16.gmra.mrb[0].mxu0 %v2540
    %v2576 = vpop.f32.mrb[0].mxu0
    %v2577 = vadd.f32 0.0, %v2576
    %v2578 = vpop.f32.mrb[0].mxu0
    %v2579 = vpop.f32.mrb[0].mxu0
    %v2580 = vpop.f32.mrb[0].mxu0
    %2581 = vdwg.mxu0
    %v2582 = vadd.f32 %v2320, %v2577
    %v2583 = vadd.f32 %v2582, %v2582
    %v2584 = vsel %vm957, %v2583, %v2582
    %v2585 = vxor.u32 %v2584, 2147483648
    %v2586 = vmul.f32 %v2585, 1.442695
    %v2587 = vpow.pop %v2586
    %v2588 = vadd.f32 %v2587, 1.0
    %v2589 = vrcp.pop %v2588
    %v2590 = vmul.f32 1.0, %v2589
    %v2591 = vadd.f32 %v2590, %v2590
    %v2592 = vsub.f32 %v2591, 1.0
    %v2593 = vsel %vm957, %v2592, %v2590
    %v2594 = vmul.f32 %v2593, %v2528
    %2596 = vrot.lane.b32.xlu0 %v2593, 64
    %v2597 = vpop.permute.xlu0 %2596
    %v2599 = vmul.f32 %v2593, %v2597
    %2601 = vrot.lane.b32.xlu0 %v2599, 32
    %v2602 = vpop.permute.xlu0 %2601
    %v2604 = vadd.f32 %v2594, %v2602
    %v2605 = vtanh.pop %v2604
    %2607 = vrot.lane.b32.xlu0 %v2605, 64
    %v2608 = vpop.permute.xlu0 %2607
    %v2610 = vmul.f32 %v2593, %v2608
    %v2611 = vpack.c.bf16 %v2610, %v2610
    %2613 = vrot.lane.b32.xlu0 %v2611, 32
    %v2614 = vpop.permute.xlu0 %2613
    %v2616 = vsel %vm1002, %v2614, 0
    %2618 = vmatprep.subr.bf16.mxu0 0
    %2619 = vmatpush1.bf16.msra.mxu0 %v2383
    %2620 = vmatprep.subr.bf16.mxu0 0
    %2621 = vmatpush1.bf16.msra.mxu0 %v2384
    %2622 = vmatprep.subr.bf16.mxu0 0
    %2623 = vmatpush1.bf16.msra.mxu0 0
    %2624 = vmatprep.subr.bf16.mxu0 0
    %2625 = vmatpush1.bf16.msra.mxu0 0
    %2626 = vmatprep.subr.bf16.mxu0 0
    %2627 = vmatpush1.bf16.msra.mxu0 0
    %2628 = vmatprep.subr.bf16.mxu0 0
    %2629 = vmatpush1.bf16.msra.mxu0 0
    %2630 = vmatprep.subr.bf16.mxu0 0
    %2631 = vmatpush1.bf16.msra.mxu0 0
    %2632 = vmatprep.subr.bf16.mxu0 0
    %2633 = vmatpush1.bf16.msra.mxu0 0
    %2634 = vmatprep.subr.bf16.mxu0 0
    %2635 = vmatpush1.bf16.msra.mxu0 0
    %2636 = vmatprep.subr.bf16.mxu0 0
    %2637 = vmatpush1.bf16.msra.mxu0 0
    %2638 = vmatprep.subr.bf16.mxu0 0
    %2639 = vmatpush1.bf16.msra.mxu0 0
    %2640 = vmatprep.subr.bf16.mxu0 0
    %2641 = vmatpush1.bf16.msra.mxu0 0
    %2642 = vmatprep.subr.bf16.mxu0 0
    %2643 = vmatpush1.bf16.msra.mxu0 0
    %2644 = vmatprep.subr.bf16.mxu0 0
    %2645 = vmatpush1.bf16.msra.mxu0 0
    %2646 = vmatprep.subr.bf16.mxu0 0
    %2647 = vmatpush1.bf16.msra.mxu0 0
    %2648 = vmatprep.subr.bf16.mxu0 0
    %2649 = vmatpush1.bf16.msra.mxu0 0
    %2650 = vmatprep.mubr.bf16.mxu0 0
    %2651 = vmatmul.mubr.bf16.gmra.mrb[0].mxu0 %v2616
    %v2652 = vpop.f32.mrb[0].mxu0
    %v2653 = vadd.f32 0.0, %v2652
    %v2654 = vpop.f32.mrb[0].mxu0
    %v2655 = vpop.f32.mrb[0].mxu0
    %v2656 = vpop.f32.mrb[0].mxu0
    %2657 = vdwg.mxu0
    %v2658 = vadd.f32 %v2325, %v2653
    %v2659 = vadd.f32 %v2658, %v2658
    %v2660 = vsel %vm957, %v2659, %v2658
    %v2661 = vxor.u32 %v2660, 2147483648
    %v2662 = vmul.f32 %v2661, 1.442695
    %v2663 = vpow.pop %v2662
    %v2664 = vadd.f32 %v2663, 1.0
    %v2665 = vrcp.pop %v2664
    %v2666 = vmul.f32 1.0, %v2665
    %v2667 = vadd.f32 %v2666, %v2666
    %v2668 = vsub.f32 %v2667, 1.0
    %v2669 = vsel %vm957, %v2668, %v2666
    %v2670 = vmul.f32 %v2669, %v2604
    %2672 = vrot.lane.b32.xlu0 %v2669, 64
    %v2673 = vpop.permute.xlu0 %2672
    %v2675 = vmul.f32 %v2669, %v2673
    %2677 = vrot.lane.b32.xlu0 %v2675, 32
    %v2678 = vpop.permute.xlu0 %2677
    %v2680 = vadd.f32 %v2670, %v2678
    %v2681 = vtanh.pop %v2680
    %2683 = vrot.lane.b32.xlu0 %v2681, 64
    %v2684 = vpop.permute.xlu0 %2683
    %v2686 = vmul.f32 %v2669, %v2684
    %v2687 = vpack.c.bf16 %v2686, %v2686
    %2689 = vrot.lane.b32.xlu0 %v2687, 32
    %v2690 = vpop.permute.xlu0 %2689
    %v2692 = vsel %vm1002, %v2690, 0
    %2694 = vmatprep.subr.bf16.mxu0 0
    %2695 = vmatpush1.bf16.msra.mxu0 %v2383
    %2696 = vmatprep.subr.bf16.mxu0 0
    %2697 = vmatpush1.bf16.msra.mxu0 %v2384
    %2698 = vmatprep.subr.bf16.mxu0 0
    %2699 = vmatpush1.bf16.msra.mxu0 0
    %2700 = vmatprep.subr.bf16.mxu0 0
    %2701 = vmatpush1.bf16.msra.mxu0 0
    %2702 = vmatprep.subr.bf16.mxu0 0
    %2703 = vmatpush1.bf16.msra.mxu0 0
    %2704 = vmatprep.subr.bf16.mxu0 0
    %2705 = vmatpush1.bf16.msra.mxu0 0
    %2706 = vmatprep.subr.bf16.mxu0 0
    %2707 = vmatpush1.bf16.msra.mxu0 0
    %2708 = vmatprep.subr.bf16.mxu0 0
    %2709 = vmatpush1.bf16.msra.mxu0 0
    %2710 = vmatprep.subr.bf16.mxu0 0
    %2711 = vmatpush1.bf16.msra.mxu0 0
    %2712 = vmatprep.subr.bf16.mxu0 0
    %2713 = vmatpush1.bf16.msra.mxu0 0
    %2714 = vmatprep.subr.bf16.mxu0 0
    %2715 = vmatpush1.bf16.msra.mxu0 0
    %2716 = vmatprep.subr.bf16.mxu0 0
    %2717 = vmatpush1.bf16.msra.mxu0 0
    %2718 = vmatprep.subr.bf16.mxu0 0
    %2719 = vmatpush1.bf16.msra.mxu0 0
    %2720 = vmatprep.subr.bf16.mxu0 0
    %2721 = vmatpush1.bf16.msra.mxu0 0
    %2722 = vmatprep.subr.bf16.mxu0 0
    %2723 = vmatpush1.bf16.msra.mxu0 0
    %2724 = vmatprep.subr.bf16.mxu0 0
    %2725 = vmatpush1.bf16.msra.mxu0 0
    %2726 = vmatprep.mubr.bf16.mxu0 0
    %2727 = vmatmul.mubr.bf16.gmra.mrb[0].mxu0 %v2692
    %v2728 = vpop.f32.mrb[0].mxu0
    %v2729 = vadd.f32 0.0, %v2728
    %v2730 = vpop.f32.mrb[0].mxu0
    %v2731 = vpop.f32.mrb[0].mxu0
    %v2732 = vpop.f32.mrb[0].mxu0
    %2733 = vdwg.mxu0
    %v2734 = vadd.f32 %v2328, %v2729
    %v2735 = vadd.f32 %v2734, %v2734
    %v2736 = vsel %vm957, %v2735, %v2734
    %v2737 = vxor.u32 %v2736, 2147483648
    %v2738 = vmul.f32 %v2737, 1.442695
    %v2739 = vpow.pop %v2738
    %v2740 = vadd.f32 %v2739, 1.0
    %v2741 = vrcp.pop %v2740
    %v2742 = vmul.f32 1.0, %v2741
    %v2743 = vadd.f32 %v2742, %v2742
    %v2744 = vsub.f32 %v2743, 1.0
    %v2745 = vsel %vm957, %v2744, %v2742
    %v2746 = vmul.f32 %v2745, %v2680
    %2748 = vrot.lane.b32.xlu0 %v2745, 64
    %v2749 = vpop.permute.xlu0 %2748
    %v2751 = vmul.f32 %v2745, %v2749
    %2753 = vrot.lane.b32.xlu0 %v2751, 32
    %v2754 = vpop.permute.xlu0 %2753
    %v2756 = vadd.f32 %v2746, %v2754
    %v2757 = vtanh.pop %v2756
    %2759 = vrot.lane.b32.xlu0 %v2757, 64
    %v2760 = vpop.permute.xlu0 %2759
    %v2762 = vmul.f32 %v2745, %v2760
    %v2763 = vpack.c.bf16 %v2762, %v2762
    %2765 = vrot.lane.b32.xlu0 %v2763, 32
    %v2766 = vpop.permute.xlu0 %2765
    %v2768 = vsel %vm1002, %v2766, 0
    %2770 = vmatprep.subr.bf16.mxu0 0
    %2771 = vmatpush1.bf16.msra.mxu0 %v2383
    %2772 = vmatprep.subr.bf16.mxu0 0
    %2773 = vmatpush1.bf16.msra.mxu0 %v2384
    %2774 = vmatprep.subr.bf16.mxu0 0
    %2775 = vmatpush1.bf16.msra.mxu0 0
    %2776 = vmatprep.subr.bf16.mxu0 0
    %2777 = vmatpush1.bf16.msra.mxu0 0
    %2778 = vmatprep.subr.bf16.mxu0 0
    %2779 = vmatpush1.bf16.msra.mxu0 0
    %2780 = vmatprep.subr.bf16.mxu0 0
    %2781 = vmatpush1.bf16.msra.mxu0 0
    %2782 = vmatprep.subr.bf16.mxu0 0
    %2783 = vmatpush1.bf16.msra.mxu0 0
    %2784 = vmatprep.subr.bf16.mxu0 0
    %2785 = vmatpush1.bf16.msra.mxu0 0
    %2786 = vmatprep.subr.bf16.mxu0 0
    %2787 = vmatpush1.bf16.msra.mxu0 0
    %2788 = vmatprep.subr.bf16.mxu0 0
    %2789 = vmatpush1.bf16.msra.mxu0 0
    %2790 = vmatprep.subr.bf16.mxu0 0
    %2791 = vmatpush1.bf16.msra.mxu0 0
    %2792 = vmatprep.subr.bf16.mxu0 0
    %2793 = vmatpush1.bf16.msra.mxu0 0
    %2794 = vmatprep.subr.bf16.mxu0 0
    %2795 = vmatpush1.bf16.msra.mxu0 0
    %2796 = vmatprep.subr.bf16.mxu0 0
    %2797 = vmatpush1.bf16.msra.mxu0 0
    %2798 = vmatprep.subr.bf16.mxu0 0
    %2799 = vmatpush1.bf16.msra.mxu0 0
    %2800 = vmatprep.subr.bf16.mxu0 0
    %2801 = vmatpush1.bf16.msra.mxu0 0
    %2802 = vmatprep.mubr.bf16.mxu0 0
    %2803 = vmatmul.mubr.bf16.gmra.mrb[0].mxu0 %v2768
    %v2804 = vpop.f32.mrb[0].mxu0
    %v2805 = vadd.f32 0.0, %v2804
    %v2806 = vpop.f32.mrb[0].mxu0
    %v2807 = vpop.f32.mrb[0].mxu0
    %v2808 = vpop.f32.mrb[0].mxu0
    %2809 = vdwg.mxu0
    %v2810 = vadd.f32 %v2333, %v2805
    %v2811 = vadd.f32 %v2810, %v2810
    %v2812 = vsel %vm957, %v2811, %v2810
    %v2813 = vxor.u32 %v2812, 2147483648
    %v2814 = vmul.f32 %v2813, 1.442695
    %v2815 = vpow.pop %v2814
    %v2816 = vadd.f32 %v2815, 1.0
    %v2817 = vrcp.pop %v2816
    %v2818 = vmul.f32 1.0, %v2817
    %v2819 = vadd.f32 %v2818, %v2818
    %v2820 = vsub.f32 %v2819, 1.0
    %v2821 = vsel %vm957, %v2820, %v2818
    %v2822 = vmul.f32 %v2821, %v2756
    %2824 = vrot.lane.b32.xlu0 %v2821, 64
    %v2825 = vpop.permute.xlu0 %2824
    %v2827 = vmul.f32 %v2821, %v2825
    %2829 = vrot.lane.b32.xlu0 %v2827, 32
    %v2830 = vpop.permute.xlu0 %2829
    %v2832 = vadd.f32 %v2822, %v2830
    %v2833 = vtanh.pop %v2832
    %2835 = vrot.lane.b32.xlu0 %v2833, 64
    %v2836 = vpop.permute.xlu0 %2835
    %v2838 = vmul.f32 %v2821, %v2836
    %v2839 = vpack.c.bf16 %v2838, %v2838
    %2841 = vrot.lane.b32.xlu0 %v2839, 32
    %v2842 = vpop.permute.xlu0 %2841
    %v2844 = vsel %vm1002, %v2842, 0
    %2846 = vmatprep.subr.bf16.mxu0 0
    %2847 = vmatpush1.bf16.msra.mxu0 %v2383
    %2848 = vmatprep.subr.bf16.mxu0 0
    %2849 = vmatpush1.bf16.msra.mxu0 %v2384
    %2850 = vmatprep.subr.bf16.mxu0 0
    %2851 = vmatpush1.bf16.msra.mxu0 0
    %2852 = vmatprep.subr.bf16.mxu0 0
    %2853 = vmatpush1.bf16.msra.mxu0 0
    %2854 = vmatprep.subr.bf16.mxu0 0
    %2855 = vmatpush1.bf16.msra.mxu0 0
    %2856 = vmatprep.subr.bf16.mxu0 0
    %2857 = vmatpush1.bf16.msra.mxu0 0
    %2858 = vmatprep.subr.bf16.mxu0 0
    %2859 = vmatpush1.bf16.msra.mxu0 0
    %2860 = vmatprep.subr.bf16.mxu0 0
    %2861 = vmatpush1.bf16.msra.mxu0 0
    %2862 = vmatprep.subr.bf16.mxu0 0
    %2863 = vmatpush1.bf16.msra.mxu0 0
    %2864 = vmatprep.subr.bf16.mxu0 0
    %2865 = vmatpush1.bf16.msra.mxu0 0
    %2866 = vmatprep.subr.bf16.mxu0 0
    %2867 = vmatpush1.bf16.msra.mxu0 0
    %2868 = vmatprep.subr.bf16.mxu0 0
    %2869 = vmatpush1.bf16.msra.mxu0 0
    %2870 = vmatprep.subr.bf16.mxu0 0
    %2871 = vmatpush1.bf16.msra.mxu0 0
    %2872 = vmatprep.subr.bf16.mxu0 0
    %2873 = vmatpush1.bf16.msra.mxu0 0
    %2874 = vmatprep.subr.bf16.mxu0 0
    %2875 = vmatpush1.bf16.msra.mxu0 0
    %2876 = vmatprep.subr.bf16.mxu0 0
    %2877 = vmatpush1.bf16.msra.mxu0 0
    %2878 = vmatprep.mubr.bf16.mxu0 0
    %2879 = vmatmul.mubr.bf16.gmra.mrb[0].mxu0 %v2844
    %v2880 = vpop.f32.mrb[0].mxu0
    %v2881 = vadd.f32 0.0, %v2880
    %v2882 = vpop.f32.mrb[0].mxu0
    %v2883 = vpop.f32.mrb[0].mxu0
    %v2884 = vpop.f32.mrb[0].mxu0
    %2885 = vdwg.mxu0
    %v2886 = vadd.f32 %v2336, %v2881
    %v2887 = vadd.f32 %v2886, %v2886
    %v2888 = vsel %vm957, %v2887, %v2886
    %v2889 = vxor.u32 %v2888, 2147483648
    %v2890 = vmul.f32 %v2889, 1.442695
    %v2891 = vpow.pop %v2890
    %v2892 = vadd.f32 %v2891, 1.0
    %v2893 = vrcp.pop %v2892
    %v2894 = vmul.f32 1.0, %v2893
    %v2895 = vadd.f32 %v2894, %v2894
    %v2896 = vsub.f32 %v2895, 1.0
    %v2897 = vsel %vm957, %v2896, %v2894
    %v2898 = vmul.f32 %v2897, %v2832
    %2900 = vrot.lane.b32.xlu0 %v2897, 64
    %v2901 = vpop.permute.xlu0 %2900
    %v2903 = vmul.f32 %v2897, %v2901
    %2905 = vrot.lane.b32.xlu0 %v2903, 32
    %v2906 = vpop.permute.xlu0 %2905
    %v2908 = vadd.f32 %v2898, %v2906
    %v2909 = vtanh.pop %v2908
    %2911 = vrot.lane.b32.xlu0 %v2909, 64
    %v2912 = vpop.permute.xlu0 %2911
    %v2914 = vmul.f32 %v2897, %v2912
    %v2915 = vpack.c.bf16 %v2458, %v2370
    %v2916 = vpack.c.bf16 %v2610, %v2534
    %v2917 = vpack.c.bf16 %v2762, %v2686
    %v2918 = vpack.c.bf16 %v2914, %v2838
    %v2919 = vld [vmem:[%s13] sm:$0xf]
    %v2920 = vld [vmem:[%s13 + $0x4] sm:$0xf]
    %v2921 = vld [vmem:[%s13 + $0x8] sm:$0xf]
    %v2922 = vld [vmem:[%s13 + $0xc] sm:$0xf]
    %v2923 = vld [vmem:[%s15] sm:$0x1]
    %v2925 = vlaneseq
    %v2926 = vshrl.u32 %v2925, 7
    %v2927 = vsub.s32 0, %v2926
    %v2928 = vrot.slane %v2923, %v2927
    %2934 = vrot.lane.b32.xlu0 %v2915, 32
    %v2935 = vpop.permute.xlu0 %2934
    %2936 = vrot.lane.b32.xlu0 %v2916, 32
    %v2937 = vpop.permute.xlu0 %2936
    %2938 = vrot.lane.b32.xlu0 %v2917, 32
    %v2939 = vpop.permute.xlu0 %2938
    %2940 = vrot.lane.b32.xlu0 %v2918, 32
    %v2941 = vpop.permute.xlu0 %2940
    %v2946 = vunpack.c.l.b16 %v2919
    %v2947 = vunpack.c.l.b16 %v2920
    %v2948 = vunpack.c.l.b16 %v2921
    %v2949 = vunpack.c.l.b16 %v2922
    %v2950 = vpack.c.b16 %v2947, %v2946
    %v2951 = vpack.c.b16 %v2949, %v2948
    %v2955 = vsel %vm1002, %v2935, 0
    %v2958 = vsel %vm1002, %v2937, 0
    %v2961 = vsel %vm1002, %v2939, 0
    %v2964 = vsel %vm1002, %v2941, 0
    %2966 = vmatprep.subr.bf16.mxu0 0
    %2967 = vmatpush1.bf16.msra.mxu0 %v2950
    %2968 = vmatprep.subr.bf16.mxu0 0
    %2969 = vmatpush1.bf16.msra.mxu0 %v2951
    %2970 = vmatprep.subr.bf16.mxu0 0
    %2971 = vmatpush1.bf16.msra.mxu0 0
    %2972 = vmatprep.subr.bf16.mxu0 0
    %2973 = vmatpush1.bf16.msra.mxu0 0
    %2974 = vmatprep.subr.bf16.mxu0 0
    %2975 = vmatpush1.bf16.msra.mxu0 0
    %2976 = vmatprep.subr.bf16.mxu0 0
    %2977 = vmatpush1.bf16.msra.mxu0 0
    %2978 = vmatprep.subr.bf16.mxu0 0
    %2979 = vmatpush1.bf16.msra.mxu0 0
    %2980 = vmatprep.subr.bf16.mxu0 0
    %2981 = vmatpush1.bf16.msra.mxu0 0
    %2982 = vmatprep.subr.bf16.mxu0 0
    %2983 = vmatpush1.bf16.msra.mxu0 0
    %2984 = vmatprep.subr.bf16.mxu0 0
    %2985 = vmatpush1.bf16.msra.mxu0 0
    %2986 = vmatprep.subr.bf16.mxu0 0
    %2987 = vmatpush1.bf16.msra.mxu0 0
    %2988 = vmatprep.subr.bf16.mxu0 0
    %2989 = vmatpush1.bf16.msra.mxu0 0
    %2990 = vmatprep.subr.bf16.mxu0 0
    %2991 = vmatpush1.bf16.msra.mxu0 0
    %2992 = vmatprep.subr.bf16.mxu0 0
    %2993 = vmatpush1.bf16.msra.mxu0 0
    %2994 = vmatprep.subr.bf16.mxu0 0
    %2995 = vmatpush1.bf16.msra.mxu0 0
    %2996 = vmatprep.subr.bf16.mxu0 0
    %2997 = vmatpush1.bf16.msra.mxu0 0
    %2998 = vmatprep.mubr.bf16.mxu0 0
    %2999 = vmatmul.mubr.bf16.gmra.mrb[0].mxu0 %v2955
    %v3000 = vpop.f32.mrb[0].mxu0
    %v3001 = vadd.f32 %v2928, %v3000
    %v3002 = vpop.f32.mrb[0].mxu0
    %v3003 = vpop.f32.mrb[0].mxu0
    %v3004 = vadd.f32 %v2928, %v3003
    %v3005 = vpop.f32.mrb[0].mxu0
    %3006 = vmatprep.mubr.bf16.mxu0 0
    %3007 = vmatmul.mubr.bf16.gmra.mrb[0].mxu0 %v2958
    %v3008 = vpop.f32.mrb[0].mxu0
    %v3009 = vadd.f32 %v2928, %v3008
    %v3010 = vpop.f32.mrb[0].mxu0
    %v3011 = vpop.f32.mrb[0].mxu0
    %v3012 = vadd.f32 %v2928, %v3011
    %v3013 = vpop.f32.mrb[0].mxu0
    %3014 = vmatprep.mubr.bf16.mxu0 0
    %3015 = vmatmul.mubr.bf16.gmra.mrb[0].mxu0 %v2961
    %v3016 = vpop.f32.mrb[0].mxu0
    %v3017 = vadd.f32 %v2928, %v3016
    %v3018 = vpop.f32.mrb[0].mxu0
    %v3019 = vpop.f32.mrb[0].mxu0
    %v3020 = vadd.f32 %v2928, %v3019
    %v3021 = vpop.f32.mrb[0].mxu0
    %3022 = vmatprep.mubr.bf16.mxu0 0
    %3023 = vmatmul.mubr.bf16.gmra.mrb[0].mxu0 %v2964
    %v3024 = vpop.f32.mrb[0].mxu0
    %v3025 = vadd.f32 %v2928, %v3024
    %v3026 = vpop.f32.mrb[0].mxu0
    %v3027 = vpop.f32.mrb[0].mxu0
    %v3028 = vadd.f32 %v2928, %v3027
    %v3029 = vpop.f32.mrb[0].mxu0
    %3030 = vdwg.mxu0
    %v3031 = vld [vmem:[%s14] sm:$0xf]
    %v3032 = vld [vmem:[%s14 + $0x4] sm:$0xf]
    %v3033 = vld [vmem:[%s14 + $0x8] sm:$0xf]
    %v3034 = vld [vmem:[%s14 + $0xc] sm:$0xf]
    %v3035 = vadd.f32 %v3001, %v3001
    %v3036 = vsel %vm957, %v3035, %v3001
    %v3037 = vxor.u32 %v3036, 2147483648
    %v3038 = vmul.f32 %v3037, 1.442695
    %v3039 = vpow.pop %v3038
    %v3040 = vadd.f32 %v3039, 1.0
    %v3041 = vrcp.pop %v3040
    %v3042 = vmul.f32 1.0, %v3041
    %v3043 = vadd.f32 %v3042, %v3042
    %v3044 = vsub.f32 %v3043, 1.0
    %v3045 = vsel %vm957, %v3044, %v3042
    %v3046 = vmul.f32 %v3045, 0.0
    %3048 = vrot.lane.b32.xlu0 %v3045, 64
    %v3049 = vpop.permute.xlu0 %3048
    %v3051 = vmul.f32 %v3045, %v3049
    %3053 = vrot.lane.b32.xlu0 %v3051, 32
    %v3054 = vpop.permute.xlu0 %3053
    %v3056 = vadd.f32 %v3046, %v3054
    %v3057 = vtanh.pop %v3056
    %3059 = vrot.lane.b32.xlu0 %v3057, 64
    %v3060 = vpop.permute.xlu0 %3059
    %v3062 = vmul.f32 %v3045, %v3060
    %v3063 = vpack.c.bf16 %v3062, %v3062
    %3065 = vrot.lane.b32.xlu0 %v3063, 32
    %v3066 = vpop.permute.xlu0 %3065
    %v3071 = vunpack.c.l.b16 %v3031
    %v3072 = vunpack.c.l.b16 %v3032
    %v3073 = vunpack.c.l.b16 %v3033
    %v3074 = vunpack.c.l.b16 %v3034
    %v3075 = vpack.c.b16 %v3072, %v3071
    %v3076 = vpack.c.b16 %v3074, %v3073
    %v3080 = vsel %vm1002, %v3066, 0
    %3082 = vmatprep.subr.bf16.mxu0 0
    %3083 = vmatpush1.bf16.msra.mxu0 %v3075
    %3084 = vmatprep.subr.bf16.mxu0 0
    %3085 = vmatpush1.bf16.msra.mxu0 %v3076
    %3086 = vmatprep.subr.bf16.mxu0 0
    %3087 = vmatpush1.bf16.msra.mxu0 0
    %3088 = vmatprep.subr.bf16.mxu0 0
    %3089 = vmatpush1.bf16.msra.mxu0 0
    %3090 = vmatprep.subr.bf16.mxu0 0
    %3091 = vmatpush1.bf16.msra.mxu0 0
    %3092 = vmatprep.subr.bf16.mxu0 0
    %3093 = vmatpush1.bf16.msra.mxu0 0
    %3094 = vmatprep.subr.bf16.mxu0 0
    %3095 = vmatpush1.bf16.msra.mxu0 0
    %3096 = vmatprep.subr.bf16.mxu0 0
    %3097 = vmatpush1.bf16.msra.mxu0 0
    %3098 = vmatprep.subr.bf16.mxu0 0
    %3099 = vmatpush1.bf16.msra.mxu0 0
    %3100 = vmatprep.subr.bf16.mxu0 0
    %3101 = vmatpush1.bf16.msra.mxu0 0
    %3102 = vmatprep.subr.bf16.mxu0 0
    %3103 = vmatpush1.bf16.msra.mxu0 0
    %3104 = vmatprep.subr.bf16.mxu0 0
    %3105 = vmatpush1.bf16.msra.mxu0 0
    %3106 = vmatprep.subr.bf16.mxu0 0
    %3107 = vmatpush1.bf16.msra.mxu0 0
    %3108 = vmatprep.subr.bf16.mxu0 0
    %3109 = vmatpush1.bf16.msra.mxu0 0
    %3110 = vmatprep.subr.bf16.mxu0 0
    %3111 = vmatpush1.bf16.msra.mxu0 0
    %3112 = vmatprep.subr.bf16.mxu0 0
    %3113 = vmatpush1.bf16.msra.mxu0 0
    %3114 = vmatprep.mubr.bf16.mxu0 0
    %3115 = vmatmul.mubr.bf16.gmra.mrb[0].mxu0 %v3080
    %v3116 = vpop.f32.mrb[0].mxu0
    %v3117 = vadd.f32 0.0, %v3116
    %v3118 = vpop.f32.mrb[0].mxu0
    %v3119 = vpop.f32.mrb[0].mxu0
    %v3120 = vpop.f32.mrb[0].mxu0
    %3121 = vdwg.mxu0
    %v3122 = vadd.f32 %v3004, %v3117
    %v3123 = vadd.f32 %v3122, %v3122
    %v3124 = vsel %vm957, %v3123, %v3122
    %v3125 = vxor.u32 %v3124, 2147483648
    %v3126 = vmul.f32 %v3125, 1.442695
    %v3127 = vpow.pop %v3126
    %v3128 = vadd.f32 %v3127, 1.0
    %v3129 = vrcp.pop %v3128
    %v3130 = vmul.f32 1.0, %v3129
    %v3131 = vadd.f32 %v3130, %v3130
    %v3132 = vsub.f32 %v3131, 1.0
    %v3133 = vsel %vm957, %v3132, %v3130
    %v3134 = vmul.f32 %v3133, %v3056
    %3136 = vrot.lane.b32.xlu0 %v3133, 64
    %v3137 = vpop.permute.xlu0 %3136
    %v3139 = vmul.f32 %v3133, %v3137
    %3141 = vrot.lane.b32.xlu0 %v3139, 32
    %v3142 = vpop.permute.xlu0 %3141
    %v3144 = vadd.f32 %v3134, %v3142
    %v3145 = vtanh.pop %v3144
    %3147 = vrot.lane.b32.xlu0 %v3145, 64
    %v3148 = vpop.permute.xlu0 %3147
    %v3150 = vmul.f32 %v3133, %v3148
    %v3151 = vpack.c.bf16 %v3150, %v3150
    %3153 = vrot.lane.b32.xlu0 %v3151, 32
    %v3154 = vpop.permute.xlu0 %3153
    %v3156 = vsel %vm1002, %v3154, 0
    %3158 = vmatprep.subr.bf16.mxu0 0
    %3159 = vmatpush1.bf16.msra.mxu0 %v3075
    %3160 = vmatprep.subr.bf16.mxu0 0
    %3161 = vmatpush1.bf16.msra.mxu0 %v3076
    %3162 = vmatprep.subr.bf16.mxu0 0
    %3163 = vmatpush1.bf16.msra.mxu0 0
    %3164 = vmatprep.subr.bf16.mxu0 0
    %3165 = vmatpush1.bf16.msra.mxu0 0
    %3166 = vmatprep.subr.bf16.mxu0 0
    %3167 = vmatpush1.bf16.msra.mxu0 0
    %3168 = vmatprep.subr.bf16.mxu0 0
    %3169 = vmatpush1.bf16.msra.mxu0 0
    %3170 = vmatprep.subr.bf16.mxu0 0
    %3171 = vmatpush1.bf16.msra.mxu0 0
    %3172 = vmatprep.subr.bf16.mxu0 0
    %3173 = vmatpush1.bf16.msra.mxu0 0
    %3174 = vmatprep.subr.bf16.mxu0 0
    %3175 = vmatpush1.bf16.msra.mxu0 0
    %3176 = vmatprep.subr.bf16.mxu0 0
    %3177 = vmatpush1.bf16.msra.mxu0 0
    %3178 = vmatprep.subr.bf16.mxu0 0
    %3179 = vmatpush1.bf16.msra.mxu0 0
    %3180 = vmatprep.subr.bf16.mxu0 0
    %3181 = vmatpush1.bf16.msra.mxu0 0
    %3182 = vmatprep.subr.bf16.mxu0 0
    %3183 = vmatpush1.bf16.msra.mxu0 0
    %3184 = vmatprep.subr.bf16.mxu0 0
    %3185 = vmatpush1.bf16.msra.mxu0 0
    %3186 = vmatprep.subr.bf16.mxu0 0
    %3187 = vmatpush1.bf16.msra.mxu0 0
    %3188 = vmatprep.subr.bf16.mxu0 0
    %3189 = vmatpush1.bf16.msra.mxu0 0
    %3190 = vmatprep.mubr.bf16.mxu0 0
    %3191 = vmatmul.mubr.bf16.gmra.mrb[0].mxu0 %v3156
    %v3192 = vpop.f32.mrb[0].mxu0
    %v3193 = vadd.f32 0.0, %v3192
    %v3194 = vpop.f32.mrb[0].mxu0
    %v3195 = vpop.f32.mrb[0].mxu0
    %v3196 = vpop.f32.mrb[0].mxu0
    %3197 = vdwg.mxu0
    %v3198 = vadd.f32 %v3009, %v3193
    %v3199 = vadd.f32 %v3198, %v3198
    %v3200 = vsel %vm957, %v3199, %v3198
    %v3201 = vxor.u32 %v3200, 2147483648
    %v3202 = vmul.f32 %v3201, 1.442695
    %v3203 = vpow.pop %v3202
    %v3204 = vadd.f32 %v3203, 1.0
    %v3205 = vrcp.pop %v3204
    %v3206 = vmul.f32 1.0, %v3205
    %v3207 = vadd.f32 %v3206, %v3206
    %v3208 = vsub.f32 %v3207, 1.0
    %v3209 = vsel %vm957, %v3208, %v3206
    %v3210 = vmul.f32 %v3209, %v3144
    %3212 = vrot.lane.b32.xlu0 %v3209, 64
    %v3213 = vpop.permute.xlu0 %3212
    %v3215 = vmul.f32 %v3209, %v3213
    %3217 = vrot.lane.b32.xlu0 %v3215, 32
    %v3218 = vpop.permute.xlu0 %3217
    %v3220 = vadd.f32 %v3210, %v3218
    %v3221 = vtanh.pop %v3220
    %3223 = vrot.lane.b32.xlu0 %v3221, 64
    %v3224 = vpop.permute.xlu0 %3223
    %v3226 = vmul.f32 %v3209, %v3224
    %v3227 = vpack.c.bf16 %v3226, %v3226
    %3229 = vrot.lane.b32.xlu0 %v3227, 32
    %v3230 = vpop.permute.xlu0 %3229
    %v3232 = vsel %vm1002, %v3230, 0
    %3234 = vmatprep.subr.bf16.mxu0 0
    %3235 = vmatpush1.bf16.msra.mxu0 %v3075
    %3236 = vmatprep.subr.bf16.mxu0 0
    %3237 = vmatpush1.bf16.msra.mxu0 %v3076
    %3238 = vmatprep.subr.bf16.mxu0 0
    %3239 = vmatpush1.bf16.msra.mxu0 0
    %3240 = vmatprep.subr.bf16.mxu0 0
    %3241 = vmatpush1.bf16.msra.mxu0 0
    %3242 = vmatprep.subr.bf16.mxu0 0
    %3243 = vmatpush1.bf16.msra.mxu0 0
    %3244 = vmatprep.subr.bf16.mxu0 0
    %3245 = vmatpush1.bf16.msra.mxu0 0
    %3246 = vmatprep.subr.bf16.mxu0 0
    %3247 = vmatpush1.bf16.msra.mxu0 0
    %3248 = vmatprep.subr.bf16.mxu0 0
    %3249 = vmatpush1.bf16.msra.mxu0 0
    %3250 = vmatprep.subr.bf16.mxu0 0
    %3251 = vmatpush1.bf16.msra.mxu0 0
    %3252 = vmatprep.subr.bf16.mxu0 0
    %3253 = vmatpush1.bf16.msra.mxu0 0
    %3254 = vmatprep.subr.bf16.mxu0 0
    %3255 = vmatpush1.bf16.msra.mxu0 0
    %3256 = vmatprep.subr.bf16.mxu0 0
    %3257 = vmatpush1.bf16.msra.mxu0 0
    %3258 = vmatprep.subr.bf16.mxu0 0
    %3259 = vmatpush1.bf16.msra.mxu0 0
    %3260 = vmatprep.subr.bf16.mxu0 0
    %3261 = vmatpush1.bf16.msra.mxu0 0
    %3262 = vmatprep.subr.bf16.mxu0 0
    %3263 = vmatpush1.bf16.msra.mxu0 0
    %3264 = vmatprep.subr.bf16.mxu0 0
    %3265 = vmatpush1.bf16.msra.mxu0 0
    %3266 = vmatprep.mubr.bf16.mxu0 0
    %3267 = vmatmul.mubr.bf16.gmra.mrb[0].mxu0 %v3232
    %v3268 = vpop.f32.mrb[0].mxu0
    %v3269 = vadd.f32 0.0, %v3268
    %v3270 = vpop.f32.mrb[0].mxu0
    %v3271 = vpop.f32.mrb[0].mxu0
    %v3272 = vpop.f32.mrb[0].mxu0
    %3273 = vdwg.mxu0
    %v3274 = vadd.f32 %v3012, %v3269
    %v3275 = vadd.f32 %v3274, %v3274
    %v3276 = vsel %vm957, %v3275, %v3274
    %v3277 = vxor.u32 %v3276, 2147483648
    %v3278 = vmul.f32 %v3277, 1.442695
    %v3279 = vpow.pop %v3278
    %v3280 = vadd.f32 %v3279, 1.0
    %v3281 = vrcp.pop %v3280
    %v3282 = vmul.f32 1.0, %v3281
    %v3283 = vadd.f32 %v3282, %v3282
    %v3284 = vsub.f32 %v3283, 1.0
    %v3285 = vsel %vm957, %v3284, %v3282
    %v3286 = vmul.f32 %v3285, %v3220
    %3288 = vrot.lane.b32.xlu0 %v3285, 64
    %v3289 = vpop.permute.xlu0 %3288
    %v3291 = vmul.f32 %v3285, %v3289
    %3293 = vrot.lane.b32.xlu0 %v3291, 32
    %v3294 = vpop.permute.xlu0 %3293
    %v3296 = vadd.f32 %v3286, %v3294
    %v3297 = vtanh.pop %v3296
    %3299 = vrot.lane.b32.xlu0 %v3297, 64
    %v3300 = vpop.permute.xlu0 %3299
    %v3302 = vmul.f32 %v3285, %v3300
    %v3303 = vpack.c.bf16 %v3302, %v3302
    %3305 = vrot.lane.b32.xlu0 %v3303, 32
    %v3306 = vpop.permute.xlu0 %3305
    %v3308 = vsel %vm1002, %v3306, 0
    %3310 = vmatprep.subr.bf16.mxu0 0
    %3311 = vmatpush1.bf16.msra.mxu0 %v3075
    %3312 = vmatprep.subr.bf16.mxu0 0
    %3313 = vmatpush1.bf16.msra.mxu0 %v3076
    %3314 = vmatprep.subr.bf16.mxu0 0
    %3315 = vmatpush1.bf16.msra.mxu0 0
    %3316 = vmatprep.subr.bf16.mxu0 0
    %3317 = vmatpush1.bf16.msra.mxu0 0
    %3318 = vmatprep.subr.bf16.mxu0 0
    %3319 = vmatpush1.bf16.msra.mxu0 0
    %3320 = vmatprep.subr.bf16.mxu0 0
    %3321 = vmatpush1.bf16.msra.mxu0 0
    %3322 = vmatprep.subr.bf16.mxu0 0
    %3323 = vmatpush1.bf16.msra.mxu0 0
    %3324 = vmatprep.subr.bf16.mxu0 0
    %3325 = vmatpush1.bf16.msra.mxu0 0
    %3326 = vmatprep.subr.bf16.mxu0 0
    %3327 = vmatpush1.bf16.msra.mxu0 0
    %3328 = vmatprep.subr.bf16.mxu0 0
    %3329 = vmatpush1.bf16.msra.mxu0 0
    %3330 = vmatprep.subr.bf16.mxu0 0
    %3331 = vmatpush1.bf16.msra.mxu0 0
    %3332 = vmatprep.subr.bf16.mxu0 0
    %3333 = vmatpush1.bf16.msra.mxu0 0
    %3334 = vmatprep.subr.bf16.mxu0 0
    %3335 = vmatpush1.bf16.msra.mxu0 0
    %3336 = vmatprep.subr.bf16.mxu0 0
    %3337 = vmatpush1.bf16.msra.mxu0 0
    %3338 = vmatprep.subr.bf16.mxu0 0
    %3339 = vmatpush1.bf16.msra.mxu0 0
    %3340 = vmatprep.subr.bf16.mxu0 0
    %3341 = vmatpush1.bf16.msra.mxu0 0
    %3342 = vmatprep.mubr.bf16.mxu0 0
    %3343 = vmatmul.mubr.bf16.gmra.mrb[0].mxu0 %v3308
    %v3344 = vpop.f32.mrb[0].mxu0
    %v3345 = vadd.f32 0.0, %v3344
    %v3346 = vpop.f32.mrb[0].mxu0
    %v3347 = vpop.f32.mrb[0].mxu0
    %v3348 = vpop.f32.mrb[0].mxu0
    %3349 = vdwg.mxu0
    %v3350 = vadd.f32 %v3017, %v3345
    %v3351 = vadd.f32 %v3350, %v3350
    %v3352 = vsel %vm957, %v3351, %v3350
    %v3353 = vxor.u32 %v3352, 2147483648
    %v3354 = vmul.f32 %v3353, 1.442695
    %v3355 = vpow.pop %v3354
    %v3356 = vadd.f32 %v3355, 1.0
    %v3357 = vrcp.pop %v3356
    %v3358 = vmul.f32 1.0, %v3357
    %v3359 = vadd.f32 %v3358, %v3358
    %v3360 = vsub.f32 %v3359, 1.0
    %v3361 = vsel %vm957, %v3360, %v3358
    %v3362 = vmul.f32 %v3361, %v3296
    %3364 = vrot.lane.b32.xlu0 %v3361, 64
    %v3365 = vpop.permute.xlu0 %3364
    %v3367 = vmul.f32 %v3361, %v3365
    %3369 = vrot.lane.b32.xlu0 %v3367, 32
    %v3370 = vpop.permute.xlu0 %3369
    %v3372 = vadd.f32 %v3362, %v3370
    %v3373 = vtanh.pop %v3372
    %3375 = vrot.lane.b32.xlu0 %v3373, 64
    %v3376 = vpop.permute.xlu0 %3375
    %v3378 = vmul.f32 %v3361, %v3376
    %v3379 = vpack.c.bf16 %v3378, %v3378
    %3381 = vrot.lane.b32.xlu0 %v3379, 32
    %v3382 = vpop.permute.xlu0 %3381
    %v3384 = vsel %vm1002, %v3382, 0
    %3386 = vmatprep.subr.bf16.mxu0 0
    %3387 = vmatpush1.bf16.msra.mxu0 %v3075
    %3388 = vmatprep.subr.bf16.mxu0 0
    %3389 = vmatpush1.bf16.msra.mxu0 %v3076
    %3390 = vmatprep.subr.bf16.mxu0 0
    %3391 = vmatpush1.bf16.msra.mxu0 0
    %3392 = vmatprep.subr.bf16.mxu0 0
    %3393 = vmatpush1.bf16.msra.mxu0 0
    %3394 = vmatprep.subr.bf16.mxu0 0
    %3395 = vmatpush1.bf16.msra.mxu0 0
    %3396 = vmatprep.subr.bf16.mxu0 0
    %3397 = vmatpush1.bf16.msra.mxu0 0
    %3398 = vmatprep.subr.bf16.mxu0 0
    %3399 = vmatpush1.bf16.msra.mxu0 0
    %3400 = vmatprep.subr.bf16.mxu0 0
    %3401 = vmatpush1.bf16.msra.mxu0 0
    %3402 = vmatprep.subr.bf16.mxu0 0
    %3403 = vmatpush1.bf16.msra.mxu0 0
    %3404 = vmatprep.subr.bf16.mxu0 0
    %3405 = vmatpush1.bf16.msra.mxu0 0
    %3406 = vmatprep.subr.bf16.mxu0 0
    %3407 = vmatpush1.bf16.msra.mxu0 0
    %3408 = vmatprep.subr.bf16.mxu0 0
    %3409 = vmatpush1.bf16.msra.mxu0 0
    %3410 = vmatprep.subr.bf16.mxu0 0
    %3411 = vmatpush1.bf16.msra.mxu0 0
    %3412 = vmatprep.subr.bf16.mxu0 0
    %3413 = vmatpush1.bf16.msra.mxu0 0
    %3414 = vmatprep.subr.bf16.mxu0 0
    %3415 = vmatpush1.bf16.msra.mxu0 0
    %3416 = vmatprep.subr.bf16.mxu0 0
    %3417 = vmatpush1.bf16.msra.mxu0 0
    %3418 = vmatprep.mubr.bf16.mxu0 0
    %3419 = vmatmul.mubr.bf16.gmra.mrb[0].mxu0 %v3384
    %v3420 = vpop.f32.mrb[0].mxu0
    %v3421 = vadd.f32 0.0, %v3420
    %v3422 = vpop.f32.mrb[0].mxu0
    %v3423 = vpop.f32.mrb[0].mxu0
    %v3424 = vpop.f32.mrb[0].mxu0
    %3425 = vdwg.mxu0
    %v3426 = vadd.f32 %v3020, %v3421
    %v3427 = vadd.f32 %v3426, %v3426
    %v3428 = vsel %vm957, %v3427, %v3426
    %v3429 = vxor.u32 %v3428, 2147483648
    %v3430 = vmul.f32 %v3429, 1.442695
    %v3431 = vpow.pop %v3430
    %v3432 = vadd.f32 %v3431, 1.0
    %v3433 = vrcp.pop %v3432
    %v3434 = vmul.f32 1.0, %v3433
    %v3435 = vadd.f32 %v3434, %v3434
    %v3436 = vsub.f32 %v3435, 1.0
    %v3437 = vsel %vm957, %v3436, %v3434
    %v3438 = vmul.f32 %v3437, %v3372
    %3440 = vrot.lane.b32.xlu0 %v3437, 64
    %v3441 = vpop.permute.xlu0 %3440
    %v3443 = vmul.f32 %v3437, %v3441
    %3445 = vrot.lane.b32.xlu0 %v3443, 32
    %v3446 = vpop.permute.xlu0 %3445
    %v3448 = vadd.f32 %v3438, %v3446
    %v3449 = vtanh.pop %v3448
    %3451 = vrot.lane.b32.xlu0 %v3449, 64
    %v3452 = vpop.permute.xlu0 %3451
    %v3454 = vmul.f32 %v3437, %v3452
    %v3455 = vpack.c.bf16 %v3454, %v3454
    %3457 = vrot.lane.b32.xlu0 %v3455, 32
    %v3458 = vpop.permute.xlu0 %3457
    %v3460 = vsel %vm1002, %v3458, 0
    %3462 = vmatprep.subr.bf16.mxu0 0
    %3463 = vmatpush1.bf16.msra.mxu0 %v3075
    %3464 = vmatprep.subr.bf16.mxu0 0
    %3465 = vmatpush1.bf16.msra.mxu0 %v3076
    %3466 = vmatprep.subr.bf16.mxu0 0
    %3467 = vmatpush1.bf16.msra.mxu0 0
    %3468 = vmatprep.subr.bf16.mxu0 0
    %3469 = vmatpush1.bf16.msra.mxu0 0
    %3470 = vmatprep.subr.bf16.mxu0 0
    %3471 = vmatpush1.bf16.msra.mxu0 0
    %3472 = vmatprep.subr.bf16.mxu0 0
    %3473 = vmatpush1.bf16.msra.mxu0 0
    %3474 = vmatprep.subr.bf16.mxu0 0
    %3475 = vmatpush1.bf16.msra.mxu0 0
    %3476 = vmatprep.subr.bf16.mxu0 0
    %3477 = vmatpush1.bf16.msra.mxu0 0
    %3478 = vmatprep.subr.bf16.mxu0 0
    %3479 = vmatpush1.bf16.msra.mxu0 0
    %3480 = vmatprep.subr.bf16.mxu0 0
    %3481 = vmatpush1.bf16.msra.mxu0 0
    %3482 = vmatprep.subr.bf16.mxu0 0
    %3483 = vmatpush1.bf16.msra.mxu0 0
    %3484 = vmatprep.subr.bf16.mxu0 0
    %3485 = vmatpush1.bf16.msra.mxu0 0
    %3486 = vmatprep.subr.bf16.mxu0 0
    %3487 = vmatpush1.bf16.msra.mxu0 0
    %3488 = vmatprep.subr.bf16.mxu0 0
    %3489 = vmatpush1.bf16.msra.mxu0 0
    %3490 = vmatprep.subr.bf16.mxu0 0
    %3491 = vmatpush1.bf16.msra.mxu0 0
    %3492 = vmatprep.subr.bf16.mxu0 0
    %3493 = vmatpush1.bf16.msra.mxu0 0
    %3494 = vmatprep.mubr.bf16.mxu0 0
    %3495 = vmatmul.mubr.bf16.gmra.mrb[0].mxu0 %v3460
    %v3496 = vpop.f32.mrb[0].mxu0
    %v3497 = vadd.f32 0.0, %v3496
    %v3498 = vpop.f32.mrb[0].mxu0
    %v3499 = vpop.f32.mrb[0].mxu0
    %v3500 = vpop.f32.mrb[0].mxu0
    %3501 = vdwg.mxu0
    %v3502 = vadd.f32 %v3025, %v3497
    %v3503 = vadd.f32 %v3502, %v3502
    %v3504 = vsel %vm957, %v3503, %v3502
    %v3505 = vxor.u32 %v3504, 2147483648
    %v3506 = vmul.f32 %v3505, 1.442695
    %v3507 = vpow.pop %v3506
    %v3508 = vadd.f32 %v3507, 1.0
    %v3509 = vrcp.pop %v3508
    %v3510 = vmul.f32 1.0, %v3509
    %v3511 = vadd.f32 %v3510, %v3510
    %v3512 = vsub.f32 %v3511, 1.0
    %v3513 = vsel %vm957, %v3512, %v3510
    %v3514 = vmul.f32 %v3513, %v3448
    %3516 = vrot.lane.b32.xlu0 %v3513, 64
    %v3517 = vpop.permute.xlu0 %3516
    %v3519 = vmul.f32 %v3513, %v3517
    %3521 = vrot.lane.b32.xlu0 %v3519, 32
    %v3522 = vpop.permute.xlu0 %3521
    %v3524 = vadd.f32 %v3514, %v3522
    %v3525 = vtanh.pop %v3524
    %3527 = vrot.lane.b32.xlu0 %v3525, 64
    %v3528 = vpop.permute.xlu0 %3527
    %v3530 = vmul.f32 %v3513, %v3528
    %v3531 = vpack.c.bf16 %v3530, %v3530
    %3533 = vrot.lane.b32.xlu0 %v3531, 32
    %v3534 = vpop.permute.xlu0 %3533
    %v3536 = vsel %vm1002, %v3534, 0
    %3538 = vmatprep.subr.bf16.mxu0 0
    %3539 = vmatpush1.bf16.msra.mxu0 %v3075
    %3540 = vmatprep.subr.bf16.mxu0 0
    %3541 = vmatpush1.bf16.msra.mxu0 %v3076
    %3542 = vmatprep.subr.bf16.mxu0 0
    %3543 = vmatpush1.bf16.msra.mxu0 0
    %3544 = vmatprep.subr.bf16.mxu0 0
    %3545 = vmatpush1.bf16.msra.mxu0 0
    %3546 = vmatprep.subr.bf16.mxu0 0
    %3547 = vmatpush1.bf16.msra.mxu0 0
    %3548 = vmatprep.subr.bf16.mxu0 0
    %3549 = vmatpush1.bf16.msra.mxu0 0
    %3550 = vmatprep.subr.bf16.mxu0 0
    %3551 = vmatpush1.bf16.msra.mxu0 0
    %3552 = vmatprep.subr.bf16.mxu0 0
    %3553 = vmatpush1.bf16.msra.mxu0 0
    %3554 = vmatprep.subr.bf16.mxu0 0
    %3555 = vmatpush1.bf16.msra.mxu0 0
    %3556 = vmatprep.subr.bf16.mxu0 0
    %3557 = vmatpush1.bf16.msra.mxu0 0
    %3558 = vmatprep.subr.bf16.mxu0 0
    %3559 = vmatpush1.bf16.msra.mxu0 0
    %3560 = vmatprep.subr.bf16.mxu0 0
    %3561 = vmatpush1.bf16.msra.mxu0 0
    %3562 = vmatprep.subr.bf16.mxu0 0
    %3563 = vmatpush1.bf16.msra.mxu0 0
    %3564 = vmatprep.subr.bf16.mxu0 0
    %3565 = vmatpush1.bf16.msra.mxu0 0
    %3566 = vmatprep.subr.bf16.mxu0 0
    %3567 = vmatpush1.bf16.msra.mxu0 0
    %3568 = vmatprep.subr.bf16.mxu0 0
    %3569 = vmatpush1.bf16.msra.mxu0 0
    %3570 = vmatprep.mubr.bf16.mxu0 0
    %3571 = vmatmul.mubr.bf16.gmra.mrb[0].mxu0 %v3536
    %v3572 = vpop.f32.mrb[0].mxu0
    %v3573 = vadd.f32 0.0, %v3572
    %v3574 = vpop.f32.mrb[0].mxu0
    %v3575 = vpop.f32.mrb[0].mxu0
    %v3576 = vpop.f32.mrb[0].mxu0
    %3577 = vdwg.mxu0
    %v3578 = vadd.f32 %v3028, %v3573
    %v3579 = vadd.f32 %v3578, %v3578
    %v3580 = vsel %vm957, %v3579, %v3578
    %v3581 = vxor.u32 %v3580, 2147483648
    %v3582 = vmul.f32 %v3581, 1.442695
    %v3583 = vpow.pop %v3582
    %v3584 = vadd.f32 %v3583, 1.0
    %v3585 = vrcp.pop %v3584
    %v3586 = vmul.f32 1.0, %v3585
    %v3587 = vadd.f32 %v3586, %v3586
    %v3588 = vsub.f32 %v3587, 1.0
    %v3589 = vsel %vm957, %v3588, %v3586
    %v3590 = vmul.f32 %v3589, %v3524
    %3592 = vrot.lane.b32.xlu0 %v3589, 64
    %v3593 = vpop.permute.xlu0 %3592
    %v3595 = vmul.f32 %v3589, %v3593
    %3597 = vrot.lane.b32.xlu0 %v3595, 32
    %v3598 = vpop.permute.xlu0 %3597
    %v3600 = vadd.f32 %v3590, %v3598
    %v3601 = vtanh.pop %v3600
    %3603 = vrot.lane.b32.xlu0 %v3601, 64
    %v3604 = vpop.permute.xlu0 %3603
    %v3606 = vmul.f32 %v3589, %v3604
    %v3607 = vpack.c.bf16 %v3606, %v3606
    %v3608 = vld [vmem:[%s16] sm:$0xf]
    %v3609 = vld [vmem:[%s16 + $0x4] sm:$0xf]
    %v3610 = vld [vmem:[%s16 + $0x8] sm:$0xf]
    %v3611 = vld [vmem:[%s16 + $0xc] sm:$0xf]
    %v3612 = vld [vmem:[%s17] sm:$0x1]
    %v3614 = vlaneseq
    %v3615 = vshrl.u32 %v3614, 7
    %v3616 = vsub.s32 0, %v3615
    %v3617 = vrot.slane %v3612, %v3616
    %3620 = vrot.lane.b32.xlu0 %v3607, 32
    %v3621 = vpop.permute.xlu0 %3620
    %v3626 = vunpack.c.l.b16 %v3608
    %v3627 = vunpack.c.l.b16 %v3609
    %v3628 = vunpack.c.l.b16 %v3610
    %v3629 = vunpack.c.l.b16 %v3611
    %v3630 = vpack.c.b16 %v3627, %v3626
    %v3631 = vpack.c.b16 %v3629, %v3628
    %v3635 = vsel %vm1002, %v3621, 0
    %3637 = vmatprep.subr.bf16.mxu0 0
    %3638 = vmatpush1.bf16.msra.mxu0 %v3630
    %3639 = vmatprep.subr.bf16.mxu0 0
    %3640 = vmatpush1.bf16.msra.mxu0 %v3631
    %3641 = vmatprep.subr.bf16.mxu0 0
    %3642 = vmatpush1.bf16.msra.mxu0 0
    %3643 = vmatprep.subr.bf16.mxu0 0
    %3644 = vmatpush1.bf16.msra.mxu0 0
    %3645 = vmatprep.subr.bf16.mxu0 0
    %3646 = vmatpush1.bf16.msra.mxu0 0
    %3647 = vmatprep.subr.bf16.mxu0 0
    %3648 = vmatpush1.bf16.msra.mxu0 0
    %3649 = vmatprep.subr.bf16.mxu0 0
    %3650 = vmatpush1.bf16.msra.mxu0 0
    %3651 = vmatprep.subr.bf16.mxu0 0
    %3652 = vmatpush1.bf16.msra.mxu0 0
    %3653 = vmatprep.subr.bf16.mxu0 0
    %3654 = vmatpush1.bf16.msra.mxu0 0
    %3655 = vmatprep.subr.bf16.mxu0 0
    %3656 = vmatpush1.bf16.msra.mxu0 0
    %3657 = vmatprep.subr.bf16.mxu0 0
    %3658 = vmatpush1.bf16.msra.mxu0 0
    %3659 = vmatprep.subr.bf16.mxu0 0
    %3660 = vmatpush1.bf16.msra.mxu0 0
    %3661 = vmatprep.subr.bf16.mxu0 0
    %3662 = vmatpush1.bf16.msra.mxu0 0
    %3663 = vmatprep.subr.bf16.mxu0 0
    %3664 = vmatpush1.bf16.msra.mxu0 0
    %3665 = vmatprep.subr.bf16.mxu0 0
    %3666 = vmatpush1.bf16.msra.mxu0 0
    %3667 = vmatprep.subr.bf16.mxu0 0
    %3668 = vmatpush1.bf16.msra.mxu0 0
    %3669 = vmatprep.mubr.bf16.mxu0 0
    %3670 = vmatmul.mubr.bf16.gmra.mrb[0].mxu0 %v3635
    %v3671 = vpop.f32.mrb[0].mxu0
    %v3672 = vadd.f32 %v3617, %v3671
    %v3673 = vpop.f32.mrb[0].mxu0
    %v3674 = vpop.f32.mrb[0].mxu0
    %v3675 = vpop.f32.mrb[0].mxu0
    %3676 = vdwg.mxu0
    %v3677 = vmax.f32 %v3672, 0.0
    %v3678 = vpack.c.bf16 %v3677, %v3677
    %v3679 = vld [vmem:[%s18] sm:$0xf]
    %v3680 = vld [vmem:[%s18 + $0x4] sm:$0xf]
    %v3681 = vld [vmem:[%s18 + $0x8] sm:$0xf]
    %v3682 = vld [vmem:[%s18 + $0xc] sm:$0xf]
    %v3683 = vld [vmem:[%s18 + $0x10] sm:$0xf]
    %v3684 = vld [vmem:[%s18 + $0x14] sm:$0xf]
    %v3685 = vld [vmem:[%s18 + $0x18] sm:$0xf]
    %v3686 = vld [vmem:[%s18 + $0x1c] sm:$0xf]
    %v3687 = vld [vmem:[%s18 + $0x20] sm:$0xf]
    %v3688 = vld [vmem:[%s18 + $0x24] sm:$0xf]
    %v3689 = vld [vmem:[%s18 + $0x28] sm:$0xf]
    %v3690 = vld [vmem:[%s18 + $0x2c] sm:$0xf]
    %v3691 = vld [vmem:[%s18 + $0x30] sm:$0xf]
    %v3692 = vld [vmem:[%s18 + $0x34] sm:$0xf]
    %v3693 = vld [vmem:[%s18 + $0x38] sm:$0xf]
    %v3694 = vld [vmem:[%s18 + $0x3c] sm:$0xf]
    %v3695 = vld [vmem:[%s19] sm:$0x1]
    %v3697 = vlaneseq
    %v3698 = vshrl.u32 %v3697, 7
    %v3699 = vsub.s32 0, %v3698
    %v3700 = vrot.slane %v3695, %v3699
    %v3718 = vunpack.c.l.b16 %v3679
    %v3719 = vunpack.c.l.b16 %v3680
    %v3720 = vunpack.c.l.b16 %v3681
    %v3721 = vunpack.c.l.b16 %v3682
    %v3722 = vunpack.c.l.b16 %v3683
    %v3723 = vunpack.c.l.b16 %v3684
    %v3724 = vunpack.c.l.b16 %v3685
    %v3725 = vunpack.c.l.b16 %v3686
    %v3726 = vunpack.c.l.b16 %v3687
    %v3727 = vunpack.c.l.b16 %v3688
    %v3728 = vunpack.c.l.b16 %v3689
    %v3729 = vunpack.c.l.b16 %v3690
    %v3730 = vunpack.c.l.b16 %v3691
    %v3731 = vunpack.c.l.b16 %v3692
    %v3732 = vunpack.c.l.b16 %v3693
    %v3733 = vunpack.c.l.b16 %v3694
    %v3734 = vpack.c.b16 %v3719, %v3718
    %v3735 = vpack.c.b16 %v3721, %v3720
    %v3736 = vpack.c.b16 %v3723, %v3722
    %v3737 = vpack.c.b16 %v3725, %v3724
    %v3738 = vpack.c.b16 %v3727, %v3726
    %v3739 = vpack.c.b16 %v3729, %v3728
    %v3740 = vpack.c.b16 %v3731, %v3730
    %v3741 = vpack.c.b16 %v3733, %v3732
    %3750 = vmatprep.subr.bf16.mxu0 0
    %3751 = vmatpush1.bf16.msra.mxu0 %v3734
    %3752 = vmatprep.subr.bf16.mxu0 0
    %3753 = vmatpush1.bf16.msra.mxu0 %v3735
    %3754 = vmatprep.subr.bf16.mxu0 0
    %3755 = vmatpush1.bf16.msra.mxu0 %v3736
    %3756 = vmatprep.subr.bf16.mxu0 0
    %3757 = vmatpush1.bf16.msra.mxu0 %v3737
    %3758 = vmatprep.subr.bf16.mxu0 0
    %3759 = vmatpush1.bf16.msra.mxu0 %v3738
    %3760 = vmatprep.subr.bf16.mxu0 0
    %3761 = vmatpush1.bf16.msra.mxu0 %v3739
    %3762 = vmatprep.subr.bf16.mxu0 0
    %3763 = vmatpush1.bf16.msra.mxu0 %v3740
    %3764 = vmatprep.subr.bf16.mxu0 0
    %3765 = vmatpush1.bf16.msra.mxu0 %v3741
    %3766 = vmatprep.subr.bf16.mxu0 0
    %3767 = vmatpush1.bf16.msra.mxu0 0
    %3768 = vmatprep.subr.bf16.mxu0 0
    %3769 = vmatpush1.bf16.msra.mxu0 0
    %3770 = vmatprep.subr.bf16.mxu0 0
    %3771 = vmatpush1.bf16.msra.mxu0 0
    %3772 = vmatprep.subr.bf16.mxu0 0
    %3773 = vmatpush1.bf16.msra.mxu0 0
    %3774 = vmatprep.subr.bf16.mxu0 0
    %3775 = vmatpush1.bf16.msra.mxu0 0
    %3776 = vmatprep.subr.bf16.mxu0 0
    %3777 = vmatpush1.bf16.msra.mxu0 0
    %3778 = vmatprep.subr.bf16.mxu0 0
    %3779 = vmatpush1.bf16.msra.mxu0 0
    %3780 = vmatprep.subr.bf16.mxu0 0
    %3781 = vmatpush1.bf16.msra.mxu0 0
    %3782 = vmatprep.mubr.bf16.mxu0 0
    %3783 = vmatmul.mubr.bf16.gmra.mrb[0].mxu0 %v3678
    %v3784 = vpop.f32.mrb[0].mxu0
    %v3785 = vadd.f32 %v3700, %v3784
    %v3786 = vpop.f32.mrb[0].mxu0
    %v3787 = vpop.f32.mrb[0].mxu0
    %v3788 = vpop.f32.mrb[0].mxu0
    %3789 = vdwg.mxu0
    %vm3790 = vcmask 23552
    %3791 = vst.msk [vmem:[%s20] sm:$0xff] %vm3790, %v3785
    // Predicated region
    $region106: #{tpu_custom_call.1} parent=1 // pred_check
      _
    $region107: #{tpu_custom_call.1} parent=1 // pred_check_branch
      %3793 = sbr.rel (0) target = $region109
    $region108: #{tpu_custom_call.1} parent=1 // pred_region
      _
    $region109: #{tpu_custom_call.1} parent=1 // pred_fallthru
      _
    // Predicated region
    $region110: #{tpu_custom_call.1} parent=1 // pred_check
      _
    $region111: #{tpu_custom_call.1} parent=1 // pred_check_branch
      %3795 = sbr.rel (0) target = $region113
    $region112: #{tpu_custom_call.1} parent=1 // pred_region
      _
    $region113: #{tpu_custom_call.1} parent=1 // pred_fallthru
      _
    %3796 = vsyncpa [#allocation3], 1
    %3797 = vsyncpa [#allocation5], 1
    %3798 = vsyncpa [#allocation8], 1
    %3799 = vsyncpa [#allocation11], 1

</llo_original>
